<compile_context>
chip_gen: v7x
topology: tpu7x:2x2x1
jax: 0.10.0
libtpu: 0.0.40
codegen_flags: <defaults>
</compile_context>

<pallas_src>
import functools

import jax
import jax.numpy as jnp
from jax.experimental import pallas as pl
from jax.experimental.pallas import tpu as pltpu

LANE = 128  # padded lane width for the scalar fc2 output


# ------------------------------------------------------------------
# Fused Pallas kernel: gate projection -> LSTM -> static branch -> head
# ------------------------------------------------------------------
def _lstm_base_h_kernel(
    med_ref, proc_ref, lab_ref, cond_ref, demo_ref,
    g_med_ref, g_proc_ref, g_lab_ref, g_bias_ref, w_hh_ref,
    s_cond_ref, s_demo_ref, b_stat_ref,
    w_fc1h_ref, w_fc1s_ref, b_fc1_ref, w_fc2_ref,
    sig_ref, lin_ref,
    gx_ref,
    *, B, T, H,
):
    f32 = jnp.float32

    def sigmoid(x):
        return 1.0 / (1.0 + jnp.exp(-x))

    # ---- time-series path: folded gate projection for ALL timesteps at once ----
    # rows ordered t*B + b ; gx = (T*B, 4H) with PyTorch gate order i,f,g,o.
    gx_ref[...] = (
        jnp.dot(med_ref[...], g_med_ref[...], preferred_element_type=f32)
        + jnp.dot(proc_ref[...], g_proc_ref[...], preferred_element_type=f32)
        + jnp.dot(lab_ref[...], g_lab_ref[...], preferred_element_type=f32)
        + g_bias_ref[...]
    )

    w_hh = w_hh_ref[...]  # (H, 4H)

    def step(t, carry):
        h, c = carry
        row = pl.multiple_of(t * B, B)  # sublane-aligned slice into the gate slab
        gates = gx_ref[pl.ds(row, B), :] + jnp.dot(h, w_hh, preferred_element_type=f32)
        i = sigmoid(gates[:, 0 * H:1 * H])
        f = sigmoid(gates[:, 1 * H:2 * H])
        g = jnp.tanh(gates[:, 2 * H:3 * H])
        o = sigmoid(gates[:, 3 * H:4 * H])
        c = f * c + i * g
        h = o * jnp.tanh(c)
        return (h, c)

    h0 = jnp.zeros((B, H), f32)      # init_hidden(): zeros
    c0 = jnp.zeros((B, H), f32)
    h_n, _ = jax.lax.fori_loop(0, T, step, (h0, c0), unroll=True)

    # ---- static branch: cond + [gender, eth, ins, age], statfc+statfc2 folded ----
    out2 = (jnp.dot(cond_ref[...], s_cond_ref[...], preferred_element_type=f32)
            + jnp.dot(demo_ref[...], s_demo_ref[...], preferred_element_type=f32)
            + b_stat_ref[...])                                              # (B, H)

    # ---- head: cat(h_n, out2) -> fc1 -> fc2(no bias) -> sigmoid (split weights) ----
    z = (jnp.dot(h_n, w_fc1h_ref[...], preferred_element_type=f32)
         + jnp.dot(out2, w_fc1s_ref[...], preferred_element_type=f32)
         + b_fc1_ref[...])                                                  # (B, H)
    lin = jnp.dot(z, w_fc2_ref[...], preferred_element_type=f32)            # (B, LANE)
    lin_ref[...] = lin                                                      # whole-block stores
    sig_ref[...] = sigmoid(lin)


# ------------------------------------------------------------------
# Wrapper: layout glue + single pallas_call
# ------------------------------------------------------------------
def lstm_base_h_forward(kp, meds, procs, labs, conds, demo):
    B, T, _ = meds.shape
    H = kp["w_hh"].shape[0]

    # time-major flatten: row index = t*B + b  (timestep t is a contiguous sublane block)
    def to2d(x):
        return jnp.transpose(x, (1, 0, 2)).reshape(T * B, x.shape[2]).astype(jnp.float32)

    med2d, proc2d, lab2d = to2d(meds), to2d(procs), to2d(labs)
    cond2d = conds.astype(jnp.float32)

    # Demographic embedding lookups (tiny gathers) stay in XLA; order = gender, eth, ins, age.
    demo_feats = jnp.concatenate(
        [kp["gender_tab"][demo[:, 0]],
         kp["eth_tab"][demo[:, 1]],
         kp["ins_tab"][demo[:, 2]],
         kp["age_tab"][demo[:, 3]]], axis=1).astype(jnp.float32)

    kern = functools.partial(_lstm_base_h_kernel, B=B, T=T, H=H)
    vmem = pl.BlockSpec(memory_space=pltpu.MemorySpace.VMEM)
    sig_pad, lin_pad = pl.pallas_call(
        kern,
        out_shape=(jax.ShapeDtypeStruct((B, LANE), jnp.float32),
                   jax.ShapeDtypeStruct((B, LANE), jnp.float32)),
        in_specs=[vmem] * 17,
        out_specs=(vmem, vmem),
        scratch_shapes=[pltpu.VMEM((T * B, 4 * H), jnp.float32)],
    )(med2d, proc2d, lab2d, cond2d, demo_feats,
      kp["g_med"], kp["g_proc"], kp["g_lab"], kp["g_bias"], kp["w_hh"],
      kp["s_cond"], kp["s_demo"], kp["b_stat"],
      kp["w_fc1h"], kp["w_fc1s"], kp["b_fc1"], kp["w_fc2"])
    return sig_pad[:, :1], lin_pad[:, :1]


# ------------------------------------------------------------------
# Parameter construction (PyTorch layouts) + one-time kernel-layout prep
# ------------------------------------------------------------------
def init_raw_params(key, *, E, L, H, vm, vp, vl, vc, veth, vgen, vage, vins):
    ks = jax.random.split(key, 16)

    def lin(k, out_d, in_d, bias=True):
        s = 1.0 / (in_d ** 0.5)
        kw, kb = jax.random.split(k)
        w = jax.random.uniform(kw, (out_d, in_d), jnp.float32, -s, s)
        b = jax.random.uniform(kb, (out_d,), jnp.float32, -s, s) if bias else None
        return w, b

    def emb(k, v, d, pad0=False):
        t = jax.random.normal(k, (v, d), jnp.float32)
        return t.at[0].set(0.0) if pad0 else t

    p = {}
    p["med_embed"] = emb(ks[0], vm, E)                       # ValEmbed
    p["med_fc_w"], p["med_fc_b"] = lin(ks[1], L, (E + 1) * vm)
    p["proc_embed"] = emb(ks[2], vp, E)                      # CodeEmbed
    p["proc_fc_w"], p["proc_fc_b"] = lin(ks[3], L, E * vp)
    p["lab_embed"] = emb(ks[4], vl, E)                       # ValEmbed
    p["lab_fc_w"], p["lab_fc_b"] = lin(ks[5], L, (E + 1) * vl)
    p["cond_embed"] = emb(ks[6], vc, E)                      # StatEmbed
    p["cond_fc_w"], p["cond_fc_b"] = lin(ks[7], L, E * vc)
    p["gender_tab"] = emb(ks[8], vgen, L, pad0=True)         # padding_idx=0
    p["eth_tab"] = emb(ks[9], veth, L, pad0=True)
    p["ins_tab"] = emb(ks[10], vins, L, pad0=True)
    p["age_tab"] = emb(ks[11], vage, L, pad0=True)
    p["embedfc_w"], p["embedfc_b"] = lin(ks[12], L, 3 * L)   # modalities - 1 = 3
    p["statfc_w"], p["statfc_b"] = lin(ks[13], L, 5 * L)
    p["statfc2_w"], p["statfc2_b"] = lin(ks[14], H, L)
    klstm, kfc1, kfc2 = jax.random.split(ks[15], 3)
    s = 1.0 / (H ** 0.5)
    k1, k2, k3, k4 = jax.random.split(klstm, 4)
    p["w_ih"] = jax.random.uniform(k1, (4 * H, L), jnp.float32, -s, s)   # gates i,f,g,o
    p["w_hh"] = jax.random.uniform(k2, (4 * H, H), jnp.float32, -s, s)
    p["b_ih"] = jax.random.uniform(k3, (4 * H,), jnp.float32, -s, s)
    p["b_hh"] = jax.random.uniform(k4, (4 * H,), jnp.float32, -s, s)
    p["fc1_w"], p["fc1_b"] = lin(kfc1, H, 2 * H)
    p["fc2_w"], _ = lin(kfc2, 1, H, bias=False)
    return p


def prepare_kernel_params(raw, *, E, L, H, lane=LANE):
    """One-time fold/transpose into kernel-friendly layouts (hoisted out of the kernel)."""
    f32 = jnp.float32

    def fold_val(tab, w, b):       # ValEmbed: fc(cat([code_v, emb_v])) == code @ M + c
        V = tab.shape[0]
        w_r = w.reshape(L, V, E + 1)
        m = jnp.transpose(w_r[:, :, 0], (1, 0))                     # (V, L)
        c = b + jnp.einsum("lve,ve->l", w_r[:, :, 1:], tab)
        return m.astype(f32), c.reshape(1, L).astype(f32)

    def fold_code(tab, w, b):      # Code/StatEmbed: fc(code_v * emb_v) == code @ M + b
        V = tab.shape[0]
        w_r = w.reshape(L, V, E)
        m = jnp.einsum("lve,ve->vl", w_r, tab)                      # (V, L)
        return m.astype(f32), b.reshape(1, L).astype(f32)

    m_med, c_med = fold_val(raw["med_embed"], raw["med_fc_w"], raw["med_fc_b"])
    m_proc, c_proc = fold_code(raw["proc_embed"], raw["proc_fc_w"], raw["proc_fc_b"])
    m_lab, c_lab = fold_val(raw["lab_embed"], raw["lab_fc_w"], raw["lab_fc_b"])
    m_cond, c_cond = fold_code(raw["cond_embed"], raw["cond_fc_w"], raw["cond_fc_b"])

    # embedfc split per modality (concat order: med, proc, lab) and fold through W_ih.
    w_emb_t = raw["embedfc_w"].T.astype(f32)                         # (3L, L)
    w1, w2, w3 = w_emb_t[:L], w_emb_t[L:2 * L], w_emb_t[2 * L:]
    b_emb = raw["embedfc_b"].reshape(1, L).astype(f32)
    w_ih_t = raw["w_ih"].T.astype(f32)                               # (L, 4H)

    kp = {}
    kp["g_med"] = (m_med @ w1 @ w_ih_t).astype(f32)                  # (VM, 4H)
    kp["g_proc"] = (m_proc @ w2 @ w_ih_t).astype(f32)                # (VP, 4H)
    kp["g_lab"] = (m_lab @ w3 @ w_ih_t).astype(f32)                  # (VL, 4H)
    x_bias = c_med @ w1 + c_proc @ w2 + c_lab @ w3 + b_emb           # (1, L)
    kp["g_bias"] = (x_bias @ w_ih_t
                    + (raw["b_ih"] + raw["b_hh"]).reshape(1, 4 * H)).astype(f32)
    kp["w_hh"] = raw["w_hh"].T.astype(f32)                           # (H, 4H)

    # statfc (cat order: cond, gender, eth, ins, age) folded through statfc2.
    ws_t = raw["statfc_w"].T.astype(f32)                             # (5L, L)
    ws2_t = raw["statfc2_w"].T.astype(f32)                           # (L, H)
    kp["s_cond"] = (m_cond @ ws_t[:L] @ ws2_t).astype(f32)           # (VC, H)
    kp["s_demo"] = (ws_t[L:] @ ws2_t).astype(f32)                    # (4L, H)
    kp["b_stat"] = ((c_cond @ ws_t[:L] + raw["statfc_b"].reshape(1, L)) @ ws2_t
                    + raw["statfc2_b"].reshape(1, H)).astype(f32)    # (1, H)

    # fc1 split (cat order: h_n, out2); fc2 lane-padded.
    fc1_t = raw["fc1_w"].T.astype(f32)                               # (2H, H)
    kp["w_fc1h"] = fc1_t[:H]
    kp["w_fc1s"] = fc1_t[H:]
    kp["b_fc1"] = raw["fc1_b"].reshape(1, H).astype(f32)
    kp["w_fc2"] = jnp.zeros((H, lane), f32).at[:, 0].set(raw["fc2_w"][0, :])
    for k in ("gender_tab", "eth_tab", "ins_tab", "age_tab"):
        kp[k] = raw[k].astype(f32)
    return kp


if __name__ == "__main__":
    # Small shapes: batch=8 (sublane multiple), seq T=16, embed=16,
    # latent=rnn=128 (lane-dense), modest vocabularies.
    B, T = 8, 16
    E, L, H = 16, 128, 128
    VM, VP, VL, VC = 40, 32, 48, 24
    VETH, VGEN, VAGE, VINS = 8, 4, 16, 8

    root = jax.random.PRNGKey(0)
    kparam, kdata = jax.random.split(root)

    raw = init_raw_params(kparam, E=E, L=L, H=H, vm=VM, vp=VP, vl=VL, vc=VC,
                          veth=VETH, vgen=VGEN, vage=VAGE, vins=VINS)
    kp = prepare_kernel_params(raw, E=E, L=L, H=H)

    k1, k2, k3, k4, kg, ke, ki, ka = jax.random.split(kdata, 8)
    meds = jax.random.uniform(k1, (B, T, VM), jnp.float32)                       # dose values
    procs = (jax.random.uniform(k2, (B, T, VP)) < 0.3).astype(jnp.float32)       # multi-hot
    labs = jax.random.uniform(k3, (B, T, VL), jnp.float32)                       # lab values
    conds = (jax.random.uniform(k4, (B, VC)) < 0.3).astype(jnp.float32)          # multi-hot
    demo = jnp.stack([jax.random.randint(kg, (B,), 0, VGEN),
                      jax.random.randint(ke, (B,), 0, VETH),
                      jax.random.randint(ki, (B,), 0, VINS),
                      jax.random.randint(ka, (B,), 0, VAGE)], axis=1).astype(jnp.int32)

    fwd = jax.jit(lstm_base_h_forward)
    sigout1, out1 = fwd(kp, meds, procs, labs, conds, demo)
    jax.block_until_ready((sigout1, out1))

    assert sigout1.shape == (B, 1) and out1.shape == (B, 1)
    assert bool(jnp.all(jnp.isfinite(sigout1))) and bool(jnp.all(jnp.isfinite(out1)))
    print("KERNEL_OK")
</pallas_src>

<mosaic_0001>
module attributes {stable_mosaic.version = 11 : i64} {
  func.func @_lstm_base_h_kernel(%arg0: memref<128x40xf32, #tpu.memory_space<vmem>>, %arg1: memref<128x32xf32, #tpu.memory_space<vmem>>, %arg2: memref<128x48xf32, #tpu.memory_space<vmem>>, %arg3: memref<8x24xf32, #tpu.memory_space<vmem>>, %arg4: memref<8x512xf32, #tpu.memory_space<vmem>>, %arg5: memref<40x512xf32, #tpu.memory_space<vmem>>, %arg6: memref<32x512xf32, #tpu.memory_space<vmem>>, %arg7: memref<48x512xf32, #tpu.memory_space<vmem>>, %arg8: memref<1x512xf32, #tpu.memory_space<vmem>>, %arg9: memref<128x512xf32, #tpu.memory_space<vmem>>, %arg10: memref<24x128xf32, #tpu.memory_space<vmem>>, %arg11: memref<512x128xf32, #tpu.memory_space<vmem>>, %arg12: memref<1x128xf32, #tpu.memory_space<vmem>>, %arg13: memref<128x128xf32, #tpu.memory_space<vmem>>, %arg14: memref<128x128xf32, #tpu.memory_space<vmem>>, %arg15: memref<1x128xf32, #tpu.memory_space<vmem>>, %arg16: memref<128x128xf32, #tpu.memory_space<vmem>>, %arg17: memref<8x128xf32, #tpu.memory_space<vmem>>, %arg18: memref<8x128xf32, #tpu.memory_space<vmem>>, %arg19: memref<128x512xf32, #tpu.memory_space<vmem>>) attributes {dimension_semantics = [], scalar_prefetch = 0 : i64, scratch_operands = 1 : i64, tpu.core_type = #tpu.core_type<tc>} {
    %c0 = arith.constant 0 : index
    %c0_0 = arith.constant 0 : index
    %0 = vector.load %arg0[%c0, %c0_0] : memref<128x40xf32, #tpu.memory_space<vmem>>, vector<128x40xf32>
    %c0_1 = arith.constant 0 : index
    %c0_2 = arith.constant 0 : index
    %1 = vector.load %arg5[%c0_1, %c0_2] : memref<40x512xf32, #tpu.memory_space<vmem>>, vector<40x512xf32>
    %cst = arith.constant dense<0.000000e+00> : vector<128x512xf32>
    %2 = tpu.matmul %0, %1, %cst {dimension_numbers = #tpu.dot_dimension_numbers<[1], [0], [0], [1], [0, 0, 1, 1], [], []>} : vector<128x40xf32>, vector<40x512xf32>, vector<128x512xf32> -> vector<128x512xf32>
    %c0_3 = arith.constant 0 : index
    %c0_4 = arith.constant 0 : index
    %3 = vector.load %arg1[%c0_3, %c0_4] : memref<128x32xf32, #tpu.memory_space<vmem>>, vector<128x32xf32>
    %c0_5 = arith.constant 0 : index
    %c0_6 = arith.constant 0 : index
    %4 = vector.load %arg6[%c0_5, %c0_6] : memref<32x512xf32, #tpu.memory_space<vmem>>, vector<32x512xf32>
    %cst_7 = arith.constant dense<0.000000e+00> : vector<128x512xf32>
    %5 = tpu.matmul %3, %4, %cst_7 {dimension_numbers = #tpu.dot_dimension_numbers<[1], [0], [0], [1], [0, 0, 1, 1], [], []>} : vector<128x32xf32>, vector<32x512xf32>, vector<128x512xf32> -> vector<128x512xf32>
    %6 = arith.addf %2, %5 : vector<128x512xf32>
    %c0_8 = arith.constant 0 : index
    %c0_9 = arith.constant 0 : index
    %7 = vector.load %arg2[%c0_8, %c0_9] : memref<128x48xf32, #tpu.memory_space<vmem>>, vector<128x48xf32>
    %c0_10 = arith.constant 0 : index
    %c0_11 = arith.constant 0 : index
    %8 = vector.load %arg7[%c0_10, %c0_11] : memref<48x512xf32, #tpu.memory_space<vmem>>, vector<48x512xf32>
    %cst_12 = arith.constant dense<0.000000e+00> : vector<128x512xf32>
    %9 = tpu.matmul %7, %8, %cst_12 {dimension_numbers = #tpu.dot_dimension_numbers<[1], [0], [0], [1], [0, 0, 1, 1], [], []>} : vector<128x48xf32>, vector<48x512xf32>, vector<128x512xf32> -> vector<128x512xf32>
    %10 = arith.addf %6, %9 : vector<128x512xf32>
    %c0_13 = arith.constant 0 : index
    %c0_14 = arith.constant 0 : index
    %11 = vector.load %arg8[%c0_13, %c0_14] : memref<1x512xf32, #tpu.memory_space<vmem>>, vector<1x512xf32>
    %12 = vector.broadcast %11 : vector<1x512xf32> to vector<128x512xf32>
    %13 = arith.addf %10, %12 : vector<128x512xf32>
    %c0_15 = arith.constant 0 : index
    %c0_16 = arith.constant 0 : index
    %14 = vector.load %arg19[%c0_15, %c0_16] : memref<128x512xf32, #tpu.memory_space<vmem>>, vector<128x512xf32>
    tpu.vector_store %arg19[%c0_15, %c0_16], %13 {strides = array<i32>} : memref<128x512xf32, #tpu.memory_space<vmem>>, vector<128x512xf32>,
    %c0_17 = arith.constant 0 : index
    %c0_18 = arith.constant 0 : index
    %15 = vector.load %arg9[%c0_17, %c0_18] : memref<128x512xf32, #tpu.memory_space<vmem>>, vector<128x512xf32>
    %cst_19 = arith.constant 0.000000e+00 : f32
    %16 = vector.broadcast %cst_19 : f32 to vector<8x128xf32>
    %cst_20 = arith.constant 0.000000e+00 : f32
    %17 = vector.broadcast %cst_20 : f32 to vector<8x128xf32>
    %c0_i32 = arith.constant 0 : i32
    %c8_i32 = arith.constant 8 : i32
    %18 = arith.muli %c0_i32, %c8_i32 : i32
    %19 = tpu.assume_multiple %18, 8 : i32
    %20 = arith.index_cast %19 : i32 to index
    %c0_21 = arith.constant 0 : index
    %21 = vector.load %arg19[%20, %c0_21] : memref<128x512xf32, #tpu.memory_space<vmem>>, vector<8x512xf32>
    %cst_22 = arith.constant dense<0.000000e+00> : vector<8x512xf32>
    %22 = tpu.matmul %16, %15, %cst_22 {dimension_numbers = #tpu.dot_dimension_numbers<[1], [0], [0], [1], [0, 0, 1, 1], [], []>} : vector<8x128xf32>, vector<128x512xf32>, vector<8x512xf32> -> vector<8x512xf32>
    %23 = arith.addf %21, %22 : vector<8x512xf32>
    %24 = vector.extract_strided_slice %23 {offsets = [0, 0], sizes = [8, 128], strides = [1, 1]} : vector<8x512xf32> to vector<8x128xf32>
    %cst_23 = arith.constant 0.000000e+00 : f32
    %25 = vector.broadcast %cst_23 : f32 to vector<8x128xf32>
    %26 = arith.subf %25, %24 : vector<8x128xf32>
    %27 = math.exp %26 : vector<8x128xf32>
    %cst_24 = arith.constant 1.000000e+00 : f32
    %28 = vector.broadcast %cst_24 : f32 to vector<8x128xf32>
    %29 = arith.addf %28, %27 : vector<8x128xf32>
    %cst_25 = arith.constant 1.000000e+00 : f32
    %30 = vector.broadcast %cst_25 : f32 to vector<8x128xf32>
    %31 = arith.divf %30, %29 : vector<8x128xf32>
    %32 = vector.extract_strided_slice %23 {offsets = [0, 128], sizes = [8, 128], strides = [1, 1]} : vector<8x512xf32> to vector<8x128xf32>
    %cst_26 = arith.constant 0.000000e+00 : f32
    %33 = vector.broadcast %cst_26 : f32 to vector<8x128xf32>
    %34 = arith.subf %33, %32 : vector<8x128xf32>
    %35 = math.exp %34 : vector<8x128xf32>
    %cst_27 = arith.constant 1.000000e+00 : f32
    %36 = vector.broadcast %cst_27 : f32 to vector<8x128xf32>
    %37 = arith.addf %36, %35 : vector<8x128xf32>
    %cst_28 = arith.constant 1.000000e+00 : f32
    %38 = vector.broadcast %cst_28 : f32 to vector<8x128xf32>
    %39 = arith.divf %38, %37 : vector<8x128xf32>
    %40 = vector.extract_strided_slice %23 {offsets = [0, 256], sizes = [8, 128], strides = [1, 1]} : vector<8x512xf32> to vector<8x128xf32>
    %41 = math.tanh %40 : vector<8x128xf32>
    %42 = vector.extract_strided_slice %23 {offsets = [0, 384], sizes = [8, 128], strides = [1, 1]} : vector<8x512xf32> to vector<8x128xf32>
    %cst_29 = arith.constant 0.000000e+00 : f32
    %43 = vector.broadcast %cst_29 : f32 to vector<8x128xf32>
    %44 = arith.subf %43, %42 : vector<8x128xf32>
    %45 = math.exp %44 : vector<8x128xf32>
    %cst_30 = arith.constant 1.000000e+00 : f32
    %46 = vector.broadcast %cst_30 : f32 to vector<8x128xf32>
    %47 = arith.addf %46, %45 : vector<8x128xf32>
    %cst_31 = arith.constant 1.000000e+00 : f32
    %48 = vector.broadcast %cst_31 : f32 to vector<8x128xf32>
    %49 = arith.divf %48, %47 : vector<8x128xf32>
    %50 = arith.mulf %39, %17 : vector<8x128xf32>
    %51 = arith.mulf %31, %41 : vector<8x128xf32>
    %52 = arith.addf %50, %51 : vector<8x128xf32>
    %53 = math.tanh %52 : vector<8x128xf32>
    %54 = arith.mulf %49, %53 : vector<8x128xf32>
    %c1_i32 = arith.constant 1 : i32
    %c8_i32_32 = arith.constant 8 : i32
    %55 = arith.muli %c1_i32, %c8_i32_32 : i32
    %56 = tpu.assume_multiple %55, 8 : i32
    %57 = arith.index_cast %56 : i32 to index
    %c0_33 = arith.constant 0 : index
    %58 = vector.load %arg19[%57, %c0_33] : memref<128x512xf32, #tpu.memory_space<vmem>>, vector<8x512xf32>
    %cst_34 = arith.constant dense<0.000000e+00> : vector<8x512xf32>
    %59 = tpu.matmul %54, %15, %cst_34 {dimension_numbers = #tpu.dot_dimension_numbers<[1], [0], [0], [1], [0, 0, 1, 1], [], []>} : vector<8x128xf32>, vector<128x512xf32>, vector<8x512xf32> -> vector<8x512xf32>
    %60 = arith.addf %58, %59 : vector<8x512xf32>
    %61 = vector.extract_strided_slice %60 {offsets = [0, 0], sizes = [8, 128], strides = [1, 1]} : vector<8x512xf32> to vector<8x128xf32>
    %cst_35 = arith.constant 0.000000e+00 : f32
    %62 = vector.broadcast %cst_35 : f32 to vector<8x128xf32>
    %63 = arith.subf %62, %61 : vector<8x128xf32>
    %64 = math.exp %63 : vector<8x128xf32>
    %cst_36 = arith.constant 1.000000e+00 : f32
    %65 = vector.broadcast %cst_36 : f32 to vector<8x128xf32>
    %66 = arith.addf %65, %64 : vector<8x128xf32>
    %cst_37 = arith.constant 1.000000e+00 : f32
    %67 = vector.broadcast %cst_37 : f32 to vector<8x128xf32>
    %68 = arith.divf %67, %66 : vector<8x128xf32>
    %69 = vector.extract_strided_slice %60 {offsets = [0, 128], sizes = [8, 128], strides = [1, 1]} : vector<8x512xf32> to vector<8x128xf32>
    %cst_38 = arith.constant 0.000000e+00 : f32
    %70 = vector.broadcast %cst_38 : f32 to vector<8x128xf32>
    %71 = arith.subf %70, %69 : vector<8x128xf32>
    %72 = math.exp %71 : vector<8x128xf32>
    %cst_39 = arith.constant 1.000000e+00 : f32
    %73 = vector.broadcast %cst_39 : f32 to vector<8x128xf32>
    %74 = arith.addf %73, %72 : vector<8x128xf32>
    %cst_40 = arith.constant 1.000000e+00 : f32
    %75 = vector.broadcast %cst_40 : f32 to vector<8x128xf32>
    %76 = arith.divf %75, %74 : vector<8x128xf32>
    %77 = vector.extract_strided_slice %60 {offsets = [0, 256], sizes = [8, 128], strides = [1, 1]} : vector<8x512xf32> to vector<8x128xf32>
    %78 = math.tanh %77 : vector<8x128xf32>
    %79 = vector.extract_strided_slice %60 {offsets = [0, 384], sizes = [8, 128], strides = [1, 1]} : vector<8x512xf32> to vector<8x128xf32>
    %cst_41 = arith.constant 0.000000e+00 : f32
    %80 = vector.broadcast %cst_41 : f32 to vector<8x128xf32>
    %81 = arith.subf %80, %79 : vector<8x128xf32>
    %82 = math.exp %81 : vector<8x128xf32>
    %cst_42 = arith.constant 1.000000e+00 : f32
    %83 = vector.broadcast %cst_42 : f32 to vector<8x128xf32>
    %84 = arith.addf %83, %82 : vector<8x128xf32>
    %cst_43 = arith.constant 1.000000e+00 : f32
    %85 = vector.broadcast %cst_43 : f32 to vector<8x128xf32>
    %86 = arith.divf %85, %84 : vector<8x128xf32>
    %87 = arith.mulf %76, %52 : vector<8x128xf32>
    %88 = arith.mulf %68, %78 : vector<8x128xf32>
    %89 = arith.addf %87, %88 : vector<8x128xf32>
    %90 = math.tanh %89 : vector<8x128xf32>
    %91 = arith.mulf %86, %90 : vector<8x128xf32>
    %c2_i32 = arith.constant 2 : i32
    %c8_i32_44 = arith.constant 8 : i32
    %92 = arith.muli %c2_i32, %c8_i32_44 : i32
    %93 = tpu.assume_multiple %92, 8 : i32
    %94 = arith.index_cast %93 : i32 to index
    %c0_45 = arith.constant 0 : index
    %95 = vector.load %arg19[%94, %c0_45] : memref<128x512xf32, #tpu.memory_space<vmem>>, vector<8x512xf32>
    %cst_46 = arith.constant dense<0.000000e+00> : vector<8x512xf32>
    %96 = tpu.matmul %91, %15, %cst_46 {dimension_numbers = #tpu.dot_dimension_numbers<[1], [0], [0], [1], [0, 0, 1, 1], [], []>} : vector<8x128xf32>, vector<128x512xf32>, vector<8x512xf32> -> vector<8x512xf32>
    %97 = arith.addf %95, %96 : vector<8x512xf32>
    %98 = vector.extract_strided_slice %97 {offsets = [0, 0], sizes = [8, 128], strides = [1, 1]} : vector<8x512xf32> to vector<8x128xf32>
    %cst_47 = arith.constant 0.000000e+00 : f32
    %99 = vector.broadcast %cst_47 : f32 to vector<8x128xf32>
    %100 = arith.subf %99, %98 : vector<8x128xf32>
    %101 = math.exp %100 : vector<8x128xf32>
    %cst_48 = arith.constant 1.000000e+00 : f32
    %102 = vector.broadcast %cst_48 : f32 to vector<8x128xf32>
    %103 = arith.addf %102, %101 : vector<8x128xf32>
    %cst_49 = arith.constant 1.000000e+00 : f32
    %104 = vector.broadcast %cst_49 : f32 to vector<8x128xf32>
    %105 = arith.divf %104, %103 : vector<8x128xf32>
    %106 = vector.extract_strided_slice %97 {offsets = [0, 128], sizes = [8, 128], strides = [1, 1]} : vector<8x512xf32> to vector<8x128xf32>
    %cst_50 = arith.constant 0.000000e+00 : f32
    %107 = vector.broadcast %cst_50 : f32 to vector<8x128xf32>
    %108 = arith.subf %107, %106 : vector<8x128xf32>
    %109 = math.exp %108 : vector<8x128xf32>
    %cst_51 = arith.constant 1.000000e+00 : f32
    %110 = vector.broadcast %cst_51 : f32 to vector<8x128xf32>
    %111 = arith.addf %110, %109 : vector<8x128xf32>
    %cst_52 = arith.constant 1.000000e+00 : f32
    %112 = vector.broadcast %cst_52 : f32 to vector<8x128xf32>
    %113 = arith.divf %112, %111 : vector<8x128xf32>
    %114 = vector.extract_strided_slice %97 {offsets = [0, 256], sizes = [8, 128], strides = [1, 1]} : vector<8x512xf32> to vector<8x128xf32>
    %115 = math.tanh %114 : vector<8x128xf32>
    %116 = vector.extract_strided_slice %97 {offsets = [0, 384], sizes = [8, 128], strides = [1, 1]} : vector<8x512xf32> to vector<8x128xf32>
    %cst_53 = arith.constant 0.000000e+00 : f32
    %117 = vector.broadcast %cst_53 : f32 to vector<8x128xf32>
    %118 = arith.subf %117, %116 : vector<8x128xf32>
    %119 = math.exp %118 : vector<8x128xf32>
    %cst_54 = arith.constant 1.000000e+00 : f32
    %120 = vector.broadcast %cst_54 : f32 to vector<8x128xf32>
    %121 = arith.addf %120, %119 : vector<8x128xf32>
    %cst_55 = arith.constant 1.000000e+00 : f32
    %122 = vector.broadcast %cst_55 : f32 to vector<8x128xf32>
    %123 = arith.divf %122, %121 : vector<8x128xf32>
    %124 = arith.mulf %113, %89 : vector<8x128xf32>
    %125 = arith.mulf %105, %115 : vector<8x128xf32>
    %126 = arith.addf %124, %125 : vector<8x128xf32>
    %127 = math.tanh %126 : vector<8x128xf32>
    %128 = arith.mulf %123, %127 : vector<8x128xf32>
    %c3_i32 = arith.constant 3 : i32
    %c8_i32_56 = arith.constant 8 : i32
    %129 = arith.muli %c3_i32, %c8_i32_56 : i32
    %130 = tpu.assume_multiple %129, 8 : i32
    %131 = arith.index_cast %130 : i32 to index
    %c0_57 = arith.constant 0 : index
    %132 = vector.load %arg19[%131, %c0_57] : memref<128x512xf32, #tpu.memory_space<vmem>>, vector<8x512xf32>
    %cst_58 = arith.constant dense<0.000000e+00> : vector<8x512xf32>
    %133 = tpu.matmul %128, %15, %cst_58 {dimension_numbers = #tpu.dot_dimension_numbers<[1], [0], [0], [1], [0, 0, 1, 1], [], []>} : vector<8x128xf32>, vector<128x512xf32>, vector<8x512xf32> -> vector<8x512xf32>
    %134 = arith.addf %132, %133 : vector<8x512xf32>
    %135 = vector.extract_strided_slice %134 {offsets = [0, 0], sizes = [8, 128], strides = [1, 1]} : vector<8x512xf32> to vector<8x128xf32>
    %cst_59 = arith.constant 0.000000e+00 : f32
    %136 = vector.broadcast %cst_59 : f32 to vector<8x128xf32>
    %137 = arith.subf %136, %135 : vector<8x128xf32>
    %138 = math.exp %137 : vector<8x128xf32>
    %cst_60 = arith.constant 1.000000e+00 : f32
    %139 = vector.broadcast %cst_60 : f32 to vector<8x128xf32>
    %140 = arith.addf %139, %138 : vector<8x128xf32>
    %cst_61 = arith.constant 1.000000e+00 : f32
    %141 = vector.broadcast %cst_61 : f32 to vector<8x128xf32>
    %142 = arith.divf %141, %140 : vector<8x128xf32>
    %143 = vector.extract_strided_slice %134 {offsets = [0, 128], sizes = [8, 128], strides = [1, 1]} : vector<8x512xf32> to vector<8x128xf32>
    %cst_62 = arith.constant 0.000000e+00 : f32
    %144 = vector.broadcast %cst_62 : f32 to vector<8x128xf32>
    %145 = arith.subf %144, %143 : vector<8x128xf32>
    %146 = math.exp %145 : vector<8x128xf32>
    %cst_63 = arith.constant 1.000000e+00 : f32
    %147 = vector.broadcast %cst_63 : f32 to vector<8x128xf32>
    %148 = arith.addf %147, %146 : vector<8x128xf32>
    %cst_64 = arith.constant 1.000000e+00 : f32
    %149 = vector.broadcast %cst_64 : f32 to vector<8x128xf32>
    %150 = arith.divf %149, %148 : vector<8x128xf32>
    %151 = vector.extract_strided_slice %134 {offsets = [0, 256], sizes = [8, 128], strides = [1, 1]} : vector<8x512xf32> to vector<8x128xf32>
    %152 = math.tanh %151 : vector<8x128xf32>
    %153 = vector.extract_strided_slice %134 {offsets = [0, 384], sizes = [8, 128], strides = [1, 1]} : vector<8x512xf32> to vector<8x128xf32>
    %cst_65 = arith.constant 0.000000e+00 : f32
    %154 = vector.broadcast %cst_65 : f32 to vector<8x128xf32>
    %155 = arith.subf %154, %153 : vector<8x128xf32>
    %156 = math.exp %155 : vector<8x128xf32>
    %cst_66 = arith.constant 1.000000e+00 : f32
    %157 = vector.broadcast %cst_66 : f32 to vector<8x128xf32>
    %158 = arith.addf %157, %156 : vector<8x128xf32>
    %cst_67 = arith.constant 1.000000e+00 : f32
    %159 = vector.broadcast %cst_67 : f32 to vector<8x128xf32>
    %160 = arith.divf %159, %158 : vector<8x128xf32>
    %161 = arith.mulf %150, %126 : vector<8x128xf32>
    %162 = arith.mulf %142, %152 : vector<8x128xf32>
    %163 = arith.addf %161, %162 : vector<8x128xf32>
    %164 = math.tanh %163 : vector<8x128xf32>
    %165 = arith.mulf %160, %164 : vector<8x128xf32>
    %c4_i32 = arith.constant 4 : i32
    %c8_i32_68 = arith.constant 8 : i32
    %166 = arith.muli %c4_i32, %c8_i32_68 : i32
    %167 = tpu.assume_multiple %166, 8 : i32
    %168 = arith.index_cast %167 : i32 to index
    %c0_69 = arith.constant 0 : index
    %169 = vector.load %arg19[%168, %c0_69] : memref<128x512xf32, #tpu.memory_space<vmem>>, vector<8x512xf32>
    %cst_70 = arith.constant dense<0.000000e+00> : vector<8x512xf32>
    %170 = tpu.matmul %165, %15, %cst_70 {dimension_numbers = #tpu.dot_dimension_numbers<[1], [0], [0], [1], [0, 0, 1, 1], [], []>} : vector<8x128xf32>, vector<128x512xf32>, vector<8x512xf32> -> vector<8x512xf32>
    %171 = arith.addf %169, %170 : vector<8x512xf32>
    %172 = vector.extract_strided_slice %171 {offsets = [0, 0], sizes = [8, 128], strides = [1, 1]} : vector<8x512xf32> to vector<8x128xf32>
    %cst_71 = arith.constant 0.000000e+00 : f32
    %173 = vector.broadcast %cst_71 : f32 to vector<8x128xf32>
    %174 = arith.subf %173, %172 : vector<8x128xf32>
    %175 = math.exp %174 : vector<8x128xf32>
    %cst_72 = arith.constant 1.000000e+00 : f32
    %176 = vector.broadcast %cst_72 : f32 to vector<8x128xf32>
    %177 = arith.addf %176, %175 : vector<8x128xf32>
    %cst_73 = arith.constant 1.000000e+00 : f32
    %178 = vector.broadcast %cst_73 : f32 to vector<8x128xf32>
    %179 = arith.divf %178, %177 : vector<8x128xf32>
    %180 = vector.extract_strided_slice %171 {offsets = [0, 128], sizes = [8, 128], strides = [1, 1]} : vector<8x512xf32> to vector<8x128xf32>
    %cst_74 = arith.constant 0.000000e+00 : f32
    %181 = vector.broadcast %cst_74 : f32 to vector<8x128xf32>
    %182 = arith.subf %181, %180 : vector<8x128xf32>
    %183 = math.exp %182 : vector<8x128xf32>
    %cst_75 = arith.constant 1.000000e+00 : f32
    %184 = vector.broadcast %cst_75 : f32 to vector<8x128xf32>
    %185 = arith.addf %184, %183 : vector<8x128xf32>
    %cst_76 = arith.constant 1.000000e+00 : f32
    %186 = vector.broadcast %cst_76 : f32 to vector<8x128xf32>
    %187 = arith.divf %186, %185 : vector<8x128xf32>
    %188 = vector.extract_strided_slice %171 {offsets = [0, 256], sizes = [8, 128], strides = [1, 1]} : vector<8x512xf32> to vector<8x128xf32>
    %189 = math.tanh %188 : vector<8x128xf32>
    %190 = vector.extract_strided_slice %171 {offsets = [0, 384], sizes = [8, 128], strides = [1, 1]} : vector<8x512xf32> to vector<8x128xf32>
    %cst_77 = arith.constant 0.000000e+00 : f32
    %191 = vector.broadcast %cst_77 : f32 to vector<8x128xf32>
    %192 = arith.subf %191, %190 : vector<8x128xf32>
    %193 = math.exp %192 : vector<8x128xf32>
    %cst_78 = arith.constant 1.000000e+00 : f32
    %194 = vector.broadcast %cst_78 : f32 to vector<8x128xf32>
    %195 = arith.addf %194, %193 : vector<8x128xf32>
    %cst_79 = arith.constant 1.000000e+00 : f32
    %196 = vector.broadcast %cst_79 : f32 to vector<8x128xf32>
    %197 = arith.divf %196, %195 : vector<8x128xf32>
    %198 = arith.mulf %187, %163 : vector<8x128xf32>
    %199 = arith.mulf %179, %189 : vector<8x128xf32>
    %200 = arith.addf %198, %199 : vector<8x128xf32>
    %201 = math.tanh %200 : vector<8x128xf32>
    %202 = arith.mulf %197, %201 : vector<8x128xf32>
    %c5_i32 = arith.constant 5 : i32
    %c8_i32_80 = arith.constant 8 : i32
    %203 = arith.muli %c5_i32, %c8_i32_80 : i32
    %204 = tpu.assume_multiple %203, 8 : i32
    %205 = arith.index_cast %204 : i32 to index
    %c0_81 = arith.constant 0 : index
    %206 = vector.load %arg19[%205, %c0_81] : memref<128x512xf32, #tpu.memory_space<vmem>>, vector<8x512xf32>
    %cst_82 = arith.constant dense<0.000000e+00> : vector<8x512xf32>
    %207 = tpu.matmul %202, %15, %cst_82 {dimension_numbers = #tpu.dot_dimension_numbers<[1], [0], [0], [1], [0, 0, 1, 1], [], []>} : vector<8x128xf32>, vector<128x512xf32>, vector<8x512xf32> -> vector<8x512xf32>
    %208 = arith.addf %206, %207 : vector<8x512xf32>
    %209 = vector.extract_strided_slice %208 {offsets = [0, 0], sizes = [8, 128], strides = [1, 1]} : vector<8x512xf32> to vector<8x128xf32>
    %cst_83 = arith.constant 0.000000e+00 : f32
    %210 = vector.broadcast %cst_83 : f32 to vector<8x128xf32>
    %211 = arith.subf %210, %209 : vector<8x128xf32>
    %212 = math.exp %211 : vector<8x128xf32>
    %cst_84 = arith.constant 1.000000e+00 : f32
    %213 = vector.broadcast %cst_84 : f32 to vector<8x128xf32>
    %214 = arith.addf %213, %212 : vector<8x128xf32>
    %cst_85 = arith.constant 1.000000e+00 : f32
    %215 = vector.broadcast %cst_85 : f32 to vector<8x128xf32>
    %216 = arith.divf %215, %214 : vector<8x128xf32>
    %217 = vector.extract_strided_slice %208 {offsets = [0, 128], sizes = [8, 128], strides = [1, 1]} : vector<8x512xf32> to vector<8x128xf32>
    %cst_86 = arith.constant 0.000000e+00 : f32
    %218 = vector.broadcast %cst_86 : f32 to vector<8x128xf32>
    %219 = arith.subf %218, %217 : vector<8x128xf32>
    %220 = math.exp %219 : vector<8x128xf32>
    %cst_87 = arith.constant 1.000000e+00 : f32
    %221 = vector.broadcast %cst_87 : f32 to vector<8x128xf32>
    %222 = arith.addf %221, %220 : vector<8x128xf32>
    %cst_88 = arith.constant 1.000000e+00 : f32
    %223 = vector.broadcast %cst_88 : f32 to vector<8x128xf32>
    %224 = arith.divf %223, %222 : vector<8x128xf32>
    %225 = vector.extract_strided_slice %208 {offsets = [0, 256], sizes = [8, 128], strides = [1, 1]} : vector<8x512xf32> to vector<8x128xf32>
    %226 = math.tanh %225 : vector<8x128xf32>
    %227 = vector.extract_strided_slice %208 {offsets = [0, 384], sizes = [8, 128], strides = [1, 1]} : vector<8x512xf32> to vector<8x128xf32>
    %cst_89 = arith.constant 0.000000e+00 : f32
    %228 = vector.broadcast %cst_89 : f32 to vector<8x128xf32>
    %229 = arith.subf %228, %227 : vector<8x128xf32>
    %230 = math.exp %229 : vector<8x128xf32>
    %cst_90 = arith.constant 1.000000e+00 : f32
    %231 = vector.broadcast %cst_90 : f32 to vector<8x128xf32>
    %232 = arith.addf %231, %230 : vector<8x128xf32>
    %cst_91 = arith.constant 1.000000e+00 : f32
    %233 = vector.broadcast %cst_91 : f32 to vector<8x128xf32>
    %234 = arith.divf %233, %232 : vector<8x128xf32>
    %235 = arith.mulf %224, %200 : vector<8x128xf32>
    %236 = arith.mulf %216, %226 : vector<8x128xf32>
    %237 = arith.addf %235, %236 : vector<8x128xf32>
    %238 = math.tanh %237 : vector<8x128xf32>
    %239 = arith.mulf %234, %238 : vector<8x128xf32>
    %c6_i32 = arith.constant 6 : i32
    %c8_i32_92 = arith.constant 8 : i32
    %240 = arith.muli %c6_i32, %c8_i32_92 : i32
    %241 = tpu.assume_multiple %240, 8 : i32
    %242 = arith.index_cast %241 : i32 to index
    %c0_93 = arith.constant 0 : index
    %243 = vector.load %arg19[%242, %c0_93] : memref<128x512xf32, #tpu.memory_space<vmem>>, vector<8x512xf32>
    %cst_94 = arith.constant dense<0.000000e+00> : vector<8x512xf32>
    %244 = tpu.matmul %239, %15, %cst_94 {dimension_numbers = #tpu.dot_dimension_numbers<[1], [0], [0], [1], [0, 0, 1, 1], [], []>} : vector<8x128xf32>, vector<128x512xf32>, vector<8x512xf32> -> vector<8x512xf32>
    %245 = arith.addf %243, %244 : vector<8x512xf32>
    %246 = vector.extract_strided_slice %245 {offsets = [0, 0], sizes = [8, 128], strides = [1, 1]} : vector<8x512xf32> to vector<8x128xf32>
    %cst_95 = arith.constant 0.000000e+00 : f32
    %247 = vector.broadcast %cst_95 : f32 to vector<8x128xf32>
    %248 = arith.subf %247, %246 : vector<8x128xf32>
    %249 = math.exp %248 : vector<8x128xf32>
    %cst_96 = arith.constant 1.000000e+00 : f32
    %250 = vector.broadcast %cst_96 : f32 to vector<8x128xf32>
    %251 = arith.addf %250, %249 : vector<8x128xf32>
    %cst_97 = arith.constant 1.000000e+00 : f32
    %252 = vector.broadcast %cst_97 : f32 to vector<8x128xf32>
    %253 = arith.divf %252, %251 : vector<8x128xf32>
    %254 = vector.extract_strided_slice %245 {offsets = [0, 128], sizes = [8, 128], strides = [1, 1]} : vector<8x512xf32> to vector<8x128xf32>
    %cst_98 = arith.constant 0.000000e+00 : f32
    %255 = vector.broadcast %cst_98 : f32 to vector<8x128xf32>
    %256 = arith.subf %255, %254 : vector<8x128xf32>
    %257 = math.exp %256 : vector<8x128xf32>
    %cst_99 = arith.constant 1.000000e+00 : f32
    %258 = vector.broadcast %cst_99 : f32 to vector<8x128xf32>
    %259 = arith.addf %258, %257 : vector<8x128xf32>
    %cst_100 = arith.constant 1.000000e+00 : f32
    %260 = vector.broadcast %cst_100 : f32 to vector<8x128xf32>
    %261 = arith.divf %260, %259 : vector<8x128xf32>
    %262 = vector.extract_strided_slice %245 {offsets = [0, 256], sizes = [8, 128], strides = [1, 1]} : vector<8x512xf32> to vector<8x128xf32>
    %263 = math.tanh %262 : vector<8x128xf32>
    %264 = vector.extract_strided_slice %245 {offsets = [0, 384], sizes = [8, 128], strides = [1, 1]} : vector<8x512xf32> to vector<8x128xf32>
    %cst_101 = arith.constant 0.000000e+00 : f32
    %265 = vector.broadcast %cst_101 : f32 to vector<8x128xf32>
    %266 = arith.subf %265, %264 : vector<8x128xf32>
    %267 = math.exp %266 : vector<8x128xf32>
    %cst_102 = arith.constant 1.000000e+00 : f32
    %268 = vector.broadcast %cst_102 : f32 to vector<8x128xf32>
    %269 = arith.addf %268, %267 : vector<8x128xf32>
    %cst_103 = arith.constant 1.000000e+00 : f32
    %270 = vector.broadcast %cst_103 : f32 to vector<8x128xf32>
    %271 = arith.divf %270, %269 : vector<8x128xf32>
    %272 = arith.mulf %261, %237 : vector<8x128xf32>
    %273 = arith.mulf %253, %263 : vector<8x128xf32>
    %274 = arith.addf %272, %273 : vector<8x128xf32>
    %275 = math.tanh %274 : vector<8x128xf32>
    %276 = arith.mulf %271, %275 : vector<8x128xf32>
    %c7_i32 = arith.constant 7 : i32
    %c8_i32_104 = arith.constant 8 : i32
    %277 = arith.muli %c7_i32, %c8_i32_104 : i32
    %278 = tpu.assume_multiple %277, 8 : i32
    %279 = arith.index_cast %278 : i32 to index
    %c0_105 = arith.constant 0 : index
    %280 = vector.load %arg19[%279, %c0_105] : memref<128x512xf32, #tpu.memory_space<vmem>>, vector<8x512xf32>
    %cst_106 = arith.constant dense<0.000000e+00> : vector<8x512xf32>
    %281 = tpu.matmul %276, %15, %cst_106 {dimension_numbers = #tpu.dot_dimension_numbers<[1], [0], [0], [1], [0, 0, 1, 1], [], []>} : vector<8x128xf32>, vector<128x512xf32>, vector<8x512xf32> -> vector<8x512xf32>
    %282 = arith.addf %280, %281 : vector<8x512xf32>
    %283 = vector.extract_strided_slice %282 {offsets = [0, 0], sizes = [8, 128], strides = [1, 1]} : vector<8x512xf32> to vector<8x128xf32>
    %cst_107 = arith.constant 0.000000e+00 : f32
    %284 = vector.broadcast %cst_107 : f32 to vector<8x128xf32>
    %285 = arith.subf %284, %283 : vector<8x128xf32>
    %286 = math.exp %285 : vector<8x128xf32>
    %cst_108 = arith.constant 1.000000e+00 : f32
    %287 = vector.broadcast %cst_108 : f32 to vector<8x128xf32>
    %288 = arith.addf %287, %286 : vector<8x128xf32>
    %cst_109 = arith.constant 1.000000e+00 : f32
    %289 = vector.broadcast %cst_109 : f32 to vector<8x128xf32>
    %290 = arith.divf %289, %288 : vector<8x128xf32>
    %291 = vector.extract_strided_slice %282 {offsets = [0, 128], sizes = [8, 128], strides = [1, 1]} : vector<8x512xf32> to vector<8x128xf32>
    %cst_110 = arith.constant 0.000000e+00 : f32
    %292 = vector.broadcast %cst_110 : f32 to vector<8x128xf32>
    %293 = arith.subf %292, %291 : vector<8x128xf32>
    %294 = math.exp %293 : vector<8x128xf32>
    %cst_111 = arith.constant 1.000000e+00 : f32
    %295 = vector.broadcast %cst_111 : f32 to vector<8x128xf32>
    %296 = arith.addf %295, %294 : vector<8x128xf32>
    %cst_112 = arith.constant 1.000000e+00 : f32
    %297 = vector.broadcast %cst_112 : f32 to vector<8x128xf32>
    %298 = arith.divf %297, %296 : vector<8x128xf32>
    %299 = vector.extract_strided_slice %282 {offsets = [0, 256], sizes = [8, 128], strides = [1, 1]} : vector<8x512xf32> to vector<8x128xf32>
    %300 = math.tanh %299 : vector<8x128xf32>
    %301 = vector.extract_strided_slice %282 {offsets = [0, 384], sizes = [8, 128], strides = [1, 1]} : vector<8x512xf32> to vector<8x128xf32>
    %cst_113 = arith.constant 0.000000e+00 : f32
    %302 = vector.broadcast %cst_113 : f32 to vector<8x128xf32>
    %303 = arith.subf %302, %301 : vector<8x128xf32>
    %304 = math.exp %303 : vector<8x128xf32>
    %cst_114 = arith.constant 1.000000e+00 : f32
    %305 = vector.broadcast %cst_114 : f32 to vector<8x128xf32>
    %306 = arith.addf %305, %304 : vector<8x128xf32>
    %cst_115 = arith.constant 1.000000e+00 : f32
    %307 = vector.broadcast %cst_115 : f32 to vector<8x128xf32>
    %308 = arith.divf %307, %306 : vector<8x128xf32>
    %309 = arith.mulf %298, %274 : vector<8x128xf32>
    %310 = arith.mulf %290, %300 : vector<8x128xf32>
    %311 = arith.addf %309, %310 : vector<8x128xf32>
    %312 = math.tanh %311 : vector<8x128xf32>
    %313 = arith.mulf %308, %312 : vector<8x128xf32>
    %c8_i32_116 = arith.constant 8 : i32
    %c8_i32_117 = arith.constant 8 : i32
    %314 = arith.muli %c8_i32_116, %c8_i32_117 : i32
    %315 = tpu.assume_multiple %314, 8 : i32
    %316 = arith.index_cast %315 : i32 to index
    %c0_118 = arith.constant 0 : index
    %317 = vector.load %arg19[%316, %c0_118] : memref<128x512xf32, #tpu.memory_space<vmem>>, vector<8x512xf32>
    %cst_119 = arith.constant dense<0.000000e+00> : vector<8x512xf32>
    %318 = tpu.matmul %313, %15, %cst_119 {dimension_numbers = #tpu.dot_dimension_numbers<[1], [0], [0], [1], [0, 0, 1, 1], [], []>} : vector<8x128xf32>, vector<128x512xf32>, vector<8x512xf32> -> vector<8x512xf32>
    %319 = arith.addf %317, %318 : vector<8x512xf32>
    %320 = vector.extract_strided_slice %319 {offsets = [0, 0], sizes = [8, 128], strides = [1, 1]} : vector<8x512xf32> to vector<8x128xf32>
    %cst_120 = arith.constant 0.000000e+00 : f32
    %321 = vector.broadcast %cst_120 : f32 to vector<8x128xf32>
    %322 = arith.subf %321, %320 : vector<8x128xf32>
    %323 = math.exp %322 : vector<8x128xf32>
    %cst_121 = arith.constant 1.000000e+00 : f32
    %324 = vector.broadcast %cst_121 : f32 to vector<8x128xf32>
    %325 = arith.addf %324, %323 : vector<8x128xf32>
    %cst_122 = arith.constant 1.000000e+00 : f32
    %326 = vector.broadcast %cst_122 : f32 to vector<8x128xf32>
    %327 = arith.divf %326, %325 : vector<8x128xf32>
    %328 = vector.extract_strided_slice %319 {offsets = [0, 128], sizes = [8, 128], strides = [1, 1]} : vector<8x512xf32> to vector<8x128xf32>
    %cst_123 = arith.constant 0.000000e+00 : f32
    %329 = vector.broadcast %cst_123 : f32 to vector<8x128xf32>
    %330 = arith.subf %329, %328 : vector<8x128xf32>
    %331 = math.exp %330 : vector<8x128xf32>
    %cst_124 = arith.constant 1.000000e+00 : f32
    %332 = vector.broadcast %cst_124 : f32 to vector<8x128xf32>
    %333 = arith.addf %332, %331 : vector<8x128xf32>
    %cst_125 = arith.constant 1.000000e+00 : f32
    %334 = vector.broadcast %cst_125 : f32 to vector<8x128xf32>
    %335 = arith.divf %334, %333 : vector<8x128xf32>
    %336 = vector.extract_strided_slice %319 {offsets = [0, 256], sizes = [8, 128], strides = [1, 1]} : vector<8x512xf32> to vector<8x128xf32>
    %337 = math.tanh %336 : vector<8x128xf32>
    %338 = vector.extract_strided_slice %319 {offsets = [0, 384], sizes = [8, 128], strides = [1, 1]} : vector<8x512xf32> to vector<8x128xf32>
    %cst_126 = arith.constant 0.000000e+00 : f32
    %339 = vector.broadcast %cst_126 : f32 to vector<8x128xf32>
    %340 = arith.subf %339, %338 : vector<8x128xf32>
    %341 = math.exp %340 : vector<8x128xf32>
    %cst_127 = arith.constant 1.000000e+00 : f32
    %342 = vector.broadcast %cst_127 : f32 to vector<8x128xf32>
    %343 = arith.addf %342, %341 : vector<8x128xf32>
    %cst_128 = arith.constant 1.000000e+00 : f32
    %344 = vector.broadcast %cst_128 : f32 to vector<8x128xf32>
    %345 = arith.divf %344, %343 : vector<8x128xf32>
    %346 = arith.mulf %335, %311 : vector<8x128xf32>
    %347 = arith.mulf %327, %337 : vector<8x128xf32>
    %348 = arith.addf %346, %347 : vector<8x128xf32>
    %349 = math.tanh %348 : vector<8x128xf32>
    %350 = arith.mulf %345, %349 : vector<8x128xf32>
    %c9_i32 = arith.constant 9 : i32
    %c8_i32_129 = arith.constant 8 : i32
    %351 = arith.muli %c9_i32, %c8_i32_129 : i32
    %352 = tpu.assume_multiple %351, 8 : i32
    %353 = arith.index_cast %352 : i32 to index
    %c0_130 = arith.constant 0 : index
    %354 = vector.load %arg19[%353, %c0_130] : memref<128x512xf32, #tpu.memory_space<vmem>>, vector<8x512xf32>
    %cst_131 = arith.constant dense<0.000000e+00> : vector<8x512xf32>
    %355 = tpu.matmul %350, %15, %cst_131 {dimension_numbers = #tpu.dot_dimension_numbers<[1], [0], [0], [1], [0, 0, 1, 1], [], []>} : vector<8x128xf32>, vector<128x512xf32>, vector<8x512xf32> -> vector<8x512xf32>
    %356 = arith.addf %354, %355 : vector<8x512xf32>
    %357 = vector.extract_strided_slice %356 {offsets = [0, 0], sizes = [8, 128], strides = [1, 1]} : vector<8x512xf32> to vector<8x128xf32>
    %cst_132 = arith.constant 0.000000e+00 : f32
    %358 = vector.broadcast %cst_132 : f32 to vector<8x128xf32>
    %359 = arith.subf %358, %357 : vector<8x128xf32>
    %360 = math.exp %359 : vector<8x128xf32>
    %cst_133 = arith.constant 1.000000e+00 : f32
    %361 = vector.broadcast %cst_133 : f32 to vector<8x128xf32>
    %362 = arith.addf %361, %360 : vector<8x128xf32>
    %cst_134 = arith.constant 1.000000e+00 : f32
    %363 = vector.broadcast %cst_134 : f32 to vector<8x128xf32>
    %364 = arith.divf %363, %362 : vector<8x128xf32>
    %365 = vector.extract_strided_slice %356 {offsets = [0, 128], sizes = [8, 128], strides = [1, 1]} : vector<8x512xf32> to vector<8x128xf32>
    %cst_135 = arith.constant 0.000000e+00 : f32
    %366 = vector.broadcast %cst_135 : f32 to vector<8x128xf32>
    %367 = arith.subf %366, %365 : vector<8x128xf32>
    %368 = math.exp %367 : vector<8x128xf32>
    %cst_136 = arith.constant 1.000000e+00 : f32
    %369 = vector.broadcast %cst_136 : f32 to vector<8x128xf32>
    %370 = arith.addf %369, %368 : vector<8x128xf32>
    %cst_137 = arith.constant 1.000000e+00 : f32
    %371 = vector.broadcast %cst_137 : f32 to vector<8x128xf32>
    %372 = arith.divf %371, %370 : vector<8x128xf32>
    %373 = vector.extract_strided_slice %356 {offsets = [0, 256], sizes = [8, 128], strides = [1, 1]} : vector<8x512xf32> to vector<8x128xf32>
    %374 = math.tanh %373 : vector<8x128xf32>
    %375 = vector.extract_strided_slice %356 {offsets = [0, 384], sizes = [8, 128], strides = [1, 1]} : vector<8x512xf32> to vector<8x128xf32>
    %cst_138 = arith.constant 0.000000e+00 : f32
    %376 = vector.broadcast %cst_138 : f32 to vector<8x128xf32>
    %377 = arith.subf %376, %375 : vector<8x128xf32>
    %378 = math.exp %377 : vector<8x128xf32>
    %cst_139 = arith.constant 1.000000e+00 : f32
    %379 = vector.broadcast %cst_139 : f32 to vector<8x128xf32>
    %380 = arith.addf %379, %378 : vector<8x128xf32>
    %cst_140 = arith.constant 1.000000e+00 : f32
    %381 = vector.broadcast %cst_140 : f32 to vector<8x128xf32>
    %382 = arith.divf %381, %380 : vector<8x128xf32>
    %383 = arith.mulf %372, %348 : vector<8x128xf32>
    %384 = arith.mulf %364, %374 : vector<8x128xf32>
    %385 = arith.addf %383, %384 : vector<8x128xf32>
    %386 = math.tanh %385 : vector<8x128xf32>
    %387 = arith.mulf %382, %386 : vector<8x128xf32>
    %c10_i32 = arith.constant 10 : i32
    %c8_i32_141 = arith.constant 8 : i32
    %388 = arith.muli %c10_i32, %c8_i32_141 : i32
    %389 = tpu.assume_multiple %388, 8 : i32
    %390 = arith.index_cast %389 : i32 to index
    %c0_142 = arith.constant 0 : index
    %391 = vector.load %arg19[%390, %c0_142] : memref<128x512xf32, #tpu.memory_space<vmem>>, vector<8x512xf32>
    %cst_143 = arith.constant dense<0.000000e+00> : vector<8x512xf32>
    %392 = tpu.matmul %387, %15, %cst_143 {dimension_numbers = #tpu.dot_dimension_numbers<[1], [0], [0], [1], [0, 0, 1, 1], [], []>} : vector<8x128xf32>, vector<128x512xf32>, vector<8x512xf32> -> vector<8x512xf32>
    %393 = arith.addf %391, %392 : vector<8x512xf32>
    %394 = vector.extract_strided_slice %393 {offsets = [0, 0], sizes = [8, 128], strides = [1, 1]} : vector<8x512xf32> to vector<8x128xf32>
    %cst_144 = arith.constant 0.000000e+00 : f32
    %395 = vector.broadcast %cst_144 : f32 to vector<8x128xf32>
    %396 = arith.subf %395, %394 : vector<8x128xf32>
    %397 = math.exp %396 : vector<8x128xf32>
    %cst_145 = arith.constant 1.000000e+00 : f32
    %398 = vector.broadcast %cst_145 : f32 to vector<8x128xf32>
    %399 = arith.addf %398, %397 : vector<8x128xf32>
    %cst_146 = arith.constant 1.000000e+00 : f32
    %400 = vector.broadcast %cst_146 : f32 to vector<8x128xf32>
    %401 = arith.divf %400, %399 : vector<8x128xf32>
    %402 = vector.extract_strided_slice %393 {offsets = [0, 128], sizes = [8, 128], strides = [1, 1]} : vector<8x512xf32> to vector<8x128xf32>
    %cst_147 = arith.constant 0.000000e+00 : f32
    %403 = vector.broadcast %cst_147 : f32 to vector<8x128xf32>
    %404 = arith.subf %403, %402 : vector<8x128xf32>
    %405 = math.exp %404 : vector<8x128xf32>
    %cst_148 = arith.constant 1.000000e+00 : f32
    %406 = vector.broadcast %cst_148 : f32 to vector<8x128xf32>
    %407 = arith.addf %406, %405 : vector<8x128xf32>
    %cst_149 = arith.constant 1.000000e+00 : f32
    %408 = vector.broadcast %cst_149 : f32 to vector<8x128xf32>
    %409 = arith.divf %408, %407 : vector<8x128xf32>
    %410 = vector.extract_strided_slice %393 {offsets = [0, 256], sizes = [8, 128], strides = [1, 1]} : vector<8x512xf32> to vector<8x128xf32>
    %411 = math.tanh %410 : vector<8x128xf32>
    %412 = vector.extract_strided_slice %393 {offsets = [0, 384], sizes = [8, 128], strides = [1, 1]} : vector<8x512xf32> to vector<8x128xf32>
    %cst_150 = arith.constant 0.000000e+00 : f32
    %413 = vector.broadcast %cst_150 : f32 to vector<8x128xf32>
    %414 = arith.subf %413, %412 : vector<8x128xf32>
    %415 = math.exp %414 : vector<8x128xf32>
    %cst_151 = arith.constant 1.000000e+00 : f32
    %416 = vector.broadcast %cst_151 : f32 to vector<8x128xf32>
    %417 = arith.addf %416, %415 : vector<8x128xf32>
    %cst_152 = arith.constant 1.000000e+00 : f32
    %418 = vector.broadcast %cst_152 : f32 to vector<8x128xf32>
    %419 = arith.divf %418, %417 : vector<8x128xf32>
    %420 = arith.mulf %409, %385 : vector<8x128xf32>
    %421 = arith.mulf %401, %411 : vector<8x128xf32>
    %422 = arith.addf %420, %421 : vector<8x128xf32>
    %423 = math.tanh %422 : vector<8x128xf32>
    %424 = arith.mulf %419, %423 : vector<8x128xf32>
    %c11_i32 = arith.constant 11 : i32
    %c8_i32_153 = arith.constant 8 : i32
    %425 = arith.muli %c11_i32, %c8_i32_153 : i32
    %426 = tpu.assume_multiple %425, 8 : i32
    %427 = arith.index_cast %426 : i32 to index
    %c0_154 = arith.constant 0 : index
    %428 = vector.load %arg19[%427, %c0_154] : memref<128x512xf32, #tpu.memory_space<vmem>>, vector<8x512xf32>
    %cst_155 = arith.constant dense<0.000000e+00> : vector<8x512xf32>
    %429 = tpu.matmul %424, %15, %cst_155 {dimension_numbers = #tpu.dot_dimension_numbers<[1], [0], [0], [1], [0, 0, 1, 1], [], []>} : vector<8x128xf32>, vector<128x512xf32>, vector<8x512xf32> -> vector<8x512xf32>
    %430 = arith.addf %428, %429 : vector<8x512xf32>
    %431 = vector.extract_strided_slice %430 {offsets = [0, 0], sizes = [8, 128], strides = [1, 1]} : vector<8x512xf32> to vector<8x128xf32>
    %cst_156 = arith.constant 0.000000e+00 : f32
    %432 = vector.broadcast %cst_156 : f32 to vector<8x128xf32>
    %433 = arith.subf %432, %431 : vector<8x128xf32>
    %434 = math.exp %433 : vector<8x128xf32>
    %cst_157 = arith.constant 1.000000e+00 : f32
    %435 = vector.broadcast %cst_157 : f32 to vector<8x128xf32>
    %436 = arith.addf %435, %434 : vector<8x128xf32>
    %cst_158 = arith.constant 1.000000e+00 : f32
    %437 = vector.broadcast %cst_158 : f32 to vector<8x128xf32>
    %438 = arith.divf %437, %436 : vector<8x128xf32>
    %439 = vector.extract_strided_slice %430 {offsets = [0, 128], sizes = [8, 128], strides = [1, 1]} : vector<8x512xf32> to vector<8x128xf32>
    %cst_159 = arith.constant 0.000000e+00 : f32
    %440 = vector.broadcast %cst_159 : f32 to vector<8x128xf32>
    %441 = arith.subf %440, %439 : vector<8x128xf32>
    %442 = math.exp %441 : vector<8x128xf32>
    %cst_160 = arith.constant 1.000000e+00 : f32
    %443 = vector.broadcast %cst_160 : f32 to vector<8x128xf32>
    %444 = arith.addf %443, %442 : vector<8x128xf32>
    %cst_161 = arith.constant 1.000000e+00 : f32
    %445 = vector.broadcast %cst_161 : f32 to vector<8x128xf32>
    %446 = arith.divf %445, %444 : vector<8x128xf32>
    %447 = vector.extract_strided_slice %430 {offsets = [0, 256], sizes = [8, 128], strides = [1, 1]} : vector<8x512xf32> to vector<8x128xf32>
    %448 = math.tanh %447 : vector<8x128xf32>
    %449 = vector.extract_strided_slice %430 {offsets = [0, 384], sizes = [8, 128], strides = [1, 1]} : vector<8x512xf32> to vector<8x128xf32>
    %cst_162 = arith.constant 0.000000e+00 : f32
    %450 = vector.broadcast %cst_162 : f32 to vector<8x128xf32>
    %451 = arith.subf %450, %449 : vector<8x128xf32>
    %452 = math.exp %451 : vector<8x128xf32>
    %cst_163 = arith.constant 1.000000e+00 : f32
    %453 = vector.broadcast %cst_163 : f32 to vector<8x128xf32>
    %454 = arith.addf %453, %452 : vector<8x128xf32>
    %cst_164 = arith.constant 1.000000e+00 : f32
    %455 = vector.broadcast %cst_164 : f32 to vector<8x128xf32>
    %456 = arith.divf %455, %454 : vector<8x128xf32>
    %457 = arith.mulf %446, %422 : vector<8x128xf32>
    %458 = arith.mulf %438, %448 : vector<8x128xf32>
    %459 = arith.addf %457, %458 : vector<8x128xf32>
    %460 = math.tanh %459 : vector<8x128xf32>
    %461 = arith.mulf %456, %460 : vector<8x128xf32>
    %c12_i32 = arith.constant 12 : i32
    %c8_i32_165 = arith.constant 8 : i32
    %462 = arith.muli %c12_i32, %c8_i32_165 : i32
    %463 = tpu.assume_multiple %462, 8 : i32
    %464 = arith.index_cast %463 : i32 to index
    %c0_166 = arith.constant 0 : index
    %465 = vector.load %arg19[%464, %c0_166] : memref<128x512xf32, #tpu.memory_space<vmem>>, vector<8x512xf32>
    %cst_167 = arith.constant dense<0.000000e+00> : vector<8x512xf32>
    %466 = tpu.matmul %461, %15, %cst_167 {dimension_numbers = #tpu.dot_dimension_numbers<[1], [0], [0], [1], [0, 0, 1, 1], [], []>} : vector<8x128xf32>, vector<128x512xf32>, vector<8x512xf32> -> vector<8x512xf32>
    %467 = arith.addf %465, %466 : vector<8x512xf32>
    %468 = vector.extract_strided_slice %467 {offsets = [0, 0], sizes = [8, 128], strides = [1, 1]} : vector<8x512xf32> to vector<8x128xf32>
    %cst_168 = arith.constant 0.000000e+00 : f32
    %469 = vector.broadcast %cst_168 : f32 to vector<8x128xf32>
    %470 = arith.subf %469, %468 : vector<8x128xf32>
    %471 = math.exp %470 : vector<8x128xf32>
    %cst_169 = arith.constant 1.000000e+00 : f32
    %472 = vector.broadcast %cst_169 : f32 to vector<8x128xf32>
    %473 = arith.addf %472, %471 : vector<8x128xf32>
    %cst_170 = arith.constant 1.000000e+00 : f32
    %474 = vector.broadcast %cst_170 : f32 to vector<8x128xf32>
    %475 = arith.divf %474, %473 : vector<8x128xf32>
    %476 = vector.extract_strided_slice %467 {offsets = [0, 128], sizes = [8, 128], strides = [1, 1]} : vector<8x512xf32> to vector<8x128xf32>
    %cst_171 = arith.constant 0.000000e+00 : f32
    %477 = vector.broadcast %cst_171 : f32 to vector<8x128xf32>
    %478 = arith.subf %477, %476 : vector<8x128xf32>
    %479 = math.exp %478 : vector<8x128xf32>
    %cst_172 = arith.constant 1.000000e+00 : f32
    %480 = vector.broadcast %cst_172 : f32 to vector<8x128xf32>
    %481 = arith.addf %480, %479 : vector<8x128xf32>
    %cst_173 = arith.constant 1.000000e+00 : f32
    %482 = vector.broadcast %cst_173 : f32 to vector<8x128xf32>
    %483 = arith.divf %482, %481 : vector<8x128xf32>
    %484 = vector.extract_strided_slice %467 {offsets = [0, 256], sizes = [8, 128], strides = [1, 1]} : vector<8x512xf32> to vector<8x128xf32>
    %485 = math.tanh %484 : vector<8x128xf32>
    %486 = vector.extract_strided_slice %467 {offsets = [0, 384], sizes = [8, 128], strides = [1, 1]} : vector<8x512xf32> to vector<8x128xf32>
    %cst_174 = arith.constant 0.000000e+00 : f32
    %487 = vector.broadcast %cst_174 : f32 to vector<8x128xf32>
    %488 = arith.subf %487, %486 : vector<8x128xf32>
    %489 = math.exp %488 : vector<8x128xf32>
    %cst_175 = arith.constant 1.000000e+00 : f32
    %490 = vector.broadcast %cst_175 : f32 to vector<8x128xf32>
    %491 = arith.addf %490, %489 : vector<8x128xf32>
    %cst_176 = arith.constant 1.000000e+00 : f32
    %492 = vector.broadcast %cst_176 : f32 to vector<8x128xf32>
    %493 = arith.divf %492, %491 : vector<8x128xf32>
    %494 = arith.mulf %483, %459 : vector<8x128xf32>
    %495 = arith.mulf %475, %485 : vector<8x128xf32>
    %496 = arith.addf %494, %495 : vector<8x128xf32>
    %497 = math.tanh %496 : vector<8x128xf32>
    %498 = arith.mulf %493, %497 : vector<8x128xf32>
    %c13_i32 = arith.constant 13 : i32
    %c8_i32_177 = arith.constant 8 : i32
    %499 = arith.muli %c13_i32, %c8_i32_177 : i32
    %500 = tpu.assume_multiple %499, 8 : i32
    %501 = arith.index_cast %500 : i32 to index
    %c0_178 = arith.constant 0 : index
    %502 = vector.load %arg19[%501, %c0_178] : memref<128x512xf32, #tpu.memory_space<vmem>>, vector<8x512xf32>
    %cst_179 = arith.constant dense<0.000000e+00> : vector<8x512xf32>
    %503 = tpu.matmul %498, %15, %cst_179 {dimension_numbers = #tpu.dot_dimension_numbers<[1], [0], [0], [1], [0, 0, 1, 1], [], []>} : vector<8x128xf32>, vector<128x512xf32>, vector<8x512xf32> -> vector<8x512xf32>
    %504 = arith.addf %502, %503 : vector<8x512xf32>
    %505 = vector.extract_strided_slice %504 {offsets = [0, 0], sizes = [8, 128], strides = [1, 1]} : vector<8x512xf32> to vector<8x128xf32>
    %cst_180 = arith.constant 0.000000e+00 : f32
    %506 = vector.broadcast %cst_180 : f32 to vector<8x128xf32>
    %507 = arith.subf %506, %505 : vector<8x128xf32>
    %508 = math.exp %507 : vector<8x128xf32>
    %cst_181 = arith.constant 1.000000e+00 : f32
    %509 = vector.broadcast %cst_181 : f32 to vector<8x128xf32>
    %510 = arith.addf %509, %508 : vector<8x128xf32>
    %cst_182 = arith.constant 1.000000e+00 : f32
    %511 = vector.broadcast %cst_182 : f32 to vector<8x128xf32>
    %512 = arith.divf %511, %510 : vector<8x128xf32>
    %513 = vector.extract_strided_slice %504 {offsets = [0, 128], sizes = [8, 128], strides = [1, 1]} : vector<8x512xf32> to vector<8x128xf32>
    %cst_183 = arith.constant 0.000000e+00 : f32
    %514 = vector.broadcast %cst_183 : f32 to vector<8x128xf32>
    %515 = arith.subf %514, %513 : vector<8x128xf32>
    %516 = math.exp %515 : vector<8x128xf32>
    %cst_184 = arith.constant 1.000000e+00 : f32
    %517 = vector.broadcast %cst_184 : f32 to vector<8x128xf32>
    %518 = arith.addf %517, %516 : vector<8x128xf32>
    %cst_185 = arith.constant 1.000000e+00 : f32
    %519 = vector.broadcast %cst_185 : f32 to vector<8x128xf32>
    %520 = arith.divf %519, %518 : vector<8x128xf32>
    %521 = vector.extract_strided_slice %504 {offsets = [0, 256], sizes = [8, 128], strides = [1, 1]} : vector<8x512xf32> to vector<8x128xf32>
    %522 = math.tanh %521 : vector<8x128xf32>
    %523 = vector.extract_strided_slice %504 {offsets = [0, 384], sizes = [8, 128], strides = [1, 1]} : vector<8x512xf32> to vector<8x128xf32>
    %cst_186 = arith.constant 0.000000e+00 : f32
    %524 = vector.broadcast %cst_186 : f32 to vector<8x128xf32>
    %525 = arith.subf %524, %523 : vector<8x128xf32>
    %526 = math.exp %525 : vector<8x128xf32>
    %cst_187 = arith.constant 1.000000e+00 : f32
    %527 = vector.broadcast %cst_187 : f32 to vector<8x128xf32>
    %528 = arith.addf %527, %526 : vector<8x128xf32>
    %cst_188 = arith.constant 1.000000e+00 : f32
    %529 = vector.broadcast %cst_188 : f32 to vector<8x128xf32>
    %530 = arith.divf %529, %528 : vector<8x128xf32>
    %531 = arith.mulf %520, %496 : vector<8x128xf32>
    %532 = arith.mulf %512, %522 : vector<8x128xf32>
    %533 = arith.addf %531, %532 : vector<8x128xf32>
    %534 = math.tanh %533 : vector<8x128xf32>
    %535 = arith.mulf %530, %534 : vector<8x128xf32>
    %c14_i32 = arith.constant 14 : i32
    %c8_i32_189 = arith.constant 8 : i32
    %536 = arith.muli %c14_i32, %c8_i32_189 : i32
    %537 = tpu.assume_multiple %536, 8 : i32
    %538 = arith.index_cast %537 : i32 to index
    %c0_190 = arith.constant 0 : index
    %539 = vector.load %arg19[%538, %c0_190] : memref<128x512xf32, #tpu.memory_space<vmem>>, vector<8x512xf32>
    %cst_191 = arith.constant dense<0.000000e+00> : vector<8x512xf32>
    %540 = tpu.matmul %535, %15, %cst_191 {dimension_numbers = #tpu.dot_dimension_numbers<[1], [0], [0], [1], [0, 0, 1, 1], [], []>} : vector<8x128xf32>, vector<128x512xf32>, vector<8x512xf32> -> vector<8x512xf32>
    %541 = arith.addf %539, %540 : vector<8x512xf32>
    %542 = vector.extract_strided_slice %541 {offsets = [0, 0], sizes = [8, 128], strides = [1, 1]} : vector<8x512xf32> to vector<8x128xf32>
    %cst_192 = arith.constant 0.000000e+00 : f32
    %543 = vector.broadcast %cst_192 : f32 to vector<8x128xf32>
    %544 = arith.subf %543, %542 : vector<8x128xf32>
    %545 = math.exp %544 : vector<8x128xf32>
    %cst_193 = arith.constant 1.000000e+00 : f32
    %546 = vector.broadcast %cst_193 : f32 to vector<8x128xf32>
    %547 = arith.addf %546, %545 : vector<8x128xf32>
    %cst_194 = arith.constant 1.000000e+00 : f32
    %548 = vector.broadcast %cst_194 : f32 to vector<8x128xf32>
    %549 = arith.divf %548, %547 : vector<8x128xf32>
    %550 = vector.extract_strided_slice %541 {offsets = [0, 128], sizes = [8, 128], strides = [1, 1]} : vector<8x512xf32> to vector<8x128xf32>
    %cst_195 = arith.constant 0.000000e+00 : f32
    %551 = vector.broadcast %cst_195 : f32 to vector<8x128xf32>
    %552 = arith.subf %551, %550 : vector<8x128xf32>
    %553 = math.exp %552 : vector<8x128xf32>
    %cst_196 = arith.constant 1.000000e+00 : f32
    %554 = vector.broadcast %cst_196 : f32 to vector<8x128xf32>
    %555 = arith.addf %554, %553 : vector<8x128xf32>
    %cst_197 = arith.constant 1.000000e+00 : f32
    %556 = vector.broadcast %cst_197 : f32 to vector<8x128xf32>
    %557 = arith.divf %556, %555 : vector<8x128xf32>
    %558 = vector.extract_strided_slice %541 {offsets = [0, 256], sizes = [8, 128], strides = [1, 1]} : vector<8x512xf32> to vector<8x128xf32>
    %559 = math.tanh %558 : vector<8x128xf32>
    %560 = vector.extract_strided_slice %541 {offsets = [0, 384], sizes = [8, 128], strides = [1, 1]} : vector<8x512xf32> to vector<8x128xf32>
    %cst_198 = arith.constant 0.000000e+00 : f32
    %561 = vector.broadcast %cst_198 : f32 to vector<8x128xf32>
    %562 = arith.subf %561, %560 : vector<8x128xf32>
    %563 = math.exp %562 : vector<8x128xf32>
    %cst_199 = arith.constant 1.000000e+00 : f32
    %564 = vector.broadcast %cst_199 : f32 to vector<8x128xf32>
    %565 = arith.addf %564, %563 : vector<8x128xf32>
    %cst_200 = arith.constant 1.000000e+00 : f32
    %566 = vector.broadcast %cst_200 : f32 to vector<8x128xf32>
    %567 = arith.divf %566, %565 : vector<8x128xf32>
    %568 = arith.mulf %557, %533 : vector<8x128xf32>
    %569 = arith.mulf %549, %559 : vector<8x128xf32>
    %570 = arith.addf %568, %569 : vector<8x128xf32>
    %571 = math.tanh %570 : vector<8x128xf32>
    %572 = arith.mulf %567, %571 : vector<8x128xf32>
    %c15_i32 = arith.constant 15 : i32
    %c8_i32_201 = arith.constant 8 : i32
    %573 = arith.muli %c15_i32, %c8_i32_201 : i32
    %574 = tpu.assume_multiple %573, 8 : i32
    %575 = arith.index_cast %574 : i32 to index
    %c0_202 = arith.constant 0 : index
    %576 = vector.load %arg19[%575, %c0_202] : memref<128x512xf32, #tpu.memory_space<vmem>>, vector<8x512xf32>
    %cst_203 = arith.constant dense<0.000000e+00> : vector<8x512xf32>
    %577 = tpu.matmul %572, %15, %cst_203 {dimension_numbers = #tpu.dot_dimension_numbers<[1], [0], [0], [1], [0, 0, 1, 1], [], []>} : vector<8x128xf32>, vector<128x512xf32>, vector<8x512xf32> -> vector<8x512xf32>
    %578 = arith.addf %576, %577 : vector<8x512xf32>
    %579 = vector.extract_strided_slice %578 {offsets = [0, 0], sizes = [8, 128], strides = [1, 1]} : vector<8x512xf32> to vector<8x128xf32>
    %cst_204 = arith.constant 0.000000e+00 : f32
    %580 = vector.broadcast %cst_204 : f32 to vector<8x128xf32>
    %581 = arith.subf %580, %579 : vector<8x128xf32>
    %582 = math.exp %581 : vector<8x128xf32>
    %cst_205 = arith.constant 1.000000e+00 : f32
    %583 = vector.broadcast %cst_205 : f32 to vector<8x128xf32>
    %584 = arith.addf %583, %582 : vector<8x128xf32>
    %cst_206 = arith.constant 1.000000e+00 : f32
    %585 = vector.broadcast %cst_206 : f32 to vector<8x128xf32>
    %586 = arith.divf %585, %584 : vector<8x128xf32>
    %587 = vector.extract_strided_slice %578 {offsets = [0, 128], sizes = [8, 128], strides = [1, 1]} : vector<8x512xf32> to vector<8x128xf32>
    %cst_207 = arith.constant 0.000000e+00 : f32
    %588 = vector.broadcast %cst_207 : f32 to vector<8x128xf32>
    %589 = arith.subf %588, %587 : vector<8x128xf32>
    %590 = math.exp %589 : vector<8x128xf32>
    %cst_208 = arith.constant 1.000000e+00 : f32
    %591 = vector.broadcast %cst_208 : f32 to vector<8x128xf32>
    %592 = arith.addf %591, %590 : vector<8x128xf32>
    %cst_209 = arith.constant 1.000000e+00 : f32
    %593 = vector.broadcast %cst_209 : f32 to vector<8x128xf32>
    %594 = arith.divf %593, %592 : vector<8x128xf32>
    %595 = vector.extract_strided_slice %578 {offsets = [0, 256], sizes = [8, 128], strides = [1, 1]} : vector<8x512xf32> to vector<8x128xf32>
    %596 = math.tanh %595 : vector<8x128xf32>
    %597 = vector.extract_strided_slice %578 {offsets = [0, 384], sizes = [8, 128], strides = [1, 1]} : vector<8x512xf32> to vector<8x128xf32>
    %cst_210 = arith.constant 0.000000e+00 : f32
    %598 = vector.broadcast %cst_210 : f32 to vector<8x128xf32>
    %599 = arith.subf %598, %597 : vector<8x128xf32>
    %600 = math.exp %599 : vector<8x128xf32>
    %cst_211 = arith.constant 1.000000e+00 : f32
    %601 = vector.broadcast %cst_211 : f32 to vector<8x128xf32>
    %602 = arith.addf %601, %600 : vector<8x128xf32>
    %cst_212 = arith.constant 1.000000e+00 : f32
    %603 = vector.broadcast %cst_212 : f32 to vector<8x128xf32>
    %604 = arith.divf %603, %602 : vector<8x128xf32>
    %605 = arith.mulf %594, %570 : vector<8x128xf32>
    %606 = arith.mulf %586, %596 : vector<8x128xf32>
    %607 = arith.addf %605, %606 : vector<8x128xf32>
    %608 = math.tanh %607 : vector<8x128xf32>
    %609 = arith.mulf %604, %608 : vector<8x128xf32>
    %c16_i32 = arith.constant 16 : i32
    %c0_213 = arith.constant 0 : index
    %c0_214 = arith.constant 0 : index
    %610 = vector.load %arg3[%c0_213, %c0_214] : memref<8x24xf32, #tpu.memory_space<vmem>>, vector<8x24xf32>
    %c0_215 = arith.constant 0 : index
    %c0_216 = arith.constant 0 : index
    %611 = vector.load %arg10[%c0_215, %c0_216] : memref<24x128xf32, #tpu.memory_space<vmem>>, vector<24x128xf32>
    %cst_217 = arith.constant dense<0.000000e+00> : vector<8x128xf32>
    %612 = tpu.matmul %610, %611, %cst_217 {dimension_numbers = #tpu.dot_dimension_numbers<[1], [0], [0], [1], [0, 0, 1, 1], [], []>} : vector<8x24xf32>, vector<24x128xf32>, vector<8x128xf32> -> vector<8x128xf32>
    %c0_218 = arith.constant 0 : index
    %c0_219 = arith.constant 0 : index
    %613 = vector.load %arg4[%c0_218, %c0_219] : memref<8x512xf32, #tpu.memory_space<vmem>>, vector<8x512xf32>
    %c0_220 = arith.constant 0 : index
    %c0_221 = arith.constant 0 : index
    %614 = vector.load %arg11[%c0_220, %c0_221] : memref<512x128xf32, #tpu.memory_space<vmem>>, vector<512x128xf32>
    %cst_222 = arith.constant dense<0.000000e+00> : vector<8x128xf32>
    %615 = tpu.matmul %613, %614, %cst_222 {dimension_numbers = #tpu.dot_dimension_numbers<[1], [0], [0], [1], [0, 0, 1, 1], [], []>} : vector<8x512xf32>, vector<512x128xf32>, vector<8x128xf32> -> vector<8x128xf32>
    %616 = arith.addf %612, %615 : vector<8x128xf32>
    %c0_223 = arith.constant 0 : index
    %c0_224 = arith.constant 0 : index
    %617 = vector.load %arg12[%c0_223, %c0_224] : memref<1x128xf32, #tpu.memory_space<vmem>>, vector<1x128xf32>
    %618 = vector.broadcast %617 : vector<1x128xf32> to vector<8x128xf32>
    %619 = arith.addf %616, %618 : vector<8x128xf32>
    %c0_225 = arith.constant 0 : index
    %c0_226 = arith.constant 0 : index
    %620 = vector.load %arg13[%c0_225, %c0_226] : memref<128x128xf32, #tpu.memory_space<vmem>>, vector<128x128xf32>
    %cst_227 = arith.constant dense<0.000000e+00> : vector<8x128xf32>
    %621 = tpu.matmul %609, %620, %cst_227 {dimension_numbers = #tpu.dot_dimension_numbers<[1], [0], [0], [1], [0, 0, 1, 1], [], []>} : vector<8x128xf32>, vector<128x128xf32>, vector<8x128xf32> -> vector<8x128xf32>
    %c0_228 = arith.constant 0 : index
    %c0_229 = arith.constant 0 : index
    %622 = vector.load %arg14[%c0_228, %c0_229] : memref<128x128xf32, #tpu.memory_space<vmem>>, vector<128x128xf32>
    %cst_230 = arith.constant dense<0.000000e+00> : vector<8x128xf32>
    %623 = tpu.matmul %619, %622, %cst_230 {dimension_numbers = #tpu.dot_dimension_numbers<[1], [0], [0], [1], [0, 0, 1, 1], [], []>} : vector<8x128xf32>, vector<128x128xf32>, vector<8x128xf32> -> vector<8x128xf32>
    %624 = arith.addf %621, %623 : vector<8x128xf32>
    %c0_231 = arith.constant 0 : index
    %c0_232 = arith.constant 0 : index
    %625 = vector.load %arg15[%c0_231, %c0_232] : memref<1x128xf32, #tpu.memory_space<vmem>>, vector<1x128xf32>
    %626 = vector.broadcast %625 : vector<1x128xf32> to vector<8x128xf32>
    %627 = arith.addf %624, %626 : vector<8x128xf32>
    %c0_233 = arith.constant 0 : index
    %c0_234 = arith.constant 0 : index
    %628 = vector.load %arg16[%c0_233, %c0_234] : memref<128x128xf32, #tpu.memory_space<vmem>>, vector<128x128xf32>
    %cst_235 = arith.constant dense<0.000000e+00> : vector<8x128xf32>
    %629 = tpu.matmul %627, %628, %cst_235 {dimension_numbers = #tpu.dot_dimension_numbers<[1], [0], [0], [1], [0, 0, 1, 1], [], []>} : vector<8x128xf32>, vector<128x128xf32>, vector<8x128xf32> -> vector<8x128xf32>
    %c0_236 = arith.constant 0 : index
    %c0_237 = arith.constant 0 : index
    %630 = vector.load %arg18[%c0_236, %c0_237] : memref<8x128xf32, #tpu.memory_space<vmem>>, vector<8x128xf32>
    tpu.vector_store %arg18[%c0_236, %c0_237], %629 {strides = array<i32>} : memref<8x128xf32, #tpu.memory_space<vmem>>, vector<8x128xf32>,
    %cst_238 = arith.constant 0.000000e+00 : f32
    %631 = vector.broadcast %cst_238 : f32 to vector<8x128xf32>
    %632 = arith.subf %631, %629 : vector<8x128xf32>
    %633 = math.exp %632 : vector<8x128xf32>
    %cst_239 = arith.constant 1.000000e+00 : f32
    %634 = vector.broadcast %cst_239 : f32 to vector<8x128xf32>
    %635 = arith.addf %634, %633 : vector<8x128xf32>
    %cst_240 = arith.constant 1.000000e+00 : f32
    %636 = vector.broadcast %cst_240 : f32 to vector<8x128xf32>
    %637 = arith.divf %636, %635 : vector<8x128xf32>
    %c0_241 = arith.constant 0 : index
    %c0_242 = arith.constant 0 : index
    %638 = vector.load %arg17[%c0_241, %c0_242] : memref<8x128xf32, #tpu.memory_space<vmem>>, vector<8x128xf32>
    tpu.vector_store %arg17[%c0_241, %c0_242], %637 {strides = array<i32>} : memref<8x128xf32, #tpu.memory_space<vmem>>, vector<8x128xf32>,
    return
  }
}

</mosaic_0001>

<llo_original>
// kernel: lstm_base_h_forward.1
$region0: #{lstm_base_h_forward.1}
  #allocation0 [shape = 'u32[]', space=smem, size = 0x4, offset = 0x4, fixed_abs, tag = 'smem constant byte address 0x4 - core index']
  #allocation1 [shape = 'u32[144,128]{1,0:T(1,128)}', space=vmem, size = 0x12000, scoped, tag = 'internal scratch']
  #allocation2 [shape = 'f32[128,512]{1,0:T(8,128)}', space=vmem, size = 0x40000, scoped, tag = 'scratch operand']
  %s0 = inlined_call_operand.vmem [shape: f32[128,40], index: 0, kind: input, shape index: {}]
  %s1 = inlined_call_operand.vmem [shape: f32[128,32], index: 1, kind: input, shape index: {}]
  %s2 = inlined_call_operand.vmem [shape: f32[128,48], index: 2, kind: input, shape index: {}]
  %s3 = inlined_call_operand.vmem [shape: f32[8,24], index: 3, kind: input, shape index: {}]
  %s4 = inlined_call_operand.vmem [shape: f32[8,512], index: 4, kind: input, shape index: {}]
  %s5 = inlined_call_operand.vmem [shape: f32[40,512], index: 5, kind: input, shape index: {}]
  %s6 = inlined_call_operand.hbm [shape: f32[32,512], index: 6, kind: input, shape index: {}]
  %s7 = inlined_call_operand.vmem [shape: f32[48,512], index: 7, kind: input, shape index: {}]
  %s8 = inlined_call_operand.vmem [shape: f32[1,512], index: 8, kind: input, shape index: {}]
  %s9 = inlined_call_operand.vmem [shape: f32[128,512], index: 9, kind: input, shape index: {}]
  %s10 = inlined_call_operand.vmem [shape: f32[24,128], index: 10, kind: input, shape index: {}]
  %s11 = inlined_call_operand.hbm [shape: f32[512,128], index: 11, kind: input, shape index: {}]
  %s12 = inlined_call_operand.vmem [shape: f32[1,128], index: 12, kind: input, shape index: {}]
  %s13 = inlined_call_operand.hbm [shape: f32[128,128], index: 13, kind: input, shape index: {}]
  %s14 = inlined_call_operand.hbm [shape: f32[128,128], index: 14, kind: input, shape index: {}]
  %s15 = inlined_call_operand.vmem [shape: f32[1,128], index: 15, kind: input, shape index: {}]
  %s16 = inlined_call_operand.hbm [shape: f32[128,128], index: 16, kind: input, shape index: {}]
  %s17 = inlined_call_operand.vmem [shape: f32[8,128], index: 17, kind: output, shape index: {0}]
  %s18 = inlined_call_operand.vmem [shape: f32[8,128], index: 18, kind: output, shape index: {1}]
  %19 = xla_tuple %s17, %s18
  %s20 = sld [smem:[#allocation0]]
  $region106: #{lstm_base_h_forward.1} parent=0
    _
  %s22 = ssub.s32 1, %s20
  %s23 = scalar_select 0, %s22, %s20
  $region1: #{lstm_base_h_forward.1} parent=0
    #allocation3 [shape = 'u8[65536]{0}', space=vmem, size = 0x10000, scoped, tag = 'input window, operand 6, single buffered']
    #allocation4 [shape = 's32[1]{0}', space=sflag, size = 0x4, scoped, tag = 'scoped memory for lstm_base_h_forward.1']
    #allocation5 [shape = 'u8[262144]{0}', space=vmem, size = 0x40000, scoped, tag = 'input window, operand 11, single buffered']
    #allocation6 [shape = 's32[1]{0}', space=sflag, size = 0x4, scoped, tag = 'scoped memory for lstm_base_h_forward.1']
    #allocation7 [shape = 'u8[65536]{0}', space=vmem, size = 0x10000, scoped, tag = 'input window, operand 13, single buffered']
    #allocation8 [shape = 'u8[65536]{0}', space=vmem, size = 0x10000, scoped, tag = 'input window, operand 14, single buffered']
    #allocation9 [shape = 's32[1]{0}', space=sflag, size = 0x4, scoped, tag = 'scoped memory for lstm_base_h_forward.1']
    #allocation10 [shape = 'u8[65536]{0}', space=vmem, size = 0x10000, scoped, tag = 'input window, operand 16, single buffered']
    %24 = vsyncpa [#allocation4], 0
    %25 = vsyncpa [#allocation6], 0
    %26 = vsyncpa [#allocation9], 0
    // Predicated region
    $region2: #{lstm_base_h_forward.1} parent=1 // pred_check
      _
    $region3: #{lstm_base_h_forward.1} parent=1 // pred_check_branch
      %28 = sbr.rel (0) target = $region5
    $region4: #{lstm_base_h_forward.1} parent=1 // pred_region
      _
    $region5: #{lstm_base_h_forward.1} parent=1 // pred_fallthru
      _
    // Predicated region
    $region6: #{lstm_base_h_forward.1} parent=1 // pred_check
      _
    $region7: #{lstm_base_h_forward.1} parent=1 // pred_check_branch
      %30 = sbr.rel (0) target = $region9
    $region8: #{lstm_base_h_forward.1} parent=1 // pred_region
      _
    $region9: #{lstm_base_h_forward.1} parent=1 // pred_fallthru
      _
    // Predicated region
    $region10: #{lstm_base_h_forward.1} parent=1 // pred_check
      _
    $region11: #{lstm_base_h_forward.1} parent=1 // pred_check_branch
      %32 = sbr.rel (0) target = $region13
    $region12: #{lstm_base_h_forward.1} parent=1 // pred_region
      _
    $region13: #{lstm_base_h_forward.1} parent=1 // pred_fallthru
      _
    // Predicated region
    $region14: #{lstm_base_h_forward.1} parent=1 // pred_check
      _
    $region15: #{lstm_base_h_forward.1} parent=1 // pred_check_branch
      %34 = sbr.rel (0) target = $region17
    $region16: #{lstm_base_h_forward.1} parent=1 // pred_region
      _
    $region17: #{lstm_base_h_forward.1} parent=1 // pred_fallthru
      _
    // Predicated region
    $region18: #{lstm_base_h_forward.1} parent=1 // pred_check
      _
    $region19: #{lstm_base_h_forward.1} parent=1 // pred_check_branch
      %36 = sbr.rel (0) target = $region21
    $region20: #{lstm_base_h_forward.1} parent=1 // pred_region
      _
    $region21: #{lstm_base_h_forward.1} parent=1 // pred_fallthru
      _
    // Predicated region
    $region22: #{lstm_base_h_forward.1} parent=1 // pred_check
      _
    $region23: #{lstm_base_h_forward.1} parent=1 // pred_check_branch
      %38 = sbr.rel (0) target = $region25
    $region24: #{lstm_base_h_forward.1} parent=1 // pred_region
      _
    $region25: #{lstm_base_h_forward.1} parent=1 // pred_fallthru
      _
    // Predicated region
    $region26: #{lstm_base_h_forward.1} parent=1 // pred_check
      _
    $region27: #{lstm_base_h_forward.1} parent=1 // pred_check_branch
      %40 = sbr.rel (0) target = $region29
    $region28: #{lstm_base_h_forward.1} parent=1 // pred_region
      %s42 = ssub.s32 2048, 2048
      %43 = vsyncadd [#allocation4], %s42
      %s44 = sshll.u32 [#allocation3], 4
      %s45 = int_to_ptr.vmem [resolvable:$true] %s44
      %50 = dma.hbm_to_vmem [thread:$0]  %s6, 2048, %s45, [#allocation4], 512, 512, 32
    $region29: #{lstm_base_h_forward.1} parent=1 // pred_fallthru
      _
    // Predicated region
    $region30: #{lstm_base_h_forward.1} parent=1 // pred_check
      _
    $region31: #{lstm_base_h_forward.1} parent=1 // pred_check_branch
      %52 = sbr.rel (0) target = $region33
    $region32: #{lstm_base_h_forward.1} parent=1 // pred_region
      _
    $region33: #{lstm_base_h_forward.1} parent=1 // pred_fallthru
      _
    // Predicated region
    $region34: #{lstm_base_h_forward.1} parent=1 // pred_check
      _
    $region35: #{lstm_base_h_forward.1} parent=1 // pred_check_branch
      %54 = sbr.rel (0) target = $region37
    $region36: #{lstm_base_h_forward.1} parent=1 // pred_region
      _
    $region37: #{lstm_base_h_forward.1} parent=1 // pred_fallthru
      _
    // Predicated region
    $region38: #{lstm_base_h_forward.1} parent=1 // pred_check
      _
    $region39: #{lstm_base_h_forward.1} parent=1 // pred_check_branch
      %56 = sbr.rel (0) target = $region41
    $region40: #{lstm_base_h_forward.1} parent=1 // pred_region
      _
    $region41: #{lstm_base_h_forward.1} parent=1 // pred_fallthru
      _
    // Predicated region
    $region42: #{lstm_base_h_forward.1} parent=1 // pred_check
      _
    $region43: #{lstm_base_h_forward.1} parent=1 // pred_check_branch
      %58 = sbr.rel (0) target = $region45
    $region44: #{lstm_base_h_forward.1} parent=1 // pred_region
      _
    $region45: #{lstm_base_h_forward.1} parent=1 // pred_fallthru
      _
    // Predicated region
    $region46: #{lstm_base_h_forward.1} parent=1 // pred_check
      _
    $region47: #{lstm_base_h_forward.1} parent=1 // pred_check_branch
      %60 = sbr.rel (0) target = $region49
    $region48: #{lstm_base_h_forward.1} parent=1 // pred_region
      %s62 = ssub.s32 8192, 8192
      %63 = vsyncadd [#allocation6], %s62
      %s64 = sshll.u32 [#allocation5], 4
      %s65 = int_to_ptr.vmem [resolvable:$true] %s64
      %70 = dma.hbm_to_vmem [thread:$0]  %s11, 8192, %s65, [#allocation6], 128, 128, 8
    $region49: #{lstm_base_h_forward.1} parent=1 // pred_fallthru
      _
    // Predicated region
    $region50: #{lstm_base_h_forward.1} parent=1 // pred_check
      _
    $region51: #{lstm_base_h_forward.1} parent=1 // pred_check_branch
      %72 = sbr.rel (0) target = $region53
    $region52: #{lstm_base_h_forward.1} parent=1 // pred_region
      _
    $region53: #{lstm_base_h_forward.1} parent=1 // pred_fallthru
      _
    // Predicated region
    $region54: #{lstm_base_h_forward.1} parent=1 // pred_check
      _
    $region55: #{lstm_base_h_forward.1} parent=1 // pred_check_branch
      %74 = sbr.rel (0) target = $region57
    $region56: #{lstm_base_h_forward.1} parent=1 // pred_region
      %s76 = ssub.s32 2048, 2048
      %77 = vsyncadd [#allocation6], %s76
      %s78 = sshll.u32 [#allocation7], 4
      %s79 = int_to_ptr.vmem [resolvable:$true] %s78
      %84 = dma.hbm_to_vmem [thread:$0]  %s13, 2048, %s79, [#allocation6], 128, 128, 8
    $region57: #{lstm_base_h_forward.1} parent=1 // pred_fallthru
      _
    // Predicated region
    $region58: #{lstm_base_h_forward.1} parent=1 // pred_check
      _
    $region59: #{lstm_base_h_forward.1} parent=1 // pred_check_branch
      %86 = sbr.rel (0) target = $region61
    $region60: #{lstm_base_h_forward.1} parent=1 // pred_region
      %s88 = ssub.s32 2048, 2048
      %89 = vsyncadd [#allocation9], %s88
      %s90 = sshll.u32 [#allocation8], 4
      %s91 = int_to_ptr.vmem [resolvable:$true] %s90
      %96 = dma.hbm_to_vmem [thread:$0]  %s14, 2048, %s91, [#allocation9], 128, 128, 8
    $region61: #{lstm_base_h_forward.1} parent=1 // pred_fallthru
      _
    // Predicated region
    $region62: #{lstm_base_h_forward.1} parent=1 // pred_check
      _
    $region63: #{lstm_base_h_forward.1} parent=1 // pred_check_branch
      %98 = sbr.rel (0) target = $region65
    $region64: #{lstm_base_h_forward.1} parent=1 // pred_region
      _
    $region65: #{lstm_base_h_forward.1} parent=1 // pred_fallthru
      _
    // Predicated region
    $region66: #{lstm_base_h_forward.1} parent=1 // pred_check
      _
    $region67: #{lstm_base_h_forward.1} parent=1 // pred_check_branch
      %100 = sbr.rel (0) target = $region69
    $region68: #{lstm_base_h_forward.1} parent=1 // pred_region
      %s102 = ssub.s32 2048, 2048
      %103 = vsyncadd [#allocation9], %s102
      %s104 = sshll.u32 [#allocation10], 4
      %s105 = int_to_ptr.vmem [resolvable:$true] %s104
      %110 = dma.hbm_to_vmem [thread:$0]  %s16, 2048, %s105, [#allocation9], 128, 128, 8
    $region69: #{lstm_base_h_forward.1} parent=1 // pred_fallthru
      _
    // Predicated region
    $region70: #{lstm_base_h_forward.1} parent=1 // pred_check
      _
    $region71: #{lstm_base_h_forward.1} parent=1 // pred_check_branch
      %112 = sbr.rel (0) target = $region73
    $region72: #{lstm_base_h_forward.1} parent=1 // pred_region
      %113 = dma.done [#allocation4], 2048
    $region73: #{lstm_base_h_forward.1} parent=1 // pred_fallthru
      _
    // Predicated region
    $region74: #{lstm_base_h_forward.1} parent=1 // pred_check
      _
    $region75: #{lstm_base_h_forward.1} parent=1 // pred_check_branch
      %115 = sbr.rel (0) target = $region77
    $region76: #{lstm_base_h_forward.1} parent=1 // pred_region
      %116 = dma.done [#allocation6], 8192
    $region77: #{lstm_base_h_forward.1} parent=1 // pred_fallthru
      _
    // Predicated region
    $region78: #{lstm_base_h_forward.1} parent=1 // pred_check
      _
    $region79: #{lstm_base_h_forward.1} parent=1 // pred_check_branch
      %118 = sbr.rel (0) target = $region81
    $region80: #{lstm_base_h_forward.1} parent=1 // pred_region
      %119 = dma.done [#allocation6], 2048
    $region81: #{lstm_base_h_forward.1} parent=1 // pred_fallthru
      _
    // Predicated region
    $region82: #{lstm_base_h_forward.1} parent=1 // pred_check
      _
    $region83: #{lstm_base_h_forward.1} parent=1 // pred_check_branch
      %121 = sbr.rel (0) target = $region85
    $region84: #{lstm_base_h_forward.1} parent=1 // pred_region
      %122 = dma.done [#allocation9], 2048
    $region85: #{lstm_base_h_forward.1} parent=1 // pred_fallthru
      _
    // Predicated region
    $region86: #{lstm_base_h_forward.1} parent=1 // pred_check
      _
    $region87: #{lstm_base_h_forward.1} parent=1 // pred_check_branch
      %124 = sbr.rel (0) target = $region89
    $region88: #{lstm_base_h_forward.1} parent=1 // pred_region
      %125 = dma.done [#allocation9], 2048
    $region89: #{lstm_base_h_forward.1} parent=1 // pred_fallthru
      _
    %v126 = vld [vmem:[%s0] sm:$0xff]
    %v127 = vld [vmem:[%s0 + $0x8] sm:$0xff]
    %v128 = vld [vmem:[%s0 + $0x10] sm:$0xff]
    %v129 = vld [vmem:[%s0 + $0x18] sm:$0xff]
    %v130 = vld [vmem:[%s0 + $0x20] sm:$0xff]
    %v131 = vld [vmem:[%s0 + $0x28] sm:$0xff]
    %v132 = vld [vmem:[%s0 + $0x30] sm:$0xff]
    %v133 = vld [vmem:[%s0 + $0x38] sm:$0xff]
    %v134 = vld [vmem:[%s0 + $0x40] sm:$0xff]
    %v135 = vld [vmem:[%s0 + $0x48] sm:$0xff]
    %v136 = vld [vmem:[%s0 + $0x50] sm:$0xff]
    %v137 = vld [vmem:[%s0 + $0x58] sm:$0xff]
    %v138 = vld [vmem:[%s0 + $0x60] sm:$0xff]
    %v139 = vld [vmem:[%s0 + $0x68] sm:$0xff]
    %v140 = vld [vmem:[%s0 + $0x70] sm:$0xff]
    %v141 = vld [vmem:[%s0 + $0x78] sm:$0xff]
    %v142 = vld [vmem:[%s5] sm:$0xff]
    %v143 = vld [vmem:[%s5 + $0x8] sm:$0xff]
    %v144 = vld [vmem:[%s5 + $0x10] sm:$0xff]
    %v145 = vld [vmem:[%s5 + $0x18] sm:$0xff]
    %v146 = vld [vmem:[%s5 + $0x20] sm:$0xff]
    %v147 = vld [vmem:[%s5 + $0x28] sm:$0xff]
    %v148 = vld [vmem:[%s5 + $0x30] sm:$0xff]
    %v149 = vld [vmem:[%s5 + $0x38] sm:$0xff]
    %v150 = vld [vmem:[%s5 + $0x40] sm:$0xff]
    %v151 = vld [vmem:[%s5 + $0x48] sm:$0xff]
    %v152 = vld [vmem:[%s5 + $0x50] sm:$0xff]
    %v153 = vld [vmem:[%s5 + $0x58] sm:$0xff]
    %v154 = vld [vmem:[%s5 + $0x60] sm:$0xff]
    %v155 = vld [vmem:[%s5 + $0x68] sm:$0xff]
    %v156 = vld [vmem:[%s5 + $0x70] sm:$0xff]
    %v157 = vld [vmem:[%s5 + $0x78] sm:$0xff]
    %v158 = vld [vmem:[%s5 + $0x80] sm:$0xff]
    %v159 = vld [vmem:[%s5 + $0x88] sm:$0xff]
    %v160 = vld [vmem:[%s5 + $0x90] sm:$0xff]
    %v161 = vld [vmem:[%s5 + $0x98] sm:$0xff]
    %v162 = vld [vmem:[%s1] sm:$0xff]
    %v163 = vld [vmem:[%s1 + $0x8] sm:$0xff]
    %v164 = vld [vmem:[%s1 + $0x10] sm:$0xff]
    %v165 = vld [vmem:[%s1 + $0x18] sm:$0xff]
    %v166 = vld [vmem:[%s1 + $0x20] sm:$0xff]
    %v167 = vld [vmem:[%s1 + $0x28] sm:$0xff]
    %v168 = vld [vmem:[%s1 + $0x30] sm:$0xff]
    %v169 = vld [vmem:[%s1 + $0x38] sm:$0xff]
    %v170 = vld [vmem:[%s1 + $0x40] sm:$0xff]
    %v171 = vld [vmem:[%s1 + $0x48] sm:$0xff]
    %v172 = vld [vmem:[%s1 + $0x50] sm:$0xff]
    %v173 = vld [vmem:[%s1 + $0x58] sm:$0xff]
    %v174 = vld [vmem:[%s1 + $0x60] sm:$0xff]
    %v175 = vld [vmem:[%s1 + $0x68] sm:$0xff]
    %v176 = vld [vmem:[%s1 + $0x70] sm:$0xff]
    %v177 = vld [vmem:[%s1 + $0x78] sm:$0xff]
    %v178 = vld [vmem:[#allocation3] sm:$0xff]
    %v179 = vld [vmem:[#allocation3 + $0x8] sm:$0xff]
    %v180 = vld [vmem:[#allocation3 + $0x10] sm:$0xff]
    %v181 = vld [vmem:[#allocation3 + $0x18] sm:$0xff]
    %v182 = vld [vmem:[#allocation3 + $0x20] sm:$0xff]
    %v183 = vld [vmem:[#allocation3 + $0x28] sm:$0xff]
    %v184 = vld [vmem:[#allocation3 + $0x30] sm:$0xff]
    %v185 = vld [vmem:[#allocation3 + $0x38] sm:$0xff]
    %v186 = vld [vmem:[#allocation3 + $0x40] sm:$0xff]
    %v187 = vld [vmem:[#allocation3 + $0x48] sm:$0xff]
    %v188 = vld [vmem:[#allocation3 + $0x50] sm:$0xff]
    %v189 = vld [vmem:[#allocation3 + $0x58] sm:$0xff]
    %v190 = vld [vmem:[#allocation3 + $0x60] sm:$0xff]
    %v191 = vld [vmem:[#allocation3 + $0x68] sm:$0xff]
    %v192 = vld [vmem:[#allocation3 + $0x70] sm:$0xff]
    %v193 = vld [vmem:[#allocation3 + $0x78] sm:$0xff]
    %vm194 = vcmask 261120
    %v196 = vsel %vm194, %v162, 0
    %v199 = vsel %vm194, %v163, 0
    %v202 = vsel %vm194, %v164, 0
    %v205 = vsel %vm194, %v165, 0
    %v208 = vsel %vm194, %v166, 0
    %v211 = vsel %vm194, %v167, 0
    %v214 = vsel %vm194, %v168, 0
    %v217 = vsel %vm194, %v169, 0
    %v220 = vsel %vm194, %v170, 0
    %v223 = vsel %vm194, %v171, 0
    %v226 = vsel %vm194, %v172, 0
    %v229 = vsel %vm194, %v173, 0
    %v232 = vsel %vm194, %v174, 0
    %v235 = vsel %vm194, %v175, 0
    %v238 = vsel %vm194, %v176, 0
    %v241 = vsel %vm194, %v177, 0
    %243 = vmatprep.subr.mxu0 %v179
    %244 = vmatpush1.msra.mxu0 %v178
    %245 = vmatprep.subr.mxu0 %v183
    %246 = vmatpush1.msra.mxu0 %v182
    %247 = vmatprep.subr.mxu0 %v187
    %248 = vmatpush1.msra.mxu0 %v186
    %249 = vmatprep.subr.mxu0 %v191
    %250 = vmatpush1.msra.mxu0 %v190
    %251 = vmatprep.subr.mxu0 0.0
    %252 = vmatpush1.msra.mxu0 0.0
    %253 = vmatprep.subr.mxu0 0.0
    %254 = vmatpush1.msra.mxu0 0.0
    %255 = vmatprep.subr.mxu0 0.0
    %256 = vmatpush1.msra.mxu0 0.0
    %257 = vmatprep.subr.mxu0 0.0
    %258 = vmatpush1.msra.mxu0 0.0
    %259 = vmatprep.subr.mxu0 0.0
    %260 = vmatpush1.msra.mxu0 0.0
    %261 = vmatprep.subr.mxu0 0.0
    %262 = vmatpush1.msra.mxu0 0.0
    %263 = vmatprep.subr.mxu0 0.0
    %264 = vmatpush1.msra.mxu0 0.0
    %265 = vmatprep.subr.mxu0 0.0
    %266 = vmatpush1.msra.mxu0 0.0
    %267 = vmatprep.subr.mxu0 0.0
    %268 = vmatpush1.msra.mxu0 0.0
    %269 = vmatprep.subr.mxu0 0.0
    %270 = vmatpush1.msra.mxu0 0.0
    %271 = vmatprep.subr.mxu0 0.0
    %272 = vmatpush1.msra.mxu0 0.0
    %273 = vmatprep.subr.mxu0 0.0
    %274 = vmatpush1.msra.mxu0 0.0
    %275 = vmatprep.subr.mxu0 0.0
    %276 = vmatpush1.msra.mxu0 0.0
    %277 = vmatprep.subr.mxu0 0.0
    %278 = vmatpush1.msra.mxu0 0.0
    %279 = vmatprep.subr.mxu0 0.0
    %280 = vmatpush1.msra.mxu0 0.0
    %281 = vmatprep.subr.mxu0 0.0
    %282 = vmatpush1.msra.mxu0 0.0
    %283 = vmatprep.subr.mxu0 0.0
    %284 = vmatpush1.msra.mxu0 0.0
    %285 = vmatprep.subr.mxu0 0.0
    %286 = vmatpush1.msra.mxu0 0.0
    %287 = vmatprep.subr.mxu0 0.0
    %288 = vmatpush1.msra.mxu0 0.0
    %289 = vmatprep.subr.mxu0 0.0
    %290 = vmatpush1.msra.mxu0 0.0
    %291 = vmatprep.subr.mxu0 0.0
    %292 = vmatpush1.msra.mxu0 0.0
    %293 = vmatprep.subr.mxu0 0.0
    %294 = vmatpush1.msra.mxu0 0.0
    %295 = vmatprep.subr.mxu0 0.0
    %296 = vmatpush1.msra.mxu0 0.0
    %297 = vmatprep.subr.mxu0 0.0
    %298 = vmatpush1.msra.mxu0 0.0
    %299 = vmatprep.subr.mxu0 0.0
    %300 = vmatpush1.msra.mxu0 0.0
    %301 = vmatprep.subr.mxu0 0.0
    %302 = vmatpush1.msra.mxu0 0.0
    %303 = vmatprep.subr.mxu0 0.0
    %304 = vmatpush1.msra.mxu0 0.0
    %305 = vmatprep.subr.mxu0 0.0
    %306 = vmatpush1.msra.mxu0 0.0
    %307 = vmatprep.mubr.f32.mxu0 0.0
    %308 = vmatmul.mubr.f32.gmra.mrb[0].mxu0 %v196
    %v309 = vpop.f32.mrb[0].mxu0
    %v310 = vadd.f32 0.0, %v309
    %v311 = vpop.f32.mrb[0].mxu0
    %v312 = vadd.f32 0.0, %v311
    %313 = vmatprep.mubr.f32.mxu0 0.0
    %314 = vmatmul.mubr.f32.gmra.mrb[0].mxu0 %v199
    %v315 = vpop.f32.mrb[0].mxu0
    %v316 = vadd.f32 0.0, %v315
    %v317 = vpop.f32.mrb[0].mxu0
    %v318 = vadd.f32 0.0, %v317
    %319 = vmatprep.mubr.f32.mxu0 0.0
    %320 = vmatmul.mubr.f32.gmra.mrb[0].mxu0 %v202
    %v321 = vpop.f32.mrb[0].mxu0
    %v322 = vadd.f32 0.0, %v321
    %v323 = vpop.f32.mrb[0].mxu0
    %v324 = vadd.f32 0.0, %v323
    %325 = vmatprep.mubr.f32.mxu0 0.0
    %326 = vmatmul.mubr.f32.gmra.mrb[0].mxu0 %v205
    %v327 = vpop.f32.mrb[0].mxu0
    %v328 = vadd.f32 0.0, %v327
    %v329 = vpop.f32.mrb[0].mxu0
    %v330 = vadd.f32 0.0, %v329
    %331 = vmatprep.mubr.f32.mxu0 0.0
    %332 = vmatmul.mubr.f32.gmra.mrb[0].mxu0 %v208
    %v333 = vpop.f32.mrb[0].mxu0
    %v334 = vadd.f32 0.0, %v333
    %v335 = vpop.f32.mrb[0].mxu0
    %v336 = vadd.f32 0.0, %v335
    %337 = vmatprep.mubr.f32.mxu0 0.0
    %338 = vmatmul.mubr.f32.gmra.mrb[0].mxu0 %v211
    %v339 = vpop.f32.mrb[0].mxu0
    %v340 = vadd.f32 0.0, %v339
    %v341 = vpop.f32.mrb[0].mxu0
    %v342 = vadd.f32 0.0, %v341
    %343 = vmatprep.mubr.f32.mxu0 0.0
    %344 = vmatmul.mubr.f32.gmra.mrb[0].mxu0 %v214
    %v345 = vpop.f32.mrb[0].mxu0
    %v346 = vadd.f32 0.0, %v345
    %v347 = vpop.f32.mrb[0].mxu0
    %v348 = vadd.f32 0.0, %v347
    %349 = vmatprep.mubr.f32.mxu0 0.0
    %350 = vmatmul.mubr.f32.gmra.mrb[0].mxu0 %v217
    %v351 = vpop.f32.mrb[0].mxu0
    %v352 = vadd.f32 0.0, %v351
    %v353 = vpop.f32.mrb[0].mxu0
    %v354 = vadd.f32 0.0, %v353
    %355 = vmatprep.mubr.f32.mxu0 0.0
    %356 = vmatmul.mubr.f32.gmra.mrb[0].mxu0 %v220
    %v357 = vpop.f32.mrb[0].mxu0
    %v358 = vadd.f32 0.0, %v357
    %v359 = vpop.f32.mrb[0].mxu0
    %v360 = vadd.f32 0.0, %v359
    %361 = vmatprep.mubr.f32.mxu0 0.0
    %362 = vmatmul.mubr.f32.gmra.mrb[0].mxu0 %v223
    %v363 = vpop.f32.mrb[0].mxu0
    %v364 = vadd.f32 0.0, %v363
    %v365 = vpop.f32.mrb[0].mxu0
    %v366 = vadd.f32 0.0, %v365
    %367 = vmatprep.mubr.f32.mxu0 0.0
    %368 = vmatmul.mubr.f32.gmra.mrb[0].mxu0 %v226
    %v369 = vpop.f32.mrb[0].mxu0
    %v370 = vadd.f32 0.0, %v369
    %v371 = vpop.f32.mrb[0].mxu0
    %v372 = vadd.f32 0.0, %v371
    %373 = vmatprep.mubr.f32.mxu0 0.0
    %374 = vmatmul.mubr.f32.gmra.mrb[0].mxu0 %v229
    %v375 = vpop.f32.mrb[0].mxu0
    %v376 = vadd.f32 0.0, %v375
    %v377 = vpop.f32.mrb[0].mxu0
    %v378 = vadd.f32 0.0, %v377
    %379 = vmatprep.mubr.f32.mxu0 0.0
    %380 = vmatmul.mubr.f32.gmra.mrb[0].mxu0 %v232
    %v381 = vpop.f32.mrb[0].mxu0
    %v382 = vadd.f32 0.0, %v381
    %v383 = vpop.f32.mrb[0].mxu0
    %v384 = vadd.f32 0.0, %v383
    %385 = vmatprep.mubr.f32.mxu0 0.0
    %386 = vmatmul.mubr.f32.gmra.mrb[0].mxu0 %v235
    %v387 = vpop.f32.mrb[0].mxu0
    %v388 = vadd.f32 0.0, %v387
    %v389 = vpop.f32.mrb[0].mxu0
    %v390 = vadd.f32 0.0, %v389
    %391 = vmatprep.mubr.f32.mxu0 0.0
    %392 = vmatmul.mubr.f32.gmra.mrb[0].mxu0 %v238
    %v393 = vpop.f32.mrb[0].mxu0
    %v394 = vadd.f32 0.0, %v393
    %v395 = vpop.f32.mrb[0].mxu0
    %v396 = vadd.f32 0.0, %v395
    %397 = vmatprep.mubr.f32.mxu0 0.0
    %398 = vmatmul.mubr.f32.gmra.mrb[0].mxu0 %v241
    %v399 = vpop.f32.mrb[0].mxu0
    %v400 = vadd.f32 0.0, %v399
    %v401 = vpop.f32.mrb[0].mxu0
    %v402 = vadd.f32 0.0, %v401
    %403 = vdwg.mxu0
    %404 = vmatprep.subr.mxu0 %v181
    %405 = vmatpush1.msra.mxu0 %v180
    %406 = vmatprep.subr.mxu0 %v185
    %407 = vmatpush1.msra.mxu0 %v184
    %408 = vmatprep.subr.mxu0 %v189
    %409 = vmatpush1.msra.mxu0 %v188
    %410 = vmatprep.subr.mxu0 %v193
    %411 = vmatpush1.msra.mxu0 %v192
    %412 = vmatprep.subr.mxu0 0.0
    %413 = vmatpush1.msra.mxu0 0.0
    %414 = vmatprep.subr.mxu0 0.0
    %415 = vmatpush1.msra.mxu0 0.0
    %416 = vmatprep.subr.mxu0 0.0
    %417 = vmatpush1.msra.mxu0 0.0
    %418 = vmatprep.subr.mxu0 0.0
    %419 = vmatpush1.msra.mxu0 0.0
    %420 = vmatprep.subr.mxu0 0.0
    %421 = vmatpush1.msra.mxu0 0.0
    %422 = vmatprep.subr.mxu0 0.0
    %423 = vmatpush1.msra.mxu0 0.0
    %424 = vmatprep.subr.mxu0 0.0
    %425 = vmatpush1.msra.mxu0 0.0
    %426 = vmatprep.subr.mxu0 0.0
    %427 = vmatpush1.msra.mxu0 0.0
    %428 = vmatprep.subr.mxu0 0.0
    %429 = vmatpush1.msra.mxu0 0.0
    %430 = vmatprep.subr.mxu0 0.0
    %431 = vmatpush1.msra.mxu0 0.0
    %432 = vmatprep.subr.mxu0 0.0
    %433 = vmatpush1.msra.mxu0 0.0
    %434 = vmatprep.subr.mxu0 0.0
    %435 = vmatpush1.msra.mxu0 0.0
    %436 = vmatprep.subr.mxu0 0.0
    %437 = vmatpush1.msra.mxu0 0.0
    %438 = vmatprep.subr.mxu0 0.0
    %439 = vmatpush1.msra.mxu0 0.0
    %440 = vmatprep.subr.mxu0 0.0
    %441 = vmatpush1.msra.mxu0 0.0
    %442 = vmatprep.subr.mxu0 0.0
    %443 = vmatpush1.msra.mxu0 0.0
    %444 = vmatprep.subr.mxu0 0.0
    %445 = vmatpush1.msra.mxu0 0.0
    %446 = vmatprep.subr.mxu0 0.0
    %447 = vmatpush1.msra.mxu0 0.0
    %448 = vmatprep.subr.mxu0 0.0
    %449 = vmatpush1.msra.mxu0 0.0
    %450 = vmatprep.subr.mxu0 0.0
    %451 = vmatpush1.msra.mxu0 0.0
    %452 = vmatprep.subr.mxu0 0.0
    %453 = vmatpush1.msra.mxu0 0.0
    %454 = vmatprep.subr.mxu0 0.0
    %455 = vmatpush1.msra.mxu0 0.0
    %456 = vmatprep.subr.mxu0 0.0
    %457 = vmatpush1.msra.mxu0 0.0
    %458 = vmatprep.subr.mxu0 0.0
    %459 = vmatpush1.msra.mxu0 0.0
    %460 = vmatprep.subr.mxu0 0.0
    %461 = vmatpush1.msra.mxu0 0.0
    %462 = vmatprep.subr.mxu0 0.0
    %463 = vmatpush1.msra.mxu0 0.0
    %464 = vmatprep.subr.mxu0 0.0
    %465 = vmatpush1.msra.mxu0 0.0
    %466 = vmatprep.subr.mxu0 0.0
    %467 = vmatpush1.msra.mxu0 0.0
    %468 = vmatprep.mubr.f32.mxu0 0.0
    %469 = vmatmul.mubr.f32.gmra.mrb[0].mxu0 %v196
    %v470 = vpop.f32.mrb[0].mxu0
    %v471 = vadd.f32 0.0, %v470
    %v472 = vpop.f32.mrb[0].mxu0
    %v473 = vadd.f32 0.0, %v472
    %474 = vmatprep.mubr.f32.mxu0 0.0
    %475 = vmatmul.mubr.f32.gmra.mrb[0].mxu0 %v199
    %v476 = vpop.f32.mrb[0].mxu0
    %v477 = vadd.f32 0.0, %v476
    %v478 = vpop.f32.mrb[0].mxu0
    %v479 = vadd.f32 0.0, %v478
    %480 = vmatprep.mubr.f32.mxu0 0.0
    %481 = vmatmul.mubr.f32.gmra.mrb[0].mxu0 %v202
    %v482 = vpop.f32.mrb[0].mxu0
    %v483 = vadd.f32 0.0, %v482
    %v484 = vpop.f32.mrb[0].mxu0
    %v485 = vadd.f32 0.0, %v484
    %486 = vmatprep.mubr.f32.mxu0 0.0
    %487 = vmatmul.mubr.f32.gmra.mrb[0].mxu0 %v205
    %v488 = vpop.f32.mrb[0].mxu0
    %v489 = vadd.f32 0.0, %v488
    %v490 = vpop.f32.mrb[0].mxu0
    %v491 = vadd.f32 0.0, %v490
    %492 = vmatprep.mubr.f32.mxu0 0.0
    %493 = vmatmul.mubr.f32.gmra.mrb[0].mxu0 %v208
    %v494 = vpop.f32.mrb[0].mxu0
    %v495 = vadd.f32 0.0, %v494
    %v496 = vpop.f32.mrb[0].mxu0
    %v497 = vadd.f32 0.0, %v496
    %498 = vmatprep.mubr.f32.mxu0 0.0
    %499 = vmatmul.mubr.f32.gmra.mrb[0].mxu0 %v211
    %v500 = vpop.f32.mrb[0].mxu0
    %v501 = vadd.f32 0.0, %v500
    %v502 = vpop.f32.mrb[0].mxu0
    %v503 = vadd.f32 0.0, %v502
    %504 = vmatprep.mubr.f32.mxu0 0.0
    %505 = vmatmul.mubr.f32.gmra.mrb[0].mxu0 %v214
    %v506 = vpop.f32.mrb[0].mxu0
    %v507 = vadd.f32 0.0, %v506
    %v508 = vpop.f32.mrb[0].mxu0
    %v509 = vadd.f32 0.0, %v508
    %510 = vmatprep.mubr.f32.mxu0 0.0
    %511 = vmatmul.mubr.f32.gmra.mrb[0].mxu0 %v217
    %v512 = vpop.f32.mrb[0].mxu0
    %v513 = vadd.f32 0.0, %v512
    %v514 = vpop.f32.mrb[0].mxu0
    %v515 = vadd.f32 0.0, %v514
    %516 = vmatprep.mubr.f32.mxu0 0.0
    %517 = vmatmul.mubr.f32.gmra.mrb[0].mxu0 %v220
    %v518 = vpop.f32.mrb[0].mxu0
    %v519 = vadd.f32 0.0, %v518
    %v520 = vpop.f32.mrb[0].mxu0
    %v521 = vadd.f32 0.0, %v520
    %522 = vmatprep.mubr.f32.mxu0 0.0
    %523 = vmatmul.mubr.f32.gmra.mrb[0].mxu0 %v223
    %v524 = vpop.f32.mrb[0].mxu0
    %v525 = vadd.f32 0.0, %v524
    %v526 = vpop.f32.mrb[0].mxu0
    %v527 = vadd.f32 0.0, %v526
    %528 = vmatprep.mubr.f32.mxu0 0.0
    %529 = vmatmul.mubr.f32.gmra.mrb[0].mxu0 %v226
    %v530 = vpop.f32.mrb[0].mxu0
    %v531 = vadd.f32 0.0, %v530
    %v532 = vpop.f32.mrb[0].mxu0
    %v533 = vadd.f32 0.0, %v532
    %534 = vmatprep.mubr.f32.mxu0 0.0
    %535 = vmatmul.mubr.f32.gmra.mrb[0].mxu0 %v229
    %v536 = vpop.f32.mrb[0].mxu0
    %v537 = vadd.f32 0.0, %v536
    %v538 = vpop.f32.mrb[0].mxu0
    %v539 = vadd.f32 0.0, %v538
    %540 = vmatprep.mubr.f32.mxu0 0.0
    %541 = vmatmul.mubr.f32.gmra.mrb[0].mxu0 %v232
    %v542 = vpop.f32.mrb[0].mxu0
    %v543 = vadd.f32 0.0, %v542
    %v544 = vpop.f32.mrb[0].mxu0
    %v545 = vadd.f32 0.0, %v544
    %546 = vmatprep.mubr.f32.mxu0 0.0
    %547 = vmatmul.mubr.f32.gmra.mrb[0].mxu0 %v235
    %v548 = vpop.f32.mrb[0].mxu0
    %v549 = vadd.f32 0.0, %v548
    %v550 = vpop.f32.mrb[0].mxu0
    %v551 = vadd.f32 0.0, %v550
    %552 = vmatprep.mubr.f32.mxu0 0.0
    %553 = vmatmul.mubr.f32.gmra.mrb[0].mxu0 %v238
    %v554 = vpop.f32.mrb[0].mxu0
    %v555 = vadd.f32 0.0, %v554
    %v556 = vpop.f32.mrb[0].mxu0
    %v557 = vadd.f32 0.0, %v556
    %558 = vmatprep.mubr.f32.mxu0 0.0
    %559 = vmatmul.mubr.f32.gmra.mrb[0].mxu0 %v241
    %v560 = vpop.f32.mrb[0].mxu0
    %v561 = vadd.f32 0.0, %v560
    %v562 = vpop.f32.mrb[0].mxu0
    %v563 = vadd.f32 0.0, %v562
    %564 = vdwg.mxu0
    %vm565 = vcmask 326656
    %v567 = vsel %vm565, %v126, 0
    %v570 = vsel %vm565, %v127, 0
    %v573 = vsel %vm565, %v128, 0
    %v576 = vsel %vm565, %v129, 0
    %v579 = vsel %vm565, %v130, 0
    %v582 = vsel %vm565, %v131, 0
    %v585 = vsel %vm565, %v132, 0
    %v588 = vsel %vm565, %v133, 0
    %v591 = vsel %vm565, %v134, 0
    %v594 = vsel %vm565, %v135, 0
    %v597 = vsel %vm565, %v136, 0
    %v600 = vsel %vm565, %v137, 0
    %v603 = vsel %vm565, %v138, 0
    %v606 = vsel %vm565, %v139, 0
    %v609 = vsel %vm565, %v140, 0
    %v612 = vsel %vm565, %v141, 0
    %614 = vmatprep.subr.mxu0 %v143
    %615 = vmatpush1.msra.mxu0 %v142
    %616 = vmatprep.subr.mxu0 %v147
    %617 = vmatpush1.msra.mxu0 %v146
    %618 = vmatprep.subr.mxu0 %v151
    %619 = vmatpush1.msra.mxu0 %v150
    %620 = vmatprep.subr.mxu0 %v155
    %621 = vmatpush1.msra.mxu0 %v154
    %622 = vmatprep.subr.mxu0 %v159
    %623 = vmatpush1.msra.mxu0 %v158
    %624 = vmatprep.subr.mxu0 0.0
    %625 = vmatpush1.msra.mxu0 0.0
    %626 = vmatprep.subr.mxu0 0.0
    %627 = vmatpush1.msra.mxu0 0.0
    %628 = vmatprep.subr.mxu0 0.0
    %629 = vmatpush1.msra.mxu0 0.0
    %630 = vmatprep.subr.mxu0 0.0
    %631 = vmatpush1.msra.mxu0 0.0
    %632 = vmatprep.subr.mxu0 0.0
    %633 = vmatpush1.msra.mxu0 0.0
    %634 = vmatprep.subr.mxu0 0.0
    %635 = vmatpush1.msra.mxu0 0.0
    %636 = vmatprep.subr.mxu0 0.0
    %637 = vmatpush1.msra.mxu0 0.0
    %638 = vmatprep.subr.mxu0 0.0
    %639 = vmatpush1.msra.mxu0 0.0
    %640 = vmatprep.subr.mxu0 0.0
    %641 = vmatpush1.msra.mxu0 0.0
    %642 = vmatprep.subr.mxu0 0.0
    %643 = vmatpush1.msra.mxu0 0.0
    %644 = vmatprep.subr.mxu0 0.0
    %645 = vmatpush1.msra.mxu0 0.0
    %646 = vmatprep.subr.mxu0 0.0
    %647 = vmatpush1.msra.mxu0 0.0
    %648 = vmatprep.subr.mxu0 0.0
    %649 = vmatpush1.msra.mxu0 0.0
    %650 = vmatprep.subr.mxu0 0.0
    %651 = vmatpush1.msra.mxu0 0.0
    %652 = vmatprep.subr.mxu0 0.0
    %653 = vmatpush1.msra.mxu0 0.0
    %654 = vmatprep.subr.mxu0 0.0
    %655 = vmatpush1.msra.mxu0 0.0
    %656 = vmatprep.subr.mxu0 0.0
    %657 = vmatpush1.msra.mxu0 0.0
    %658 = vmatprep.subr.mxu0 0.0
    %659 = vmatpush1.msra.mxu0 0.0
    %660 = vmatprep.subr.mxu0 0.0
    %661 = vmatpush1.msra.mxu0 0.0
    %662 = vmatprep.subr.mxu0 0.0
    %663 = vmatpush1.msra.mxu0 0.0
    %664 = vmatprep.subr.mxu0 0.0
    %665 = vmatpush1.msra.mxu0 0.0
    %666 = vmatprep.subr.mxu0 0.0
    %667 = vmatpush1.msra.mxu0 0.0
    %668 = vmatprep.subr.mxu0 0.0
    %669 = vmatpush1.msra.mxu0 0.0
    %670 = vmatprep.subr.mxu0 0.0
    %671 = vmatpush1.msra.mxu0 0.0
    %672 = vmatprep.subr.mxu0 0.0
    %673 = vmatpush1.msra.mxu0 0.0
    %674 = vmatprep.subr.mxu0 0.0
    %675 = vmatpush1.msra.mxu0 0.0
    %676 = vmatprep.subr.mxu0 0.0
    %677 = vmatpush1.msra.mxu0 0.0
    %678 = vmatprep.mubr.f32.mxu0 0.0
    %679 = vmatmul.mubr.f32.gmra.mrb[0].mxu0 %v567
    %v680 = vpop.f32.mrb[0].mxu0
    %v681 = vadd.f32 %v310, %v680
    %v682 = vpop.f32.mrb[0].mxu0
    %v683 = vadd.f32 %v312, %v682
    %684 = vmatprep.mubr.f32.mxu0 0.0
    %685 = vmatmul.mubr.f32.gmra.mrb[0].mxu0 %v570
    %v686 = vpop.f32.mrb[0].mxu0
    %v687 = vadd.f32 %v316, %v686
    %v688 = vpop.f32.mrb[0].mxu0
    %v689 = vadd.f32 %v318, %v688
    %690 = vmatprep.mubr.f32.mxu0 0.0
    %691 = vmatmul.mubr.f32.gmra.mrb[0].mxu0 %v573
    %v692 = vpop.f32.mrb[0].mxu0
    %v693 = vadd.f32 %v322, %v692
    %v694 = vpop.f32.mrb[0].mxu0
    %v695 = vadd.f32 %v324, %v694
    %696 = vmatprep.mubr.f32.mxu0 0.0
    %697 = vmatmul.mubr.f32.gmra.mrb[0].mxu0 %v576
    %v698 = vpop.f32.mrb[0].mxu0
    %v699 = vadd.f32 %v328, %v698
    %v700 = vpop.f32.mrb[0].mxu0
    %v701 = vadd.f32 %v330, %v700
    %702 = vmatprep.mubr.f32.mxu0 0.0
    %703 = vmatmul.mubr.f32.gmra.mrb[0].mxu0 %v579
    %v704 = vpop.f32.mrb[0].mxu0
    %v705 = vadd.f32 %v334, %v704
    %v706 = vpop.f32.mrb[0].mxu0
    %v707 = vadd.f32 %v336, %v706
    %708 = vmatprep.mubr.f32.mxu0 0.0
    %709 = vmatmul.mubr.f32.gmra.mrb[0].mxu0 %v582
    %v710 = vpop.f32.mrb[0].mxu0
    %v711 = vadd.f32 %v340, %v710
    %v712 = vpop.f32.mrb[0].mxu0
    %v713 = vadd.f32 %v342, %v712
    %714 = vmatprep.mubr.f32.mxu0 0.0
    %715 = vmatmul.mubr.f32.gmra.mrb[0].mxu0 %v585
    %v716 = vpop.f32.mrb[0].mxu0
    %v717 = vadd.f32 %v346, %v716
    %v718 = vpop.f32.mrb[0].mxu0
    %v719 = vadd.f32 %v348, %v718
    %720 = vmatprep.mubr.f32.mxu0 0.0
    %721 = vmatmul.mubr.f32.gmra.mrb[0].mxu0 %v588
    %v722 = vpop.f32.mrb[0].mxu0
    %v723 = vadd.f32 %v352, %v722
    %v724 = vpop.f32.mrb[0].mxu0
    %v725 = vadd.f32 %v354, %v724
    %726 = vmatprep.mubr.f32.mxu0 0.0
    %727 = vmatmul.mubr.f32.gmra.mrb[0].mxu0 %v591
    %v728 = vpop.f32.mrb[0].mxu0
    %v729 = vadd.f32 %v358, %v728
    %v730 = vpop.f32.mrb[0].mxu0
    %v731 = vadd.f32 %v360, %v730
    %732 = vmatprep.mubr.f32.mxu0 0.0
    %733 = vmatmul.mubr.f32.gmra.mrb[0].mxu0 %v594
    %v734 = vpop.f32.mrb[0].mxu0
    %v735 = vadd.f32 %v364, %v734
    %v736 = vpop.f32.mrb[0].mxu0
    %v737 = vadd.f32 %v366, %v736
    %738 = vmatprep.mubr.f32.mxu0 0.0
    %739 = vmatmul.mubr.f32.gmra.mrb[0].mxu0 %v597
    %v740 = vpop.f32.mrb[0].mxu0
    %v741 = vadd.f32 %v370, %v740
    %v742 = vpop.f32.mrb[0].mxu0
    %v743 = vadd.f32 %v372, %v742
    %744 = vmatprep.mubr.f32.mxu0 0.0
    %745 = vmatmul.mubr.f32.gmra.mrb[0].mxu0 %v600
    %v746 = vpop.f32.mrb[0].mxu0
    %v747 = vadd.f32 %v376, %v746
    %v748 = vpop.f32.mrb[0].mxu0
    %v749 = vadd.f32 %v378, %v748
    %750 = vmatprep.mubr.f32.mxu0 0.0
    %751 = vmatmul.mubr.f32.gmra.mrb[0].mxu0 %v603
    %v752 = vpop.f32.mrb[0].mxu0
    %v753 = vadd.f32 %v382, %v752
    %v754 = vpop.f32.mrb[0].mxu0
    %v755 = vadd.f32 %v384, %v754
    %756 = vmatprep.mubr.f32.mxu0 0.0
    %757 = vmatmul.mubr.f32.gmra.mrb[0].mxu0 %v606
    %v758 = vpop.f32.mrb[0].mxu0
    %v759 = vadd.f32 %v388, %v758
    %v760 = vpop.f32.mrb[0].mxu0
    %v761 = vadd.f32 %v390, %v760
    %762 = vmatprep.mubr.f32.mxu0 0.0
    %763 = vmatmul.mubr.f32.gmra.mrb[0].mxu0 %v609
    %v764 = vpop.f32.mrb[0].mxu0
    %v765 = vadd.f32 %v394, %v764
    %v766 = vpop.f32.mrb[0].mxu0
    %v767 = vadd.f32 %v396, %v766
    %768 = vmatprep.mubr.f32.mxu0 0.0
    %769 = vmatmul.mubr.f32.gmra.mrb[0].mxu0 %v612
    %v770 = vpop.f32.mrb[0].mxu0
    %v771 = vadd.f32 %v400, %v770
    %v772 = vpop.f32.mrb[0].mxu0
    %v773 = vadd.f32 %v402, %v772
    %774 = vdwg.mxu0
    %775 = vmatprep.subr.mxu0 %v145
    %776 = vmatpush1.msra.mxu0 %v144
    %777 = vmatprep.subr.mxu0 %v149
    %778 = vmatpush1.msra.mxu0 %v148
    %779 = vmatprep.subr.mxu0 %v153
    %780 = vmatpush1.msra.mxu0 %v152
    %781 = vmatprep.subr.mxu0 %v157
    %782 = vmatpush1.msra.mxu0 %v156
    %783 = vmatprep.subr.mxu0 %v161
    %784 = vmatpush1.msra.mxu0 %v160
    %785 = vmatprep.subr.mxu0 0.0
    %786 = vmatpush1.msra.mxu0 0.0
    %787 = vmatprep.subr.mxu0 0.0
    %788 = vmatpush1.msra.mxu0 0.0
    %789 = vmatprep.subr.mxu0 0.0
    %790 = vmatpush1.msra.mxu0 0.0
    %791 = vmatprep.subr.mxu0 0.0
    %792 = vmatpush1.msra.mxu0 0.0
    %793 = vmatprep.subr.mxu0 0.0
    %794 = vmatpush1.msra.mxu0 0.0
    %795 = vmatprep.subr.mxu0 0.0
    %796 = vmatpush1.msra.mxu0 0.0
    %797 = vmatprep.subr.mxu0 0.0
    %798 = vmatpush1.msra.mxu0 0.0
    %799 = vmatprep.subr.mxu0 0.0
    %800 = vmatpush1.msra.mxu0 0.0
    %801 = vmatprep.subr.mxu0 0.0
    %802 = vmatpush1.msra.mxu0 0.0
    %803 = vmatprep.subr.mxu0 0.0
    %804 = vmatpush1.msra.mxu0 0.0
    %805 = vmatprep.subr.mxu0 0.0
    %806 = vmatpush1.msra.mxu0 0.0
    %807 = vmatprep.subr.mxu0 0.0
    %808 = vmatpush1.msra.mxu0 0.0
    %809 = vmatprep.subr.mxu0 0.0
    %810 = vmatpush1.msra.mxu0 0.0
    %811 = vmatprep.subr.mxu0 0.0
    %812 = vmatpush1.msra.mxu0 0.0
    %813 = vmatprep.subr.mxu0 0.0
    %814 = vmatpush1.msra.mxu0 0.0
    %815 = vmatprep.subr.mxu0 0.0
    %816 = vmatpush1.msra.mxu0 0.0
    %817 = vmatprep.subr.mxu0 0.0
    %818 = vmatpush1.msra.mxu0 0.0
    %819 = vmatprep.subr.mxu0 0.0
    %820 = vmatpush1.msra.mxu0 0.0
    %821 = vmatprep.subr.mxu0 0.0
    %822 = vmatpush1.msra.mxu0 0.0
    %823 = vmatprep.subr.mxu0 0.0
    %824 = vmatpush1.msra.mxu0 0.0
    %825 = vmatprep.subr.mxu0 0.0
    %826 = vmatpush1.msra.mxu0 0.0
    %827 = vmatprep.subr.mxu0 0.0
    %828 = vmatpush1.msra.mxu0 0.0
    %829 = vmatprep.subr.mxu0 0.0
    %830 = vmatpush1.msra.mxu0 0.0
    %831 = vmatprep.subr.mxu0 0.0
    %832 = vmatpush1.msra.mxu0 0.0
    %833 = vmatprep.subr.mxu0 0.0
    %834 = vmatpush1.msra.mxu0 0.0
    %835 = vmatprep.subr.mxu0 0.0
    %836 = vmatpush1.msra.mxu0 0.0
    %837 = vmatprep.subr.mxu0 0.0
    %838 = vmatpush1.msra.mxu0 0.0
    %839 = vmatprep.mubr.f32.mxu0 0.0
    %840 = vmatmul.mubr.f32.gmra.mrb[0].mxu0 %v567
    %v841 = vpop.f32.mrb[0].mxu0
    %v842 = vadd.f32 %v471, %v841
    %v843 = vpop.f32.mrb[0].mxu0
    %v844 = vadd.f32 %v473, %v843
    %845 = vmatprep.mubr.f32.mxu0 0.0
    %846 = vmatmul.mubr.f32.gmra.mrb[0].mxu0 %v570
    %v847 = vpop.f32.mrb[0].mxu0
    %v848 = vadd.f32 %v477, %v847
    %v849 = vpop.f32.mrb[0].mxu0
    %v850 = vadd.f32 %v479, %v849
    %851 = vmatprep.mubr.f32.mxu0 0.0
    %852 = vmatmul.mubr.f32.gmra.mrb[0].mxu0 %v573
    %v853 = vpop.f32.mrb[0].mxu0
    %v854 = vadd.f32 %v483, %v853
    %v855 = vpop.f32.mrb[0].mxu0
    %v856 = vadd.f32 %v485, %v855
    %857 = vmatprep.mubr.f32.mxu0 0.0
    %858 = vmatmul.mubr.f32.gmra.mrb[0].mxu0 %v576
    %v859 = vpop.f32.mrb[0].mxu0
    %v860 = vadd.f32 %v489, %v859
    %v861 = vpop.f32.mrb[0].mxu0
    %v862 = vadd.f32 %v491, %v861
    %863 = vmatprep.mubr.f32.mxu0 0.0
    %864 = vmatmul.mubr.f32.gmra.mrb[0].mxu0 %v579
    %v865 = vpop.f32.mrb[0].mxu0
    %v866 = vadd.f32 %v495, %v865
    %v867 = vpop.f32.mrb[0].mxu0
    %v868 = vadd.f32 %v497, %v867
    %869 = vmatprep.mubr.f32.mxu0 0.0
    %870 = vmatmul.mubr.f32.gmra.mrb[0].mxu0 %v582
    %v871 = vpop.f32.mrb[0].mxu0
    %v872 = vadd.f32 %v501, %v871
    %v873 = vpop.f32.mrb[0].mxu0
    %v874 = vadd.f32 %v503, %v873
    %875 = vmatprep.mubr.f32.mxu0 0.0
    %876 = vmatmul.mubr.f32.gmra.mrb[0].mxu0 %v585
    %v877 = vpop.f32.mrb[0].mxu0
    %v878 = vadd.f32 %v507, %v877
    %v879 = vpop.f32.mrb[0].mxu0
    %v880 = vadd.f32 %v509, %v879
    %881 = vmatprep.mubr.f32.mxu0 0.0
    %882 = vmatmul.mubr.f32.gmra.mrb[0].mxu0 %v588
    %v883 = vpop.f32.mrb[0].mxu0
    %v884 = vadd.f32 %v513, %v883
    %v885 = vpop.f32.mrb[0].mxu0
    %v886 = vadd.f32 %v515, %v885
    %887 = vmatprep.mubr.f32.mxu0 0.0
    %888 = vmatmul.mubr.f32.gmra.mrb[0].mxu0 %v591
    %v889 = vpop.f32.mrb[0].mxu0
    %v890 = vadd.f32 %v519, %v889
    %v891 = vpop.f32.mrb[0].mxu0
    %v892 = vadd.f32 %v521, %v891
    %893 = vmatprep.mubr.f32.mxu0 0.0
    %894 = vmatmul.mubr.f32.gmra.mrb[0].mxu0 %v594
    %v895 = vpop.f32.mrb[0].mxu0
    %v896 = vadd.f32 %v525, %v895
    %v897 = vpop.f32.mrb[0].mxu0
    %v898 = vadd.f32 %v527, %v897
    %899 = vmatprep.mubr.f32.mxu0 0.0
    %900 = vmatmul.mubr.f32.gmra.mrb[0].mxu0 %v597
    %v901 = vpop.f32.mrb[0].mxu0
    %v902 = vadd.f32 %v531, %v901
    %v903 = vpop.f32.mrb[0].mxu0
    %v904 = vadd.f32 %v533, %v903
    %905 = vmatprep.mubr.f32.mxu0 0.0
    %906 = vmatmul.mubr.f32.gmra.mrb[0].mxu0 %v600
    %v907 = vpop.f32.mrb[0].mxu0
    %v908 = vadd.f32 %v537, %v907
    %v909 = vpop.f32.mrb[0].mxu0
    %v910 = vadd.f32 %v539, %v909
    %911 = vmatprep.mubr.f32.mxu0 0.0
    %912 = vmatmul.mubr.f32.gmra.mrb[0].mxu0 %v603
    %v913 = vpop.f32.mrb[0].mxu0
    %v914 = vadd.f32 %v543, %v913
    %v915 = vpop.f32.mrb[0].mxu0
    %v916 = vadd.f32 %v545, %v915
    %917 = vmatprep.mubr.f32.mxu0 0.0
    %918 = vmatmul.mubr.f32.gmra.mrb[0].mxu0 %v606
    %v919 = vpop.f32.mrb[0].mxu0
    %v920 = vadd.f32 %v549, %v919
    %v921 = vpop.f32.mrb[0].mxu0
    %v922 = vadd.f32 %v551, %v921
    %923 = vmatprep.mubr.f32.mxu0 0.0
    %924 = vmatmul.mubr.f32.gmra.mrb[0].mxu0 %v609
    %v925 = vpop.f32.mrb[0].mxu0
    %v926 = vadd.f32 %v555, %v925
    %v927 = vpop.f32.mrb[0].mxu0
    %v928 = vadd.f32 %v557, %v927
    %929 = vmatprep.mubr.f32.mxu0 0.0
    %930 = vmatmul.mubr.f32.gmra.mrb[0].mxu0 %v612
    %v931 = vpop.f32.mrb[0].mxu0
    %v932 = vadd.f32 %v561, %v931
    %v933 = vpop.f32.mrb[0].mxu0
    %v934 = vadd.f32 %v563, %v933
    %935 = vdwg.mxu0
    %v936 = vld [vmem:[%s2] sm:$0xff]
    %v937 = vld [vmem:[%s2 + $0x8] sm:$0xff]
    %v938 = vld [vmem:[%s2 + $0x10] sm:$0xff]
    %v939 = vld [vmem:[%s2 + $0x18] sm:$0xff]
    %v940 = vld [vmem:[%s2 + $0x20] sm:$0xff]
    %v941 = vld [vmem:[%s2 + $0x28] sm:$0xff]
    %v942 = vld [vmem:[%s2 + $0x30] sm:$0xff]
    %v943 = vld [vmem:[%s2 + $0x38] sm:$0xff]
    %v944 = vld [vmem:[%s2 + $0x40] sm:$0xff]
    %v945 = vld [vmem:[%s2 + $0x48] sm:$0xff]
    %v946 = vld [vmem:[%s2 + $0x50] sm:$0xff]
    %v947 = vld [vmem:[%s2 + $0x58] sm:$0xff]
    %v948 = vld [vmem:[%s2 + $0x60] sm:$0xff]
    %v949 = vld [vmem:[%s2 + $0x68] sm:$0xff]
    %v950 = vld [vmem:[%s2 + $0x70] sm:$0xff]
    %v951 = vld [vmem:[%s2 + $0x78] sm:$0xff]
    %v952 = vld [vmem:[%s7] sm:$0xff]
    %v953 = vld [vmem:[%s7 + $0x8] sm:$0xff]
    %v954 = vld [vmem:[%s7 + $0x10] sm:$0xff]
    %v955 = vld [vmem:[%s7 + $0x18] sm:$0xff]
    %v956 = vld [vmem:[%s7 + $0x20] sm:$0xff]
    %v957 = vld [vmem:[%s7 + $0x28] sm:$0xff]
    %v958 = vld [vmem:[%s7 + $0x30] sm:$0xff]
    %v959 = vld [vmem:[%s7 + $0x38] sm:$0xff]
    %v960 = vld [vmem:[%s7 + $0x40] sm:$0xff]
    %v961 = vld [vmem:[%s7 + $0x48] sm:$0xff]
    %v962 = vld [vmem:[%s7 + $0x50] sm:$0xff]
    %v963 = vld [vmem:[%s7 + $0x58] sm:$0xff]
    %v964 = vld [vmem:[%s7 + $0x60] sm:$0xff]
    %v965 = vld [vmem:[%s7 + $0x68] sm:$0xff]
    %v966 = vld [vmem:[%s7 + $0x70] sm:$0xff]
    %v967 = vld [vmem:[%s7 + $0x78] sm:$0xff]
    %v968 = vld [vmem:[%s7 + $0x80] sm:$0xff]
    %v969 = vld [vmem:[%s7 + $0x88] sm:$0xff]
    %v970 = vld [vmem:[%s7 + $0x90] sm:$0xff]
    %v971 = vld [vmem:[%s7 + $0x98] sm:$0xff]
    %v972 = vld [vmem:[%s7 + $0xa0] sm:$0xff]
    %v973 = vld [vmem:[%s7 + $0xa8] sm:$0xff]
    %v974 = vld [vmem:[%s7 + $0xb0] sm:$0xff]
    %v975 = vld [vmem:[%s7 + $0xb8] sm:$0xff]
    %vm976 = vcmask 392192
    %v978 = vsel %vm976, %v936, 0
    %v981 = vsel %vm976, %v937, 0
    %v984 = vsel %vm976, %v938, 0
    %v987 = vsel %vm976, %v939, 0
    %v990 = vsel %vm976, %v940, 0
    %v993 = vsel %vm976, %v941, 0
    %v996 = vsel %vm976, %v942, 0
    %v999 = vsel %vm976, %v943, 0
    %v1002 = vsel %vm976, %v944, 0
    %v1005 = vsel %vm976, %v945, 0
    %v1008 = vsel %vm976, %v946, 0
    %v1011 = vsel %vm976, %v947, 0
    %v1014 = vsel %vm976, %v948, 0
    %v1017 = vsel %vm976, %v949, 0
    %v1020 = vsel %vm976, %v950, 0
    %v1023 = vsel %vm976, %v951, 0
    %1025 = vmatprep.subr.mxu0 %v953
    %1026 = vmatpush1.msra.mxu0 %v952
    %1027 = vmatprep.subr.mxu0 %v957
    %1028 = vmatpush1.msra.mxu0 %v956
    %1029 = vmatprep.subr.mxu0 %v961
    %1030 = vmatpush1.msra.mxu0 %v960
    %1031 = vmatprep.subr.mxu0 %v965
    %1032 = vmatpush1.msra.mxu0 %v964
    %1033 = vmatprep.subr.mxu0 %v969
    %1034 = vmatpush1.msra.mxu0 %v968
    %1035 = vmatprep.subr.mxu0 %v973
    %1036 = vmatpush1.msra.mxu0 %v972
    %1037 = vmatprep.subr.mxu0 0.0
    %1038 = vmatpush1.msra.mxu0 0.0
    %1039 = vmatprep.subr.mxu0 0.0
    %1040 = vmatpush1.msra.mxu0 0.0
    %1041 = vmatprep.subr.mxu0 0.0
    %1042 = vmatpush1.msra.mxu0 0.0
    %1043 = vmatprep.subr.mxu0 0.0
    %1044 = vmatpush1.msra.mxu0 0.0
    %1045 = vmatprep.subr.mxu0 0.0
    %1046 = vmatpush1.msra.mxu0 0.0
    %1047 = vmatprep.subr.mxu0 0.0
    %1048 = vmatpush1.msra.mxu0 0.0
    %1049 = vmatprep.subr.mxu0 0.0
    %1050 = vmatpush1.msra.mxu0 0.0
    %1051 = vmatprep.subr.mxu0 0.0
    %1052 = vmatpush1.msra.mxu0 0.0
    %1053 = vmatprep.subr.mxu0 0.0
    %1054 = vmatpush1.msra.mxu0 0.0
    %1055 = vmatprep.subr.mxu0 0.0
    %1056 = vmatpush1.msra.mxu0 0.0
    %1057 = vmatprep.subr.mxu0 0.0
    %1058 = vmatpush1.msra.mxu0 0.0
    %1059 = vmatprep.subr.mxu0 0.0
    %1060 = vmatpush1.msra.mxu0 0.0
    %1061 = vmatprep.subr.mxu0 0.0
    %1062 = vmatpush1.msra.mxu0 0.0
    %1063 = vmatprep.subr.mxu0 0.0
    %1064 = vmatpush1.msra.mxu0 0.0
    %1065 = vmatprep.subr.mxu0 0.0
    %1066 = vmatpush1.msra.mxu0 0.0
    %1067 = vmatprep.subr.mxu0 0.0
    %1068 = vmatpush1.msra.mxu0 0.0
    %1069 = vmatprep.subr.mxu0 0.0
    %1070 = vmatpush1.msra.mxu0 0.0
    %1071 = vmatprep.subr.mxu0 0.0
    %1072 = vmatpush1.msra.mxu0 0.0
    %1073 = vmatprep.subr.mxu0 0.0
    %1074 = vmatpush1.msra.mxu0 0.0
    %1075 = vmatprep.subr.mxu0 0.0
    %1076 = vmatpush1.msra.mxu0 0.0
    %1077 = vmatprep.subr.mxu0 0.0
    %1078 = vmatpush1.msra.mxu0 0.0
    %1079 = vmatprep.subr.mxu0 0.0
    %1080 = vmatpush1.msra.mxu0 0.0
    %1081 = vmatprep.subr.mxu0 0.0
    %1082 = vmatpush1.msra.mxu0 0.0
    %1083 = vmatprep.subr.mxu0 0.0
    %1084 = vmatpush1.msra.mxu0 0.0
    %1085 = vmatprep.subr.mxu0 0.0
    %1086 = vmatpush1.msra.mxu0 0.0
    %1087 = vmatprep.subr.mxu0 0.0
    %1088 = vmatpush1.msra.mxu0 0.0
    %1089 = vmatprep.mubr.f32.mxu0 0.0
    %1090 = vmatmul.mubr.f32.gmra.mrb[0].mxu0 %v978
    %v1091 = vpop.f32.mrb[0].mxu0
    %v1092 = vadd.f32 0.0, %v1091
    %v1093 = vpop.f32.mrb[0].mxu0
    %v1094 = vadd.f32 0.0, %v1093
    %1095 = vmatprep.mubr.f32.mxu0 0.0
    %1096 = vmatmul.mubr.f32.gmra.mrb[0].mxu0 %v981
    %v1097 = vpop.f32.mrb[0].mxu0
    %v1098 = vadd.f32 0.0, %v1097
    %v1099 = vpop.f32.mrb[0].mxu0
    %v1100 = vadd.f32 0.0, %v1099
    %1101 = vmatprep.mubr.f32.mxu0 0.0
    %1102 = vmatmul.mubr.f32.gmra.mrb[0].mxu0 %v984
    %v1103 = vpop.f32.mrb[0].mxu0
    %v1104 = vadd.f32 0.0, %v1103
    %v1105 = vpop.f32.mrb[0].mxu0
    %v1106 = vadd.f32 0.0, %v1105
    %1107 = vmatprep.mubr.f32.mxu0 0.0
    %1108 = vmatmul.mubr.f32.gmra.mrb[0].mxu0 %v987
    %v1109 = vpop.f32.mrb[0].mxu0
    %v1110 = vadd.f32 0.0, %v1109
    %v1111 = vpop.f32.mrb[0].mxu0
    %v1112 = vadd.f32 0.0, %v1111
    %1113 = vmatprep.mubr.f32.mxu0 0.0
    %1114 = vmatmul.mubr.f32.gmra.mrb[0].mxu0 %v990
    %v1115 = vpop.f32.mrb[0].mxu0
    %v1116 = vadd.f32 0.0, %v1115
    %v1117 = vpop.f32.mrb[0].mxu0
    %v1118 = vadd.f32 0.0, %v1117
    %1119 = vmatprep.mubr.f32.mxu0 0.0
    %1120 = vmatmul.mubr.f32.gmra.mrb[0].mxu0 %v993
    %v1121 = vpop.f32.mrb[0].mxu0
    %v1122 = vadd.f32 0.0, %v1121
    %v1123 = vpop.f32.mrb[0].mxu0
    %v1124 = vadd.f32 0.0, %v1123
    %1125 = vmatprep.mubr.f32.mxu0 0.0
    %1126 = vmatmul.mubr.f32.gmra.mrb[0].mxu0 %v996
    %v1127 = vpop.f32.mrb[0].mxu0
    %v1128 = vadd.f32 0.0, %v1127
    %v1129 = vpop.f32.mrb[0].mxu0
    %v1130 = vadd.f32 0.0, %v1129
    %1131 = vmatprep.mubr.f32.mxu0 0.0
    %1132 = vmatmul.mubr.f32.gmra.mrb[0].mxu0 %v999
    %v1133 = vpop.f32.mrb[0].mxu0
    %v1134 = vadd.f32 0.0, %v1133
    %v1135 = vpop.f32.mrb[0].mxu0
    %v1136 = vadd.f32 0.0, %v1135
    %1137 = vmatprep.mubr.f32.mxu0 0.0
    %1138 = vmatmul.mubr.f32.gmra.mrb[0].mxu0 %v1002
    %v1139 = vpop.f32.mrb[0].mxu0
    %v1140 = vadd.f32 0.0, %v1139
    %v1141 = vpop.f32.mrb[0].mxu0
    %v1142 = vadd.f32 0.0, %v1141
    %1143 = vmatprep.mubr.f32.mxu0 0.0
    %1144 = vmatmul.mubr.f32.gmra.mrb[0].mxu0 %v1005
    %v1145 = vpop.f32.mrb[0].mxu0
    %v1146 = vadd.f32 0.0, %v1145
    %v1147 = vpop.f32.mrb[0].mxu0
    %v1148 = vadd.f32 0.0, %v1147
    %1149 = vmatprep.mubr.f32.mxu0 0.0
    %1150 = vmatmul.mubr.f32.gmra.mrb[0].mxu0 %v1008
    %v1151 = vpop.f32.mrb[0].mxu0
    %v1152 = vadd.f32 0.0, %v1151
    %v1153 = vpop.f32.mrb[0].mxu0
    %v1154 = vadd.f32 0.0, %v1153
    %1155 = vmatprep.mubr.f32.mxu0 0.0
    %1156 = vmatmul.mubr.f32.gmra.mrb[0].mxu0 %v1011
    %v1157 = vpop.f32.mrb[0].mxu0
    %v1158 = vadd.f32 0.0, %v1157
    %v1159 = vpop.f32.mrb[0].mxu0
    %v1160 = vadd.f32 0.0, %v1159
    %1161 = vmatprep.mubr.f32.mxu0 0.0
    %1162 = vmatmul.mubr.f32.gmra.mrb[0].mxu0 %v1014
    %v1163 = vpop.f32.mrb[0].mxu0
    %v1164 = vadd.f32 0.0, %v1163
    %v1165 = vpop.f32.mrb[0].mxu0
    %v1166 = vadd.f32 0.0, %v1165
    %1167 = vmatprep.mubr.f32.mxu0 0.0
    %1168 = vmatmul.mubr.f32.gmra.mrb[0].mxu0 %v1017
    %v1169 = vpop.f32.mrb[0].mxu0
    %v1170 = vadd.f32 0.0, %v1169
    %v1171 = vpop.f32.mrb[0].mxu0
    %v1172 = vadd.f32 0.0, %v1171
    %1173 = vmatprep.mubr.f32.mxu0 0.0
    %1174 = vmatmul.mubr.f32.gmra.mrb[0].mxu0 %v1020
    %v1175 = vpop.f32.mrb[0].mxu0
    %v1176 = vadd.f32 0.0, %v1175
    %v1177 = vpop.f32.mrb[0].mxu0
    %v1178 = vadd.f32 0.0, %v1177
    %1179 = vmatprep.mubr.f32.mxu0 0.0
    %1180 = vmatmul.mubr.f32.gmra.mrb[0].mxu0 %v1023
    %v1181 = vpop.f32.mrb[0].mxu0
    %v1182 = vadd.f32 0.0, %v1181
    %v1183 = vpop.f32.mrb[0].mxu0
    %v1184 = vadd.f32 0.0, %v1183
    %1185 = vdwg.mxu0
    %1186 = vmatprep.subr.mxu0 %v955
    %1187 = vmatpush1.msra.mxu0 %v954
    %1188 = vmatprep.subr.mxu0 %v959
    %1189 = vmatpush1.msra.mxu0 %v958
    %1190 = vmatprep.subr.mxu0 %v963
    %1191 = vmatpush1.msra.mxu0 %v962
    %1192 = vmatprep.subr.mxu0 %v967
    %1193 = vmatpush1.msra.mxu0 %v966
    %1194 = vmatprep.subr.mxu0 %v971
    %1195 = vmatpush1.msra.mxu0 %v970
    %1196 = vmatprep.subr.mxu0 %v975
    %1197 = vmatpush1.msra.mxu0 %v974
    %1198 = vmatprep.subr.mxu0 0.0
    %1199 = vmatpush1.msra.mxu0 0.0
    %1200 = vmatprep.subr.mxu0 0.0
    %1201 = vmatpush1.msra.mxu0 0.0
    %1202 = vmatprep.subr.mxu0 0.0
    %1203 = vmatpush1.msra.mxu0 0.0
    %1204 = vmatprep.subr.mxu0 0.0
    %1205 = vmatpush1.msra.mxu0 0.0
    %1206 = vmatprep.subr.mxu0 0.0
    %1207 = vmatpush1.msra.mxu0 0.0
    %1208 = vmatprep.subr.mxu0 0.0
    %1209 = vmatpush1.msra.mxu0 0.0
    %1210 = vmatprep.subr.mxu0 0.0
    %1211 = vmatpush1.msra.mxu0 0.0
    %1212 = vmatprep.subr.mxu0 0.0
    %1213 = vmatpush1.msra.mxu0 0.0
    %1214 = vmatprep.subr.mxu0 0.0
    %1215 = vmatpush1.msra.mxu0 0.0
    %1216 = vmatprep.subr.mxu0 0.0
    %1217 = vmatpush1.msra.mxu0 0.0
    %1218 = vmatprep.subr.mxu0 0.0
    %1219 = vmatpush1.msra.mxu0 0.0
    %1220 = vmatprep.subr.mxu0 0.0
    %1221 = vmatpush1.msra.mxu0 0.0
    %1222 = vmatprep.subr.mxu0 0.0
    %1223 = vmatpush1.msra.mxu0 0.0
    %1224 = vmatprep.subr.mxu0 0.0
    %1225 = vmatpush1.msra.mxu0 0.0
    %1226 = vmatprep.subr.mxu0 0.0
    %1227 = vmatpush1.msra.mxu0 0.0
    %1228 = vmatprep.subr.mxu0 0.0
    %1229 = vmatpush1.msra.mxu0 0.0
    %1230 = vmatprep.subr.mxu0 0.0
    %1231 = vmatpush1.msra.mxu0 0.0
    %1232 = vmatprep.subr.mxu0 0.0
    %1233 = vmatpush1.msra.mxu0 0.0
    %1234 = vmatprep.subr.mxu0 0.0
    %1235 = vmatpush1.msra.mxu0 0.0
    %1236 = vmatprep.subr.mxu0 0.0
    %1237 = vmatpush1.msra.mxu0 0.0
    %1238 = vmatprep.subr.mxu0 0.0
    %1239 = vmatpush1.msra.mxu0 0.0
    %1240 = vmatprep.subr.mxu0 0.0
    %1241 = vmatpush1.msra.mxu0 0.0
    %1242 = vmatprep.subr.mxu0 0.0
    %1243 = vmatpush1.msra.mxu0 0.0
    %1244 = vmatprep.subr.mxu0 0.0
    %1245 = vmatpush1.msra.mxu0 0.0
    %1246 = vmatprep.subr.mxu0 0.0
    %1247 = vmatpush1.msra.mxu0 0.0
    %1248 = vmatprep.subr.mxu0 0.0
    %1249 = vmatpush1.msra.mxu0 0.0
    %1250 = vmatprep.mubr.f32.mxu0 0.0
    %1251 = vmatmul.mubr.f32.gmra.mrb[0].mxu0 %v978
    %v1252 = vpop.f32.mrb[0].mxu0
    %v1253 = vadd.f32 0.0, %v1252
    %v1254 = vpop.f32.mrb[0].mxu0
    %v1255 = vadd.f32 0.0, %v1254
    %1256 = vmatprep.mubr.f32.mxu0 0.0
    %1257 = vmatmul.mubr.f32.gmra.mrb[0].mxu0 %v981
    %v1258 = vpop.f32.mrb[0].mxu0
    %v1259 = vadd.f32 0.0, %v1258
    %v1260 = vpop.f32.mrb[0].mxu0
    %v1261 = vadd.f32 0.0, %v1260
    %1262 = vmatprep.mubr.f32.mxu0 0.0
    %1263 = vmatmul.mubr.f32.gmra.mrb[0].mxu0 %v984
    %v1264 = vpop.f32.mrb[0].mxu0
    %v1265 = vadd.f32 0.0, %v1264
    %v1266 = vpop.f32.mrb[0].mxu0
    %v1267 = vadd.f32 0.0, %v1266
    %1268 = vmatprep.mubr.f32.mxu0 0.0
    %1269 = vmatmul.mubr.f32.gmra.mrb[0].mxu0 %v987
    %v1270 = vpop.f32.mrb[0].mxu0
    %v1271 = vadd.f32 0.0, %v1270
    %v1272 = vpop.f32.mrb[0].mxu0
    %v1273 = vadd.f32 0.0, %v1272
    %1274 = vmatprep.mubr.f32.mxu0 0.0
    %1275 = vmatmul.mubr.f32.gmra.mrb[0].mxu0 %v990
    %v1276 = vpop.f32.mrb[0].mxu0
    %v1277 = vadd.f32 0.0, %v1276
    %v1278 = vpop.f32.mrb[0].mxu0
    %v1279 = vadd.f32 0.0, %v1278
    %1280 = vmatprep.mubr.f32.mxu0 0.0
    %1281 = vmatmul.mubr.f32.gmra.mrb[0].mxu0 %v993
    %v1282 = vpop.f32.mrb[0].mxu0
    %v1283 = vadd.f32 0.0, %v1282
    %v1284 = vpop.f32.mrb[0].mxu0
    %v1285 = vadd.f32 0.0, %v1284
    %1286 = vmatprep.mubr.f32.mxu0 0.0
    %1287 = vmatmul.mubr.f32.gmra.mrb[0].mxu0 %v996
    %v1288 = vpop.f32.mrb[0].mxu0
    %v1289 = vadd.f32 0.0, %v1288
    %v1290 = vpop.f32.mrb[0].mxu0
    %v1291 = vadd.f32 0.0, %v1290
    %1292 = vmatprep.mubr.f32.mxu0 0.0
    %1293 = vmatmul.mubr.f32.gmra.mrb[0].mxu0 %v999
    %v1294 = vpop.f32.mrb[0].mxu0
    %v1295 = vadd.f32 0.0, %v1294
    %v1296 = vpop.f32.mrb[0].mxu0
    %v1297 = vadd.f32 0.0, %v1296
    %1298 = vmatprep.mubr.f32.mxu0 0.0
    %1299 = vmatmul.mubr.f32.gmra.mrb[0].mxu0 %v1002
    %v1300 = vpop.f32.mrb[0].mxu0
    %v1301 = vadd.f32 0.0, %v1300
    %v1302 = vpop.f32.mrb[0].mxu0
    %v1303 = vadd.f32 0.0, %v1302
    %1304 = vmatprep.mubr.f32.mxu0 0.0
    %1305 = vmatmul.mubr.f32.gmra.mrb[0].mxu0 %v1005
    %v1306 = vpop.f32.mrb[0].mxu0
    %v1307 = vadd.f32 0.0, %v1306
    %v1308 = vpop.f32.mrb[0].mxu0
    %v1309 = vadd.f32 0.0, %v1308
    %1310 = vmatprep.mubr.f32.mxu0 0.0
    %1311 = vmatmul.mubr.f32.gmra.mrb[0].mxu0 %v1008
    %v1312 = vpop.f32.mrb[0].mxu0
    %v1313 = vadd.f32 0.0, %v1312
    %v1314 = vpop.f32.mrb[0].mxu0
    %v1315 = vadd.f32 0.0, %v1314
    %1316 = vmatprep.mubr.f32.mxu0 0.0
    %1317 = vmatmul.mubr.f32.gmra.mrb[0].mxu0 %v1011
    %v1318 = vpop.f32.mrb[0].mxu0
    %v1319 = vadd.f32 0.0, %v1318
    %v1320 = vpop.f32.mrb[0].mxu0
    %v1321 = vadd.f32 0.0, %v1320
    %1322 = vmatprep.mubr.f32.mxu0 0.0
    %1323 = vmatmul.mubr.f32.gmra.mrb[0].mxu0 %v1014
    %v1324 = vpop.f32.mrb[0].mxu0
    %v1325 = vadd.f32 0.0, %v1324
    %v1326 = vpop.f32.mrb[0].mxu0
    %v1327 = vadd.f32 0.0, %v1326
    %1328 = vmatprep.mubr.f32.mxu0 0.0
    %1329 = vmatmul.mubr.f32.gmra.mrb[0].mxu0 %v1017
    %v1330 = vpop.f32.mrb[0].mxu0
    %v1331 = vadd.f32 0.0, %v1330
    %v1332 = vpop.f32.mrb[0].mxu0
    %v1333 = vadd.f32 0.0, %v1332
    %1334 = vmatprep.mubr.f32.mxu0 0.0
    %1335 = vmatmul.mubr.f32.gmra.mrb[0].mxu0 %v1020
    %v1336 = vpop.f32.mrb[0].mxu0
    %v1337 = vadd.f32 0.0, %v1336
    %v1338 = vpop.f32.mrb[0].mxu0
    %v1339 = vadd.f32 0.0, %v1338
    %1340 = vmatprep.mubr.f32.mxu0 0.0
    %1341 = vmatmul.mubr.f32.gmra.mrb[0].mxu0 %v1023
    %v1342 = vpop.f32.mrb[0].mxu0
    %v1343 = vadd.f32 0.0, %v1342
    %v1344 = vpop.f32.mrb[0].mxu0
    %v1345 = vadd.f32 0.0, %v1344
    %1346 = vdwg.mxu0
    %v1347 = vadd.f32 %v681, %v1092
    %v1348 = vadd.f32 %v683, %v1094
    %v1349 = vadd.f32 %v842, %v1253
    %v1350 = vadd.f32 %v844, %v1255
    %v1351 = vadd.f32 %v687, %v1098
    %v1352 = vadd.f32 %v689, %v1100
    %v1353 = vadd.f32 %v848, %v1259
    %v1354 = vadd.f32 %v850, %v1261
    %v1355 = vadd.f32 %v693, %v1104
    %v1356 = vadd.f32 %v695, %v1106
    %v1357 = vadd.f32 %v854, %v1265
    %v1358 = vadd.f32 %v856, %v1267
    %v1359 = vadd.f32 %v699, %v1110
    %v1360 = vadd.f32 %v701, %v1112
    %v1361 = vadd.f32 %v860, %v1271
    %v1362 = vadd.f32 %v862, %v1273
    %v1363 = vadd.f32 %v705, %v1116
    %v1364 = vadd.f32 %v707, %v1118
    %v1365 = vadd.f32 %v866, %v1277
    %v1366 = vadd.f32 %v868, %v1279
    %v1367 = vadd.f32 %v711, %v1122
    %v1368 = vadd.f32 %v713, %v1124
    %v1369 = vadd.f32 %v872, %v1283
    %v1370 = vadd.f32 %v874, %v1285
    %v1371 = vadd.f32 %v717, %v1128
    %v1372 = vadd.f32 %v719, %v1130
    %v1373 = vadd.f32 %v878, %v1289
    %v1374 = vadd.f32 %v880, %v1291
    %v1375 = vadd.f32 %v723, %v1134
    %v1376 = vadd.f32 %v725, %v1136
    %v1377 = vadd.f32 %v884, %v1295
    %v1378 = vadd.f32 %v886, %v1297
    %v1379 = vadd.f32 %v729, %v1140
    %v1380 = vadd.f32 %v731, %v1142
    %v1381 = vadd.f32 %v890, %v1301
    %v1382 = vadd.f32 %v892, %v1303
    %v1383 = vadd.f32 %v735, %v1146
    %v1384 = vadd.f32 %v737, %v1148
    %v1385 = vadd.f32 %v896, %v1307
    %v1386 = vadd.f32 %v898, %v1309
    %v1387 = vadd.f32 %v741, %v1152
    %v1388 = vadd.f32 %v743, %v1154
    %v1389 = vadd.f32 %v902, %v1313
    %v1390 = vadd.f32 %v904, %v1315
    %v1391 = vadd.f32 %v747, %v1158
    %v1392 = vadd.f32 %v749, %v1160
    %v1393 = vadd.f32 %v908, %v1319
    %v1394 = vadd.f32 %v910, %v1321
    %v1395 = vadd.f32 %v753, %v1164
    %v1396 = vadd.f32 %v755, %v1166
    %v1397 = vadd.f32 %v914, %v1325
    %v1398 = vadd.f32 %v916, %v1327
    %v1399 = vadd.f32 %v759, %v1170
    %v1400 = vadd.f32 %v761, %v1172
    %v1401 = vadd.f32 %v920, %v1331
    %v1402 = vadd.f32 %v922, %v1333
    %v1403 = vadd.f32 %v765, %v1176
    %v1404 = vadd.f32 %v767, %v1178
    %v1405 = vadd.f32 %v926, %v1337
    %v1406 = vadd.f32 %v928, %v1339
    %v1407 = vadd.f32 %v771, %v1182
    %v1408 = vadd.f32 %v773, %v1184
    %v1409 = vadd.f32 %v932, %v1343
    %v1410 = vadd.f32 %v934, %v1345
    %v1411 = vld [vmem:[%s8] sm:$0xf]
    %v1413 = vlaneseq
    %v1414 = vshrl.u32 %v1413, 7
    %v1415 = vsub.s32 0, %v1414
    %v1416 = vrot.slane %v1411, %v1415
    %v1417 = vlaneseq
    %v1418 = vshrl.u32 %v1417, 7
    %v1419 = vsub.s32 1, %v1418
    %v1420 = vrot.slane %v1411, %v1419
    %v1421 = vlaneseq
    %v1422 = vshrl.u32 %v1421, 7
    %v1423 = vsub.s32 2, %v1422
    %v1424 = vrot.slane %v1411, %v1423
    %v1425 = vlaneseq
    %v1426 = vshrl.u32 %v1425, 7
    %v1427 = vsub.s32 3, %v1426
    %v1428 = vrot.slane %v1411, %v1427
    %v1433 = vadd.f32 %v1347, %v1416
    %v1434 = vadd.f32 %v1348, %v1420
    %v1435 = vadd.f32 %v1349, %v1424
    %v1436 = vadd.f32 %v1350, %v1428
    %v1437 = vadd.f32 %v1351, %v1416
    %v1438 = vadd.f32 %v1352, %v1420
    %v1439 = vadd.f32 %v1353, %v1424
    %v1440 = vadd.f32 %v1354, %v1428
    %v1441 = vadd.f32 %v1355, %v1416
    %v1442 = vadd.f32 %v1356, %v1420
    %v1443 = vadd.f32 %v1357, %v1424
    %v1444 = vadd.f32 %v1358, %v1428
    %v1445 = vadd.f32 %v1359, %v1416
    %v1446 = vadd.f32 %v1360, %v1420
    %v1447 = vadd.f32 %v1361, %v1424
    %v1448 = vadd.f32 %v1362, %v1428
    %v1449 = vadd.f32 %v1363, %v1416
    %v1450 = vadd.f32 %v1364, %v1420
    %v1451 = vadd.f32 %v1365, %v1424
    %v1452 = vadd.f32 %v1366, %v1428
    %v1453 = vadd.f32 %v1367, %v1416
    %v1454 = vadd.f32 %v1368, %v1420
    %v1455 = vadd.f32 %v1369, %v1424
    %v1456 = vadd.f32 %v1370, %v1428
    %v1457 = vadd.f32 %v1371, %v1416
    %v1458 = vadd.f32 %v1372, %v1420
    %v1459 = vadd.f32 %v1373, %v1424
    %v1460 = vadd.f32 %v1374, %v1428
    %v1461 = vadd.f32 %v1375, %v1416
    %v1462 = vadd.f32 %v1376, %v1420
    %v1463 = vadd.f32 %v1377, %v1424
    %v1464 = vadd.f32 %v1378, %v1428
    %v1465 = vadd.f32 %v1379, %v1416
    %v1466 = vadd.f32 %v1380, %v1420
    %v1467 = vadd.f32 %v1381, %v1424
    %v1468 = vadd.f32 %v1382, %v1428
    %v1469 = vadd.f32 %v1383, %v1416
    %v1470 = vadd.f32 %v1384, %v1420
    %v1471 = vadd.f32 %v1385, %v1424
    %v1472 = vadd.f32 %v1386, %v1428
    %v1473 = vadd.f32 %v1387, %v1416
    %v1474 = vadd.f32 %v1388, %v1420
    %v1475 = vadd.f32 %v1389, %v1424
    %v1476 = vadd.f32 %v1390, %v1428
    %v1477 = vadd.f32 %v1391, %v1416
    %v1478 = vadd.f32 %v1392, %v1420
    %v1479 = vadd.f32 %v1393, %v1424
    %v1480 = vadd.f32 %v1394, %v1428
    %v1481 = vadd.f32 %v1395, %v1416
    %v1482 = vadd.f32 %v1396, %v1420
    %v1483 = vadd.f32 %v1397, %v1424
    %v1484 = vadd.f32 %v1398, %v1428
    %v1485 = vadd.f32 %v1399, %v1416
    %v1486 = vadd.f32 %v1400, %v1420
    %v1487 = vadd.f32 %v1401, %v1424
    %v1488 = vadd.f32 %v1402, %v1428
    %v1489 = vadd.f32 %v1403, %v1416
    %v1490 = vadd.f32 %v1404, %v1420
    %v1491 = vadd.f32 %v1405, %v1424
    %v1492 = vadd.f32 %v1406, %v1428
    %v1493 = vadd.f32 %v1407, %v1416
    %v1494 = vadd.f32 %v1408, %v1420
    %v1495 = vadd.f32 %v1409, %v1424
    %v1496 = vadd.f32 %v1410, %v1428
    %1497 = vst [vmem:[#allocation2] sm:$0xff] %v1433
    %1498 = vst [vmem:[#allocation2 + $0x8] sm:$0xff] %v1434
    %1499 = vst [vmem:[#allocation2 + $0x10] sm:$0xff] %v1435
    %1500 = vst [vmem:[#allocation2 + $0x18] sm:$0xff] %v1436
    %1501 = vst [vmem:[#allocation2 + $0x20] sm:$0xff] %v1437
    %1502 = vst [vmem:[#allocation2 + $0x28] sm:$0xff] %v1438
    %1503 = vst [vmem:[#allocation2 + $0x30] sm:$0xff] %v1439
    %1504 = vst [vmem:[#allocation2 + $0x38] sm:$0xff] %v1440
    %1505 = vst [vmem:[#allocation2 + $0x40] sm:$0xff] %v1441
    %1506 = vst [vmem:[#allocation2 + $0x48] sm:$0xff] %v1442
    %1507 = vst [vmem:[#allocation2 + $0x50] sm:$0xff] %v1443
    %1508 = vst [vmem:[#allocation2 + $0x58] sm:$0xff] %v1444
    %1509 = vst [vmem:[#allocation2 + $0x60] sm:$0xff] %v1445
    %1510 = vst [vmem:[#allocation2 + $0x68] sm:$0xff] %v1446
    %1511 = vst [vmem:[#allocation2 + $0x70] sm:$0xff] %v1447
    %1512 = vst [vmem:[#allocation2 + $0x78] sm:$0xff] %v1448
    %1513 = vst [vmem:[#allocation2 + $0x80] sm:$0xff] %v1449
    %1514 = vst [vmem:[#allocation2 + $0x88] sm:$0xff] %v1450
    %1515 = vst [vmem:[#allocation2 + $0x90] sm:$0xff] %v1451
    %1516 = vst [vmem:[#allocation2 + $0x98] sm:$0xff] %v1452
    %1517 = vst [vmem:[#allocation2 + $0xa0] sm:$0xff] %v1453
    %1518 = vst [vmem:[#allocation2 + $0xa8] sm:$0xff] %v1454
    %1519 = vst [vmem:[#allocation2 + $0xb0] sm:$0xff] %v1455
    %1520 = vst [vmem:[#allocation2 + $0xb8] sm:$0xff] %v1456
    %1521 = vst [vmem:[#allocation2 + $0xc0] sm:$0xff] %v1457
    %1522 = vst [vmem:[#allocation2 + $0xc8] sm:$0xff] %v1458
    %1523 = vst [vmem:[#allocation2 + $0xd0] sm:$0xff] %v1459
    %1524 = vst [vmem:[#allocation2 + $0xd8] sm:$0xff] %v1460
    %1525 = vst [vmem:[#allocation2 + $0xe0] sm:$0xff] %v1461
    %1526 = vst [vmem:[#allocation2 + $0xe8] sm:$0xff] %v1462
    %1527 = vst [vmem:[#allocation2 + $0xf0] sm:$0xff] %v1463
    %1528 = vst [vmem:[#allocation2 + $0xf8] sm:$0xff] %v1464
    %1529 = vst [vmem:[#allocation2 + $0x100] sm:$0xff] %v1465
    %1530 = vst [vmem:[#allocation2 + $0x108] sm:$0xff] %v1466
    %1531 = vst [vmem:[#allocation2 + $0x110] sm:$0xff] %v1467
    %1532 = vst [vmem:[#allocation2 + $0x118] sm:$0xff] %v1468
    %1533 = vst [vmem:[#allocation2 + $0x120] sm:$0xff] %v1469
    %1534 = vst [vmem:[#allocation2 + $0x128] sm:$0xff] %v1470
    %1535 = vst [vmem:[#allocation2 + $0x130] sm:$0xff] %v1471
    %1536 = vst [vmem:[#allocation2 + $0x138] sm:$0xff] %v1472
    %1537 = vst [vmem:[#allocation2 + $0x140] sm:$0xff] %v1473
    %1538 = vst [vmem:[#allocation2 + $0x148] sm:$0xff] %v1474
    %1539 = vst [vmem:[#allocation2 + $0x150] sm:$0xff] %v1475
    %1540 = vst [vmem:[#allocation2 + $0x158] sm:$0xff] %v1476
    %1541 = vst [vmem:[#allocation2 + $0x160] sm:$0xff] %v1477
    %1542 = vst [vmem:[#allocation2 + $0x168] sm:$0xff] %v1478
    %1543 = vst [vmem:[#allocation2 + $0x170] sm:$0xff] %v1479
    %1544 = vst [vmem:[#allocation2 + $0x178] sm:$0xff] %v1480
    %1545 = vst [vmem:[#allocation2 + $0x180] sm:$0xff] %v1481
    %1546 = vst [vmem:[#allocation2 + $0x188] sm:$0xff] %v1482
    %1547 = vst [vmem:[#allocation2 + $0x190] sm:$0xff] %v1483
    %1548 = vst [vmem:[#allocation2 + $0x198] sm:$0xff] %v1484
    %1549 = vst [vmem:[#allocation2 + $0x1a0] sm:$0xff] %v1485
    %1550 = vst [vmem:[#allocation2 + $0x1a8] sm:$0xff] %v1486
    %1551 = vst [vmem:[#allocation2 + $0x1b0] sm:$0xff] %v1487
    %1552 = vst [vmem:[#allocation2 + $0x1b8] sm:$0xff] %v1488
    %1553 = vst [vmem:[#allocation2 + $0x1c0] sm:$0xff] %v1489
    %1554 = vst [vmem:[#allocation2 + $0x1c8] sm:$0xff] %v1490
    %1555 = vst [vmem:[#allocation2 + $0x1d0] sm:$0xff] %v1491
    %1556 = vst [vmem:[#allocation2 + $0x1d8] sm:$0xff] %v1492
    %1557 = vst [vmem:[#allocation2 + $0x1e0] sm:$0xff] %v1493
    %1558 = vst [vmem:[#allocation2 + $0x1e8] sm:$0xff] %v1494
    %1559 = vst [vmem:[#allocation2 + $0x1f0] sm:$0xff] %v1495
    %1560 = vst [vmem:[#allocation2 + $0x1f8] sm:$0xff] %v1496
    %v1561 = vld [vmem:[%s9] sm:$0xff]
    %v1562 = vld [vmem:[%s9 + $0x8] sm:$0xff]
    %v1563 = vld [vmem:[%s9 + $0x10] sm:$0xff]
    %v1564 = vld [vmem:[%s9 + $0x18] sm:$0xff]
    %v1565 = vld [vmem:[%s9 + $0x20] sm:$0xff]
    %v1566 = vld [vmem:[%s9 + $0x28] sm:$0xff]
    %v1567 = vld [vmem:[%s9 + $0x30] sm:$0xff]
    %v1568 = vld [vmem:[%s9 + $0x38] sm:$0xff]
    %v1569 = vld [vmem:[%s9 + $0x40] sm:$0xff]
    %v1570 = vld [vmem:[%s9 + $0x48] sm:$0xff]
    %v1571 = vld [vmem:[%s9 + $0x50] sm:$0xff]
    %v1572 = vld [vmem:[%s9 + $0x58] sm:$0xff]
    %v1573 = vld [vmem:[%s9 + $0x60] sm:$0xff]
    %v1574 = vld [vmem:[%s9 + $0x68] sm:$0xff]
    %v1575 = vld [vmem:[%s9 + $0x70] sm:$0xff]
    %v1576 = vld [vmem:[%s9 + $0x78] sm:$0xff]
    %v1577 = vld [vmem:[%s9 + $0x80] sm:$0xff]
    %v1578 = vld [vmem:[%s9 + $0x88] sm:$0xff]
    %v1579 = vld [vmem:[%s9 + $0x90] sm:$0xff]
    %v1580 = vld [vmem:[%s9 + $0x98] sm:$0xff]
    %v1581 = vld [vmem:[%s9 + $0xa0] sm:$0xff]
    %v1582 = vld [vmem:[%s9 + $0xa8] sm:$0xff]
    %v1583 = vld [vmem:[%s9 + $0xb0] sm:$0xff]
    %v1584 = vld [vmem:[%s9 + $0xb8] sm:$0xff]
    %v1585 = vld [vmem:[%s9 + $0xc0] sm:$0xff]
    %v1586 = vld [vmem:[%s9 + $0xc8] sm:$0xff]
    %v1587 = vld [vmem:[%s9 + $0xd0] sm:$0xff]
    %v1588 = vld [vmem:[%s9 + $0xd8] sm:$0xff]
    %v1589 = vld [vmem:[%s9 + $0xe0] sm:$0xff]
    %v1590 = vld [vmem:[%s9 + $0xe8] sm:$0xff]
    %v1591 = vld [vmem:[%s9 + $0xf0] sm:$0xff]
    %v1592 = vld [vmem:[%s9 + $0xf8] sm:$0xff]
    %v1593 = vld [vmem:[%s9 + $0x100] sm:$0xff]
    %v1594 = vld [vmem:[%s9 + $0x108] sm:$0xff]
    %v1595 = vld [vmem:[%s9 + $0x110] sm:$0xff]
    %v1596 = vld [vmem:[%s9 + $0x118] sm:$0xff]
    %v1597 = vld [vmem:[%s9 + $0x120] sm:$0xff]
    %v1598 = vld [vmem:[%s9 + $0x128] sm:$0xff]
    %v1599 = vld [vmem:[%s9 + $0x130] sm:$0xff]
    %v1600 = vld [vmem:[%s9 + $0x138] sm:$0xff]
    %v1601 = vld [vmem:[%s9 + $0x140] sm:$0xff]
    %v1602 = vld [vmem:[%s9 + $0x148] sm:$0xff]
    %v1603 = vld [vmem:[%s9 + $0x150] sm:$0xff]
    %v1604 = vld [vmem:[%s9 + $0x158] sm:$0xff]
    %v1605 = vld [vmem:[%s9 + $0x160] sm:$0xff]
    %v1606 = vld [vmem:[%s9 + $0x168] sm:$0xff]
    %v1607 = vld [vmem:[%s9 + $0x170] sm:$0xff]
    %v1608 = vld [vmem:[%s9 + $0x178] sm:$0xff]
    %v1609 = vld [vmem:[%s9 + $0x180] sm:$0xff]
    %v1610 = vld [vmem:[%s9 + $0x188] sm:$0xff]
    %v1611 = vld [vmem:[%s9 + $0x190] sm:$0xff]
    %v1612 = vld [vmem:[%s9 + $0x198] sm:$0xff]
    %v1613 = vld [vmem:[%s9 + $0x1a0] sm:$0xff]
    %v1614 = vld [vmem:[%s9 + $0x1a8] sm:$0xff]
    %v1615 = vld [vmem:[%s9 + $0x1b0] sm:$0xff]
    %v1616 = vld [vmem:[%s9 + $0x1b8] sm:$0xff]
    %v1617 = vld [vmem:[%s9 + $0x1c0] sm:$0xff]
    %v1618 = vld [vmem:[%s9 + $0x1c8] sm:$0xff]
    %v1619 = vld [vmem:[%s9 + $0x1d0] sm:$0xff]
    %v1620 = vld [vmem:[%s9 + $0x1d8] sm:$0xff]
    %v1621 = vld [vmem:[%s9 + $0x1e0] sm:$0xff]
    %v1622 = vld [vmem:[%s9 + $0x1e8] sm:$0xff]
    %v1623 = vld [vmem:[%s9 + $0x1f0] sm:$0xff]
    %v1624 = vld [vmem:[%s9 + $0x1f8] sm:$0xff]
    %s1625 = smul.u32 0, 4
    %s1626 = smul.addr %s1625, 8
    %s1627 = scalar_lea.vmem [#allocation2], %s1626
    %v1628 = vld [vmem:[%s1627] sm:$0xff]
    %v1629 = vld [vmem:[%s1627 + $0x8] sm:$0xff]
    %v1630 = vld [vmem:[%s1627 + $0x10] sm:$0xff]
    %v1631 = vld [vmem:[%s1627 + $0x18] sm:$0xff]
    %1632 = vmatprep.subr.mxu0 %v1562
    %1633 = vmatpush1.msra.mxu0 %v1561
    %1634 = vmatprep.subr.mxu0 %v1566
    %1635 = vmatpush1.msra.mxu0 %v1565
    %1636 = vmatprep.subr.mxu0 %v1570
    %1637 = vmatpush1.msra.mxu0 %v1569
    %1638 = vmatprep.subr.mxu0 %v1574
    %1639 = vmatpush1.msra.mxu0 %v1573
    %1640 = vmatprep.subr.mxu0 %v1578
    %1641 = vmatpush1.msra.mxu0 %v1577
    %1642 = vmatprep.subr.mxu0 %v1582
    %1643 = vmatpush1.msra.mxu0 %v1581
    %1644 = vmatprep.subr.mxu0 %v1586
    %1645 = vmatpush1.msra.mxu0 %v1585
    %1646 = vmatprep.subr.mxu0 %v1590
    %1647 = vmatpush1.msra.mxu0 %v1589
    %1648 = vmatprep.subr.mxu0 %v1594
    %1649 = vmatpush1.msra.mxu0 %v1593
    %1650 = vmatprep.subr.mxu0 %v1598
    %1651 = vmatpush1.msra.mxu0 %v1597
    %1652 = vmatprep.subr.mxu0 %v1602
    %1653 = vmatpush1.msra.mxu0 %v1601
    %1654 = vmatprep.subr.mxu0 %v1606
    %1655 = vmatpush1.msra.mxu0 %v1605
    %1656 = vmatprep.subr.mxu0 %v1610
    %1657 = vmatpush1.msra.mxu0 %v1609
    %1658 = vmatprep.subr.mxu0 %v1614
    %1659 = vmatpush1.msra.mxu0 %v1613
    %1660 = vmatprep.subr.mxu0 %v1618
    %1661 = vmatpush1.msra.mxu0 %v1617
    %1662 = vmatprep.subr.mxu0 %v1622
    %1663 = vmatpush1.msra.mxu0 %v1621
    %1664 = vmatprep.subr.mxu0 0.0
    %1665 = vmatpush1.msra.mxu0 0.0
    %1666 = vmatprep.subr.mxu0 0.0
    %1667 = vmatpush1.msra.mxu0 0.0
    %1668 = vmatprep.subr.mxu0 0.0
    %1669 = vmatpush1.msra.mxu0 0.0
    %1670 = vmatprep.subr.mxu0 0.0
    %1671 = vmatpush1.msra.mxu0 0.0
    %1672 = vmatprep.subr.mxu0 0.0
    %1673 = vmatpush1.msra.mxu0 0.0
    %1674 = vmatprep.subr.mxu0 0.0
    %1675 = vmatpush1.msra.mxu0 0.0
    %1676 = vmatprep.subr.mxu0 0.0
    %1677 = vmatpush1.msra.mxu0 0.0
    %1678 = vmatprep.subr.mxu0 0.0
    %1679 = vmatpush1.msra.mxu0 0.0
    %1680 = vmatprep.subr.mxu0 0.0
    %1681 = vmatpush1.msra.mxu0 0.0
    %1682 = vmatprep.subr.mxu0 0.0
    %1683 = vmatpush1.msra.mxu0 0.0
    %1684 = vmatprep.subr.mxu0 0.0
    %1685 = vmatpush1.msra.mxu0 0.0
    %1686 = vmatprep.subr.mxu0 0.0
    %1687 = vmatpush1.msra.mxu0 0.0
    %1688 = vmatprep.subr.mxu0 0.0
    %1689 = vmatpush1.msra.mxu0 0.0
    %1690 = vmatprep.subr.mxu0 0.0
    %1691 = vmatpush1.msra.mxu0 0.0
    %1692 = vmatprep.subr.mxu0 0.0
    %1693 = vmatpush1.msra.mxu0 0.0
    %1694 = vmatprep.subr.mxu0 0.0
    %1695 = vmatpush1.msra.mxu0 0.0
    %1696 = vmatprep.mubr.f32.mxu0 0.0
    %1697 = vmatmul.mubr.f32.gmra.mrb[0].mxu0 0.0
    %v1698 = vpop.f32.mrb[0].mxu0
    %v1699 = vadd.f32 0.0, %v1698
    %v1700 = vpop.f32.mrb[0].mxu0
    %v1701 = vadd.f32 0.0, %v1700
    %1702 = vdwg.mxu0
    %1703 = vmatprep.subr.mxu0 %v1564
    %1704 = vmatpush1.msra.mxu0 %v1563
    %1705 = vmatprep.subr.mxu0 %v1568
    %1706 = vmatpush1.msra.mxu0 %v1567
    %1707 = vmatprep.subr.mxu0 %v1572
    %1708 = vmatpush1.msra.mxu0 %v1571
    %1709 = vmatprep.subr.mxu0 %v1576
    %1710 = vmatpush1.msra.mxu0 %v1575
    %1711 = vmatprep.subr.mxu0 %v1580
    %1712 = vmatpush1.msra.mxu0 %v1579
    %1713 = vmatprep.subr.mxu0 %v1584
    %1714 = vmatpush1.msra.mxu0 %v1583
    %1715 = vmatprep.subr.mxu0 %v1588
    %1716 = vmatpush1.msra.mxu0 %v1587
    %1717 = vmatprep.subr.mxu0 %v1592
    %1718 = vmatpush1.msra.mxu0 %v1591
    %1719 = vmatprep.subr.mxu0 %v1596
    %1720 = vmatpush1.msra.mxu0 %v1595
    %1721 = vmatprep.subr.mxu0 %v1600
    %1722 = vmatpush1.msra.mxu0 %v1599
    %1723 = vmatprep.subr.mxu0 %v1604
    %1724 = vmatpush1.msra.mxu0 %v1603
    %1725 = vmatprep.subr.mxu0 %v1608
    %1726 = vmatpush1.msra.mxu0 %v1607
    %1727 = vmatprep.subr.mxu0 %v1612
    %1728 = vmatpush1.msra.mxu0 %v1611
    %1729 = vmatprep.subr.mxu0 %v1616
    %1730 = vmatpush1.msra.mxu0 %v1615
    %1731 = vmatprep.subr.mxu0 %v1620
    %1732 = vmatpush1.msra.mxu0 %v1619
    %1733 = vmatprep.subr.mxu0 %v1624
    %1734 = vmatpush1.msra.mxu0 %v1623
    %1735 = vmatprep.subr.mxu0 0.0
    %1736 = vmatpush1.msra.mxu0 0.0
    %1737 = vmatprep.subr.mxu0 0.0
    %1738 = vmatpush1.msra.mxu0 0.0
    %1739 = vmatprep.subr.mxu0 0.0
    %1740 = vmatpush1.msra.mxu0 0.0
    %1741 = vmatprep.subr.mxu0 0.0
    %1742 = vmatpush1.msra.mxu0 0.0
    %1743 = vmatprep.subr.mxu0 0.0
    %1744 = vmatpush1.msra.mxu0 0.0
    %1745 = vmatprep.subr.mxu0 0.0
    %1746 = vmatpush1.msra.mxu0 0.0
    %1747 = vmatprep.subr.mxu0 0.0
    %1748 = vmatpush1.msra.mxu0 0.0
    %1749 = vmatprep.subr.mxu0 0.0
    %1750 = vmatpush1.msra.mxu0 0.0
    %1751 = vmatprep.subr.mxu0 0.0
    %1752 = vmatpush1.msra.mxu0 0.0
    %1753 = vmatprep.subr.mxu0 0.0
    %1754 = vmatpush1.msra.mxu0 0.0
    %1755 = vmatprep.subr.mxu0 0.0
    %1756 = vmatpush1.msra.mxu0 0.0
    %1757 = vmatprep.subr.mxu0 0.0
    %1758 = vmatpush1.msra.mxu0 0.0
    %1759 = vmatprep.subr.mxu0 0.0
    %1760 = vmatpush1.msra.mxu0 0.0
    %1761 = vmatprep.subr.mxu0 0.0
    %1762 = vmatpush1.msra.mxu0 0.0
    %1763 = vmatprep.subr.mxu0 0.0
    %1764 = vmatpush1.msra.mxu0 0.0
    %1765 = vmatprep.subr.mxu0 0.0
    %1766 = vmatpush1.msra.mxu0 0.0
    %1767 = vmatprep.mubr.f32.mxu0 0.0
    %1768 = vmatmul.mubr.f32.gmra.mrb[0].mxu0 0.0
    %v1769 = vpop.f32.mrb[0].mxu0
    %v1770 = vadd.f32 0.0, %v1769
    %v1771 = vpop.f32.mrb[0].mxu0
    %v1772 = vadd.f32 0.0, %v1771
    %1773 = vdwg.mxu0
    %v1774 = vadd.f32 %v1628, %v1699
    %v1775 = vadd.f32 %v1629, %v1701
    %v1776 = vadd.f32 %v1630, %v1770
    %v1777 = vadd.f32 %v1631, %v1772
    %v1778 = vsub.f32 0.0, %v1774
    %v1779 = vmul.f32 %v1778, 1.442695
    %v1780 = vpow.pop %v1779
    %v1781 = vadd.f32 %v1780, 1.0
    %v1782 = vrcp.pop %v1781
    %v1783 = vmul.f32 1.0, %v1782
    %v1784 = vsub.f32 0.0, %v1775
    %v1785 = vmul.f32 %v1784, 1.442695
    %v1786 = vpow.pop %v1785
    %v1787 = vadd.f32 %v1786, 1.0
    %v1788 = vrcp.pop %v1787
    %v1789 = vmul.f32 1.0, %v1788
    %v1790 = vtanh.pop %v1776
    %v1791 = vsub.f32 0.0, %v1777
    %v1792 = vmul.f32 %v1791, 1.442695
    %v1793 = vpow.pop %v1792
    %v1794 = vadd.f32 %v1793, 1.0
    %v1795 = vrcp.pop %v1794
    %v1796 = vmul.f32 1.0, %v1795
    %v1797 = vmul.f32 %v1789, 0.0
    %v1798 = vmul.f32 %v1783, %v1790
    %v1799 = vadd.f32 %v1797, %v1798
    %v1800 = vtanh.pop %v1799
    %v1801 = vmul.f32 %v1796, %v1800
    %s1802 = smul.u32 1, 4
    %s1803 = smul.addr %s1802, 8
    %s1804 = scalar_lea.vmem [#allocation2], %s1803
    %v1805 = vld [vmem:[%s1804] sm:$0xff]
    %v1806 = vld [vmem:[%s1804 + $0x8] sm:$0xff]
    %v1807 = vld [vmem:[%s1804 + $0x10] sm:$0xff]
    %v1808 = vld [vmem:[%s1804 + $0x18] sm:$0xff]
    %1809 = vmatprep.subr.mxu0 %v1562
    %1810 = vmatpush1.msra.mxu0 %v1561
    %1811 = vmatprep.subr.mxu0 %v1566
    %1812 = vmatpush1.msra.mxu0 %v1565
    %1813 = vmatprep.subr.mxu0 %v1570
    %1814 = vmatpush1.msra.mxu0 %v1569
    %1815 = vmatprep.subr.mxu0 %v1574
    %1816 = vmatpush1.msra.mxu0 %v1573
    %1817 = vmatprep.subr.mxu0 %v1578
    %1818 = vmatpush1.msra.mxu0 %v1577
    %1819 = vmatprep.subr.mxu0 %v1582
    %1820 = vmatpush1.msra.mxu0 %v1581
    %1821 = vmatprep.subr.mxu0 %v1586
    %1822 = vmatpush1.msra.mxu0 %v1585
    %1823 = vmatprep.subr.mxu0 %v1590
    %1824 = vmatpush1.msra.mxu0 %v1589
    %1825 = vmatprep.subr.mxu0 %v1594
    %1826 = vmatpush1.msra.mxu0 %v1593
    %1827 = vmatprep.subr.mxu0 %v1598
    %1828 = vmatpush1.msra.mxu0 %v1597
    %1829 = vmatprep.subr.mxu0 %v1602
    %1830 = vmatpush1.msra.mxu0 %v1601
    %1831 = vmatprep.subr.mxu0 %v1606
    %1832 = vmatpush1.msra.mxu0 %v1605
    %1833 = vmatprep.subr.mxu0 %v1610
    %1834 = vmatpush1.msra.mxu0 %v1609
    %1835 = vmatprep.subr.mxu0 %v1614
    %1836 = vmatpush1.msra.mxu0 %v1613
    %1837 = vmatprep.subr.mxu0 %v1618
    %1838 = vmatpush1.msra.mxu0 %v1617
    %1839 = vmatprep.subr.mxu0 %v1622
    %1840 = vmatpush1.msra.mxu0 %v1621
    %1841 = vmatprep.subr.mxu0 0.0
    %1842 = vmatpush1.msra.mxu0 0.0
    %1843 = vmatprep.subr.mxu0 0.0
    %1844 = vmatpush1.msra.mxu0 0.0
    %1845 = vmatprep.subr.mxu0 0.0
    %1846 = vmatpush1.msra.mxu0 0.0
    %1847 = vmatprep.subr.mxu0 0.0
    %1848 = vmatpush1.msra.mxu0 0.0
    %1849 = vmatprep.subr.mxu0 0.0
    %1850 = vmatpush1.msra.mxu0 0.0
    %1851 = vmatprep.subr.mxu0 0.0
    %1852 = vmatpush1.msra.mxu0 0.0
    %1853 = vmatprep.subr.mxu0 0.0
    %1854 = vmatpush1.msra.mxu0 0.0
    %1855 = vmatprep.subr.mxu0 0.0
    %1856 = vmatpush1.msra.mxu0 0.0
    %1857 = vmatprep.subr.mxu0 0.0
    %1858 = vmatpush1.msra.mxu0 0.0
    %1859 = vmatprep.subr.mxu0 0.0
    %1860 = vmatpush1.msra.mxu0 0.0
    %1861 = vmatprep.subr.mxu0 0.0
    %1862 = vmatpush1.msra.mxu0 0.0
    %1863 = vmatprep.subr.mxu0 0.0
    %1864 = vmatpush1.msra.mxu0 0.0
    %1865 = vmatprep.subr.mxu0 0.0
    %1866 = vmatpush1.msra.mxu0 0.0
    %1867 = vmatprep.subr.mxu0 0.0
    %1868 = vmatpush1.msra.mxu0 0.0
    %1869 = vmatprep.subr.mxu0 0.0
    %1870 = vmatpush1.msra.mxu0 0.0
    %1871 = vmatprep.subr.mxu0 0.0
    %1872 = vmatpush1.msra.mxu0 0.0
    %1873 = vmatprep.mubr.f32.mxu0 0.0
    %1874 = vmatmul.mubr.f32.gmra.mrb[0].mxu0 %v1801
    %v1875 = vpop.f32.mrb[0].mxu0
    %v1876 = vadd.f32 0.0, %v1875
    %v1877 = vpop.f32.mrb[0].mxu0
    %v1878 = vadd.f32 0.0, %v1877
    %1879 = vdwg.mxu0
    %1880 = vmatprep.subr.mxu0 %v1564
    %1881 = vmatpush1.msra.mxu0 %v1563
    %1882 = vmatprep.subr.mxu0 %v1568
    %1883 = vmatpush1.msra.mxu0 %v1567
    %1884 = vmatprep.subr.mxu0 %v1572
    %1885 = vmatpush1.msra.mxu0 %v1571
    %1886 = vmatprep.subr.mxu0 %v1576
    %1887 = vmatpush1.msra.mxu0 %v1575
    %1888 = vmatprep.subr.mxu0 %v1580
    %1889 = vmatpush1.msra.mxu0 %v1579
    %1890 = vmatprep.subr.mxu0 %v1584
    %1891 = vmatpush1.msra.mxu0 %v1583
    %1892 = vmatprep.subr.mxu0 %v1588
    %1893 = vmatpush1.msra.mxu0 %v1587
    %1894 = vmatprep.subr.mxu0 %v1592
    %1895 = vmatpush1.msra.mxu0 %v1591
    %1896 = vmatprep.subr.mxu0 %v1596
    %1897 = vmatpush1.msra.mxu0 %v1595
    %1898 = vmatprep.subr.mxu0 %v1600
    %1899 = vmatpush1.msra.mxu0 %v1599
    %1900 = vmatprep.subr.mxu0 %v1604
    %1901 = vmatpush1.msra.mxu0 %v1603
    %1902 = vmatprep.subr.mxu0 %v1608
    %1903 = vmatpush1.msra.mxu0 %v1607
    %1904 = vmatprep.subr.mxu0 %v1612
    %1905 = vmatpush1.msra.mxu0 %v1611
    %1906 = vmatprep.subr.mxu0 %v1616
    %1907 = vmatpush1.msra.mxu0 %v1615
    %1908 = vmatprep.subr.mxu0 %v1620
    %1909 = vmatpush1.msra.mxu0 %v1619
    %1910 = vmatprep.subr.mxu0 %v1624
    %1911 = vmatpush1.msra.mxu0 %v1623
    %1912 = vmatprep.subr.mxu0 0.0
    %1913 = vmatpush1.msra.mxu0 0.0
    %1914 = vmatprep.subr.mxu0 0.0
    %1915 = vmatpush1.msra.mxu0 0.0
    %1916 = vmatprep.subr.mxu0 0.0
    %1917 = vmatpush1.msra.mxu0 0.0
    %1918 = vmatprep.subr.mxu0 0.0
    %1919 = vmatpush1.msra.mxu0 0.0
    %1920 = vmatprep.subr.mxu0 0.0
    %1921 = vmatpush1.msra.mxu0 0.0
    %1922 = vmatprep.subr.mxu0 0.0
    %1923 = vmatpush1.msra.mxu0 0.0
    %1924 = vmatprep.subr.mxu0 0.0
    %1925 = vmatpush1.msra.mxu0 0.0
    %1926 = vmatprep.subr.mxu0 0.0
    %1927 = vmatpush1.msra.mxu0 0.0
    %1928 = vmatprep.subr.mxu0 0.0
    %1929 = vmatpush1.msra.mxu0 0.0
    %1930 = vmatprep.subr.mxu0 0.0
    %1931 = vmatpush1.msra.mxu0 0.0
    %1932 = vmatprep.subr.mxu0 0.0
    %1933 = vmatpush1.msra.mxu0 0.0
    %1934 = vmatprep.subr.mxu0 0.0
    %1935 = vmatpush1.msra.mxu0 0.0
    %1936 = vmatprep.subr.mxu0 0.0
    %1937 = vmatpush1.msra.mxu0 0.0
    %1938 = vmatprep.subr.mxu0 0.0
    %1939 = vmatpush1.msra.mxu0 0.0
    %1940 = vmatprep.subr.mxu0 0.0
    %1941 = vmatpush1.msra.mxu0 0.0
    %1942 = vmatprep.subr.mxu0 0.0
    %1943 = vmatpush1.msra.mxu0 0.0
    %1944 = vmatprep.mubr.f32.mxu0 0.0
    %1945 = vmatmul.mubr.f32.gmra.mrb[0].mxu0 %v1801
    %v1946 = vpop.f32.mrb[0].mxu0
    %v1947 = vadd.f32 0.0, %v1946
    %v1948 = vpop.f32.mrb[0].mxu0
    %v1949 = vadd.f32 0.0, %v1948
    %1950 = vdwg.mxu0
    %v1951 = vadd.f32 %v1805, %v1876
    %v1952 = vadd.f32 %v1806, %v1878
    %v1953 = vadd.f32 %v1807, %v1947
    %v1954 = vadd.f32 %v1808, %v1949
    %v1955 = vsub.f32 0.0, %v1951
    %v1956 = vmul.f32 %v1955, 1.442695
    %v1957 = vpow.pop %v1956
    %v1958 = vadd.f32 %v1957, 1.0
    %v1959 = vrcp.pop %v1958
    %v1960 = vmul.f32 1.0, %v1959
    %v1961 = vsub.f32 0.0, %v1952
    %v1962 = vmul.f32 %v1961, 1.442695
    %v1963 = vpow.pop %v1962
    %v1964 = vadd.f32 %v1963, 1.0
    %v1965 = vrcp.pop %v1964
    %v1966 = vmul.f32 1.0, %v1965
    %v1967 = vtanh.pop %v1953
    %v1968 = vsub.f32 0.0, %v1954
    %v1969 = vmul.f32 %v1968, 1.442695
    %v1970 = vpow.pop %v1969
    %v1971 = vadd.f32 %v1970, 1.0
    %v1972 = vrcp.pop %v1971
    %v1973 = vmul.f32 1.0, %v1972
    %v1974 = vmul.f32 %v1966, %v1799
    %v1975 = vmul.f32 %v1960, %v1967
    %v1976 = vadd.f32 %v1974, %v1975
    %v1977 = vtanh.pop %v1976
    %v1978 = vmul.f32 %v1973, %v1977
    %s1979 = smul.u32 2, 4
    %s1980 = smul.addr %s1979, 8
    %s1981 = scalar_lea.vmem [#allocation2], %s1980
    %v1982 = vld [vmem:[%s1981] sm:$0xff]
    %v1983 = vld [vmem:[%s1981 + $0x8] sm:$0xff]
    %v1984 = vld [vmem:[%s1981 + $0x10] sm:$0xff]
    %v1985 = vld [vmem:[%s1981 + $0x18] sm:$0xff]
    %1986 = vmatprep.subr.mxu0 %v1562
    %1987 = vmatpush1.msra.mxu0 %v1561
    %1988 = vmatprep.subr.mxu0 %v1566
    %1989 = vmatpush1.msra.mxu0 %v1565
    %1990 = vmatprep.subr.mxu0 %v1570
    %1991 = vmatpush1.msra.mxu0 %v1569
    %1992 = vmatprep.subr.mxu0 %v1574
    %1993 = vmatpush1.msra.mxu0 %v1573
    %1994 = vmatprep.subr.mxu0 %v1578
    %1995 = vmatpush1.msra.mxu0 %v1577
    %1996 = vmatprep.subr.mxu0 %v1582
    %1997 = vmatpush1.msra.mxu0 %v1581
    %1998 = vmatprep.subr.mxu0 %v1586
    %1999 = vmatpush1.msra.mxu0 %v1585
    %2000 = vmatprep.subr.mxu0 %v1590
    %2001 = vmatpush1.msra.mxu0 %v1589
    %2002 = vmatprep.subr.mxu0 %v1594
    %2003 = vmatpush1.msra.mxu0 %v1593
    %2004 = vmatprep.subr.mxu0 %v1598
    %2005 = vmatpush1.msra.mxu0 %v1597
    %2006 = vmatprep.subr.mxu0 %v1602
    %2007 = vmatpush1.msra.mxu0 %v1601
    %2008 = vmatprep.subr.mxu0 %v1606
    %2009 = vmatpush1.msra.mxu0 %v1605
    %2010 = vmatprep.subr.mxu0 %v1610
    %2011 = vmatpush1.msra.mxu0 %v1609
    %2012 = vmatprep.subr.mxu0 %v1614
    %2013 = vmatpush1.msra.mxu0 %v1613
    %2014 = vmatprep.subr.mxu0 %v1618
    %2015 = vmatpush1.msra.mxu0 %v1617
    %2016 = vmatprep.subr.mxu0 %v1622
    %2017 = vmatpush1.msra.mxu0 %v1621
    %2018 = vmatprep.subr.mxu0 0.0
    %2019 = vmatpush1.msra.mxu0 0.0
    %2020 = vmatprep.subr.mxu0 0.0
    %2021 = vmatpush1.msra.mxu0 0.0
    %2022 = vmatprep.subr.mxu0 0.0
    %2023 = vmatpush1.msra.mxu0 0.0
    %2024 = vmatprep.subr.mxu0 0.0
    %2025 = vmatpush1.msra.mxu0 0.0
    %2026 = vmatprep.subr.mxu0 0.0
    %2027 = vmatpush1.msra.mxu0 0.0
    %2028 = vmatprep.subr.mxu0 0.0
    %2029 = vmatpush1.msra.mxu0 0.0
    %2030 = vmatprep.subr.mxu0 0.0
    %2031 = vmatpush1.msra.mxu0 0.0
    %2032 = vmatprep.subr.mxu0 0.0
    %2033 = vmatpush1.msra.mxu0 0.0
    %2034 = vmatprep.subr.mxu0 0.0
    %2035 = vmatpush1.msra.mxu0 0.0
    %2036 = vmatprep.subr.mxu0 0.0
    %2037 = vmatpush1.msra.mxu0 0.0
    %2038 = vmatprep.subr.mxu0 0.0
    %2039 = vmatpush1.msra.mxu0 0.0
    %2040 = vmatprep.subr.mxu0 0.0
    %2041 = vmatpush1.msra.mxu0 0.0
    %2042 = vmatprep.subr.mxu0 0.0
    %2043 = vmatpush1.msra.mxu0 0.0
    %2044 = vmatprep.subr.mxu0 0.0
    %2045 = vmatpush1.msra.mxu0 0.0
    %2046 = vmatprep.subr.mxu0 0.0
    %2047 = vmatpush1.msra.mxu0 0.0
    %2048 = vmatprep.subr.mxu0 0.0
    %2049 = vmatpush1.msra.mxu0 0.0
    %2050 = vmatprep.mubr.f32.mxu0 0.0
    %2051 = vmatmul.mubr.f32.gmra.mrb[0].mxu0 %v1978
    %v2052 = vpop.f32.mrb[0].mxu0
    %v2053 = vadd.f32 0.0, %v2052
    %v2054 = vpop.f32.mrb[0].mxu0
    %v2055 = vadd.f32 0.0, %v2054
    %2056 = vdwg.mxu0
    %2057 = vmatprep.subr.mxu0 %v1564
    %2058 = vmatpush1.msra.mxu0 %v1563
    %2059 = vmatprep.subr.mxu0 %v1568
    %2060 = vmatpush1.msra.mxu0 %v1567
    %2061 = vmatprep.subr.mxu0 %v1572
    %2062 = vmatpush1.msra.mxu0 %v1571
    %2063 = vmatprep.subr.mxu0 %v1576
    %2064 = vmatpush1.msra.mxu0 %v1575
    %2065 = vmatprep.subr.mxu0 %v1580
    %2066 = vmatpush1.msra.mxu0 %v1579
    %2067 = vmatprep.subr.mxu0 %v1584
    %2068 = vmatpush1.msra.mxu0 %v1583
    %2069 = vmatprep.subr.mxu0 %v1588
    %2070 = vmatpush1.msra.mxu0 %v1587
    %2071 = vmatprep.subr.mxu0 %v1592
    %2072 = vmatpush1.msra.mxu0 %v1591
    %2073 = vmatprep.subr.mxu0 %v1596
    %2074 = vmatpush1.msra.mxu0 %v1595
    %2075 = vmatprep.subr.mxu0 %v1600
    %2076 = vmatpush1.msra.mxu0 %v1599
    %2077 = vmatprep.subr.mxu0 %v1604
    %2078 = vmatpush1.msra.mxu0 %v1603
    %2079 = vmatprep.subr.mxu0 %v1608
    %2080 = vmatpush1.msra.mxu0 %v1607
    %2081 = vmatprep.subr.mxu0 %v1612
    %2082 = vmatpush1.msra.mxu0 %v1611
    %2083 = vmatprep.subr.mxu0 %v1616
    %2084 = vmatpush1.msra.mxu0 %v1615
    %2085 = vmatprep.subr.mxu0 %v1620
    %2086 = vmatpush1.msra.mxu0 %v1619
    %2087 = vmatprep.subr.mxu0 %v1624
    %2088 = vmatpush1.msra.mxu0 %v1623
    %2089 = vmatprep.subr.mxu0 0.0
    %2090 = vmatpush1.msra.mxu0 0.0
    %2091 = vmatprep.subr.mxu0 0.0
    %2092 = vmatpush1.msra.mxu0 0.0
    %2093 = vmatprep.subr.mxu0 0.0
    %2094 = vmatpush1.msra.mxu0 0.0
    %2095 = vmatprep.subr.mxu0 0.0
    %2096 = vmatpush1.msra.mxu0 0.0
    %2097 = vmatprep.subr.mxu0 0.0
    %2098 = vmatpush1.msra.mxu0 0.0
    %2099 = vmatprep.subr.mxu0 0.0
    %2100 = vmatpush1.msra.mxu0 0.0
    %2101 = vmatprep.subr.mxu0 0.0
    %2102 = vmatpush1.msra.mxu0 0.0
    %2103 = vmatprep.subr.mxu0 0.0
    %2104 = vmatpush1.msra.mxu0 0.0
    %2105 = vmatprep.subr.mxu0 0.0
    %2106 = vmatpush1.msra.mxu0 0.0
    %2107 = vmatprep.subr.mxu0 0.0
    %2108 = vmatpush1.msra.mxu0 0.0
    %2109 = vmatprep.subr.mxu0 0.0
    %2110 = vmatpush1.msra.mxu0 0.0
    %2111 = vmatprep.subr.mxu0 0.0
    %2112 = vmatpush1.msra.mxu0 0.0
    %2113 = vmatprep.subr.mxu0 0.0
    %2114 = vmatpush1.msra.mxu0 0.0
    %2115 = vmatprep.subr.mxu0 0.0
    %2116 = vmatpush1.msra.mxu0 0.0
    %2117 = vmatprep.subr.mxu0 0.0
    %2118 = vmatpush1.msra.mxu0 0.0
    %2119 = vmatprep.subr.mxu0 0.0
    %2120 = vmatpush1.msra.mxu0 0.0
    %2121 = vmatprep.mubr.f32.mxu0 0.0
    %2122 = vmatmul.mubr.f32.gmra.mrb[0].mxu0 %v1978
    %v2123 = vpop.f32.mrb[0].mxu0
    %v2124 = vadd.f32 0.0, %v2123
    %v2125 = vpop.f32.mrb[0].mxu0
    %v2126 = vadd.f32 0.0, %v2125
    %2127 = vdwg.mxu0
    %v2128 = vadd.f32 %v1982, %v2053
    %v2129 = vadd.f32 %v1983, %v2055
    %v2130 = vadd.f32 %v1984, %v2124
    %v2131 = vadd.f32 %v1985, %v2126
    %v2132 = vsub.f32 0.0, %v2128
    %v2133 = vmul.f32 %v2132, 1.442695
    %v2134 = vpow.pop %v2133
    %v2135 = vadd.f32 %v2134, 1.0
    %v2136 = vrcp.pop %v2135
    %v2137 = vmul.f32 1.0, %v2136
    %v2138 = vsub.f32 0.0, %v2129
    %v2139 = vmul.f32 %v2138, 1.442695
    %v2140 = vpow.pop %v2139
    %v2141 = vadd.f32 %v2140, 1.0
    %v2142 = vrcp.pop %v2141
    %v2143 = vmul.f32 1.0, %v2142
    %v2144 = vtanh.pop %v2130
    %v2145 = vsub.f32 0.0, %v2131
    %v2146 = vmul.f32 %v2145, 1.442695
    %v2147 = vpow.pop %v2146
    %v2148 = vadd.f32 %v2147, 1.0
    %v2149 = vrcp.pop %v2148
    %v2150 = vmul.f32 1.0, %v2149
    %v2151 = vmul.f32 %v2143, %v1976
    %v2152 = vmul.f32 %v2137, %v2144
    %v2153 = vadd.f32 %v2151, %v2152
    %v2154 = vtanh.pop %v2153
    %v2155 = vmul.f32 %v2150, %v2154
    %s2156 = smul.u32 3, 4
    %s2157 = smul.addr %s2156, 8
    %s2158 = scalar_lea.vmem [#allocation2], %s2157
    %v2159 = vld [vmem:[%s2158] sm:$0xff]
    %v2160 = vld [vmem:[%s2158 + $0x8] sm:$0xff]
    %v2161 = vld [vmem:[%s2158 + $0x10] sm:$0xff]
    %v2162 = vld [vmem:[%s2158 + $0x18] sm:$0xff]
    %2163 = vmatprep.subr.mxu0 %v1562
    %2164 = vmatpush1.msra.mxu0 %v1561
    %2165 = vmatprep.subr.mxu0 %v1566
    %2166 = vmatpush1.msra.mxu0 %v1565
    %2167 = vmatprep.subr.mxu0 %v1570
    %2168 = vmatpush1.msra.mxu0 %v1569
    %2169 = vmatprep.subr.mxu0 %v1574
    %2170 = vmatpush1.msra.mxu0 %v1573
    %2171 = vmatprep.subr.mxu0 %v1578
    %2172 = vmatpush1.msra.mxu0 %v1577
    %2173 = vmatprep.subr.mxu0 %v1582
    %2174 = vmatpush1.msra.mxu0 %v1581
    %2175 = vmatprep.subr.mxu0 %v1586
    %2176 = vmatpush1.msra.mxu0 %v1585
    %2177 = vmatprep.subr.mxu0 %v1590
    %2178 = vmatpush1.msra.mxu0 %v1589
    %2179 = vmatprep.subr.mxu0 %v1594
    %2180 = vmatpush1.msra.mxu0 %v1593
    %2181 = vmatprep.subr.mxu0 %v1598
    %2182 = vmatpush1.msra.mxu0 %v1597
    %2183 = vmatprep.subr.mxu0 %v1602
    %2184 = vmatpush1.msra.mxu0 %v1601
    %2185 = vmatprep.subr.mxu0 %v1606
    %2186 = vmatpush1.msra.mxu0 %v1605
    %2187 = vmatprep.subr.mxu0 %v1610
    %2188 = vmatpush1.msra.mxu0 %v1609
    %2189 = vmatprep.subr.mxu0 %v1614
    %2190 = vmatpush1.msra.mxu0 %v1613
    %2191 = vmatprep.subr.mxu0 %v1618
    %2192 = vmatpush1.msra.mxu0 %v1617
    %2193 = vmatprep.subr.mxu0 %v1622
    %2194 = vmatpush1.msra.mxu0 %v1621
    %2195 = vmatprep.subr.mxu0 0.0
    %2196 = vmatpush1.msra.mxu0 0.0
    %2197 = vmatprep.subr.mxu0 0.0
    %2198 = vmatpush1.msra.mxu0 0.0
    %2199 = vmatprep.subr.mxu0 0.0
    %2200 = vmatpush1.msra.mxu0 0.0
    %2201 = vmatprep.subr.mxu0 0.0
    %2202 = vmatpush1.msra.mxu0 0.0
    %2203 = vmatprep.subr.mxu0 0.0
    %2204 = vmatpush1.msra.mxu0 0.0
    %2205 = vmatprep.subr.mxu0 0.0
    %2206 = vmatpush1.msra.mxu0 0.0
    %2207 = vmatprep.subr.mxu0 0.0
    %2208 = vmatpush1.msra.mxu0 0.0
    %2209 = vmatprep.subr.mxu0 0.0
    %2210 = vmatpush1.msra.mxu0 0.0
    %2211 = vmatprep.subr.mxu0 0.0
    %2212 = vmatpush1.msra.mxu0 0.0
    %2213 = vmatprep.subr.mxu0 0.0
    %2214 = vmatpush1.msra.mxu0 0.0
    %2215 = vmatprep.subr.mxu0 0.0
    %2216 = vmatpush1.msra.mxu0 0.0
    %2217 = vmatprep.subr.mxu0 0.0
    %2218 = vmatpush1.msra.mxu0 0.0
    %2219 = vmatprep.subr.mxu0 0.0
    %2220 = vmatpush1.msra.mxu0 0.0
    %2221 = vmatprep.subr.mxu0 0.0
    %2222 = vmatpush1.msra.mxu0 0.0
    %2223 = vmatprep.subr.mxu0 0.0
    %2224 = vmatpush1.msra.mxu0 0.0
    %2225 = vmatprep.subr.mxu0 0.0
    %2226 = vmatpush1.msra.mxu0 0.0
    %2227 = vmatprep.mubr.f32.mxu0 0.0
    %2228 = vmatmul.mubr.f32.gmra.mrb[0].mxu0 %v2155
    %v2229 = vpop.f32.mrb[0].mxu0
    %v2230 = vadd.f32 0.0, %v2229
    %v2231 = vpop.f32.mrb[0].mxu0
    %v2232 = vadd.f32 0.0, %v2231
    %2233 = vdwg.mxu0
    %2234 = vmatprep.subr.mxu0 %v1564
    %2235 = vmatpush1.msra.mxu0 %v1563
    %2236 = vmatprep.subr.mxu0 %v1568
    %2237 = vmatpush1.msra.mxu0 %v1567
    %2238 = vmatprep.subr.mxu0 %v1572
    %2239 = vmatpush1.msra.mxu0 %v1571
    %2240 = vmatprep.subr.mxu0 %v1576
    %2241 = vmatpush1.msra.mxu0 %v1575
    %2242 = vmatprep.subr.mxu0 %v1580
    %2243 = vmatpush1.msra.mxu0 %v1579
    %2244 = vmatprep.subr.mxu0 %v1584
    %2245 = vmatpush1.msra.mxu0 %v1583
    %2246 = vmatprep.subr.mxu0 %v1588
    %2247 = vmatpush1.msra.mxu0 %v1587
    %2248 = vmatprep.subr.mxu0 %v1592
    %2249 = vmatpush1.msra.mxu0 %v1591
    %2250 = vmatprep.subr.mxu0 %v1596
    %2251 = vmatpush1.msra.mxu0 %v1595
    %2252 = vmatprep.subr.mxu0 %v1600
    %2253 = vmatpush1.msra.mxu0 %v1599
    %2254 = vmatprep.subr.mxu0 %v1604
    %2255 = vmatpush1.msra.mxu0 %v1603
    %2256 = vmatprep.subr.mxu0 %v1608
    %2257 = vmatpush1.msra.mxu0 %v1607
    %2258 = vmatprep.subr.mxu0 %v1612
    %2259 = vmatpush1.msra.mxu0 %v1611
    %2260 = vmatprep.subr.mxu0 %v1616
    %2261 = vmatpush1.msra.mxu0 %v1615
    %2262 = vmatprep.subr.mxu0 %v1620
    %2263 = vmatpush1.msra.mxu0 %v1619
    %2264 = vmatprep.subr.mxu0 %v1624
    %2265 = vmatpush1.msra.mxu0 %v1623
    %2266 = vmatprep.subr.mxu0 0.0
    %2267 = vmatpush1.msra.mxu0 0.0
    %2268 = vmatprep.subr.mxu0 0.0
    %2269 = vmatpush1.msra.mxu0 0.0
    %2270 = vmatprep.subr.mxu0 0.0
    %2271 = vmatpush1.msra.mxu0 0.0
    %2272 = vmatprep.subr.mxu0 0.0
    %2273 = vmatpush1.msra.mxu0 0.0
    %2274 = vmatprep.subr.mxu0 0.0
    %2275 = vmatpush1.msra.mxu0 0.0
    %2276 = vmatprep.subr.mxu0 0.0
    %2277 = vmatpush1.msra.mxu0 0.0
    %2278 = vmatprep.subr.mxu0 0.0
    %2279 = vmatpush1.msra.mxu0 0.0
    %2280 = vmatprep.subr.mxu0 0.0
    %2281 = vmatpush1.msra.mxu0 0.0
    %2282 = vmatprep.subr.mxu0 0.0
    %2283 = vmatpush1.msra.mxu0 0.0
    %2284 = vmatprep.subr.mxu0 0.0
    %2285 = vmatpush1.msra.mxu0 0.0
    %2286 = vmatprep.subr.mxu0 0.0
    %2287 = vmatpush1.msra.mxu0 0.0
    %2288 = vmatprep.subr.mxu0 0.0
    %2289 = vmatpush1.msra.mxu0 0.0
    %2290 = vmatprep.subr.mxu0 0.0
    %2291 = vmatpush1.msra.mxu0 0.0
    %2292 = vmatprep.subr.mxu0 0.0
    %2293 = vmatpush1.msra.mxu0 0.0
    %2294 = vmatprep.subr.mxu0 0.0
    %2295 = vmatpush1.msra.mxu0 0.0
    %2296 = vmatprep.subr.mxu0 0.0
    %2297 = vmatpush1.msra.mxu0 0.0
    %2298 = vmatprep.mubr.f32.mxu0 0.0
    %2299 = vmatmul.mubr.f32.gmra.mrb[0].mxu0 %v2155
    %v2300 = vpop.f32.mrb[0].mxu0
    %v2301 = vadd.f32 0.0, %v2300
    %v2302 = vpop.f32.mrb[0].mxu0
    %v2303 = vadd.f32 0.0, %v2302
    %2304 = vdwg.mxu0
    %v2305 = vadd.f32 %v2159, %v2230
    %v2306 = vadd.f32 %v2160, %v2232
    %v2307 = vadd.f32 %v2161, %v2301
    %v2308 = vadd.f32 %v2162, %v2303
    %v2309 = vsub.f32 0.0, %v2305
    %v2310 = vmul.f32 %v2309, 1.442695
    %v2311 = vpow.pop %v2310
    %v2312 = vadd.f32 %v2311, 1.0
    %v2313 = vrcp.pop %v2312
    %v2314 = vmul.f32 1.0, %v2313
    %v2315 = vsub.f32 0.0, %v2306
    %v2316 = vmul.f32 %v2315, 1.442695
    %v2317 = vpow.pop %v2316
    %v2318 = vadd.f32 %v2317, 1.0
    %v2319 = vrcp.pop %v2318
    %v2320 = vmul.f32 1.0, %v2319
    %v2321 = vtanh.pop %v2307
    %v2322 = vsub.f32 0.0, %v2308
    %v2323 = vmul.f32 %v2322, 1.442695
    %v2324 = vpow.pop %v2323
    %v2325 = vadd.f32 %v2324, 1.0
    %v2326 = vrcp.pop %v2325
    %v2327 = vmul.f32 1.0, %v2326
    %v2328 = vmul.f32 %v2320, %v2153
    %v2329 = vmul.f32 %v2314, %v2321
    %v2330 = vadd.f32 %v2328, %v2329
    %v2331 = vtanh.pop %v2330
    %v2332 = vmul.f32 %v2327, %v2331
    %s2333 = smul.u32 4, 4
    %s2334 = smul.addr %s2333, 8
    %s2335 = scalar_lea.vmem [#allocation2], %s2334
    %v2336 = vld [vmem:[%s2335] sm:$0xff]
    %v2337 = vld [vmem:[%s2335 + $0x8] sm:$0xff]
    %v2338 = vld [vmem:[%s2335 + $0x10] sm:$0xff]
    %v2339 = vld [vmem:[%s2335 + $0x18] sm:$0xff]
    %2340 = vmatprep.subr.mxu0 %v1562
    %2341 = vmatpush1.msra.mxu0 %v1561
    %2342 = vmatprep.subr.mxu0 %v1566
    %2343 = vmatpush1.msra.mxu0 %v1565
    %2344 = vmatprep.subr.mxu0 %v1570
    %2345 = vmatpush1.msra.mxu0 %v1569
    %2346 = vmatprep.subr.mxu0 %v1574
    %2347 = vmatpush1.msra.mxu0 %v1573
    %2348 = vmatprep.subr.mxu0 %v1578
    %2349 = vmatpush1.msra.mxu0 %v1577
    %2350 = vmatprep.subr.mxu0 %v1582
    %2351 = vmatpush1.msra.mxu0 %v1581
    %2352 = vmatprep.subr.mxu0 %v1586
    %2353 = vmatpush1.msra.mxu0 %v1585
    %2354 = vmatprep.subr.mxu0 %v1590
    %2355 = vmatpush1.msra.mxu0 %v1589
    %2356 = vmatprep.subr.mxu0 %v1594
    %2357 = vmatpush1.msra.mxu0 %v1593
    %2358 = vmatprep.subr.mxu0 %v1598
    %2359 = vmatpush1.msra.mxu0 %v1597
    %2360 = vmatprep.subr.mxu0 %v1602
    %2361 = vmatpush1.msra.mxu0 %v1601
    %2362 = vmatprep.subr.mxu0 %v1606
    %2363 = vmatpush1.msra.mxu0 %v1605
    %2364 = vmatprep.subr.mxu0 %v1610
    %2365 = vmatpush1.msra.mxu0 %v1609
    %2366 = vmatprep.subr.mxu0 %v1614
    %2367 = vmatpush1.msra.mxu0 %v1613
    %2368 = vmatprep.subr.mxu0 %v1618
    %2369 = vmatpush1.msra.mxu0 %v1617
    %2370 = vmatprep.subr.mxu0 %v1622
    %2371 = vmatpush1.msra.mxu0 %v1621
    %2372 = vmatprep.subr.mxu0 0.0
    %2373 = vmatpush1.msra.mxu0 0.0
    %2374 = vmatprep.subr.mxu0 0.0
    %2375 = vmatpush1.msra.mxu0 0.0
    %2376 = vmatprep.subr.mxu0 0.0
    %2377 = vmatpush1.msra.mxu0 0.0
    %2378 = vmatprep.subr.mxu0 0.0
    %2379 = vmatpush1.msra.mxu0 0.0
    %2380 = vmatprep.subr.mxu0 0.0
    %2381 = vmatpush1.msra.mxu0 0.0
    %2382 = vmatprep.subr.mxu0 0.0
    %2383 = vmatpush1.msra.mxu0 0.0
    %2384 = vmatprep.subr.mxu0 0.0
    %2385 = vmatpush1.msra.mxu0 0.0
    %2386 = vmatprep.subr.mxu0 0.0
    %2387 = vmatpush1.msra.mxu0 0.0
    %2388 = vmatprep.subr.mxu0 0.0
    %2389 = vmatpush1.msra.mxu0 0.0
    %2390 = vmatprep.subr.mxu0 0.0
    %2391 = vmatpush1.msra.mxu0 0.0
    %2392 = vmatprep.subr.mxu0 0.0
    %2393 = vmatpush1.msra.mxu0 0.0
    %2394 = vmatprep.subr.mxu0 0.0
    %2395 = vmatpush1.msra.mxu0 0.0
    %2396 = vmatprep.subr.mxu0 0.0
    %2397 = vmatpush1.msra.mxu0 0.0
    %2398 = vmatprep.subr.mxu0 0.0
    %2399 = vmatpush1.msra.mxu0 0.0
    %2400 = vmatprep.subr.mxu0 0.0
    %2401 = vmatpush1.msra.mxu0 0.0
    %2402 = vmatprep.subr.mxu0 0.0
    %2403 = vmatpush1.msra.mxu0 0.0
    %2404 = vmatprep.mubr.f32.mxu0 0.0
    %2405 = vmatmul.mubr.f32.gmra.mrb[0].mxu0 %v2332
    %v2406 = vpop.f32.mrb[0].mxu0
    %v2407 = vadd.f32 0.0, %v2406
    %v2408 = vpop.f32.mrb[0].mxu0
    %v2409 = vadd.f32 0.0, %v2408
    %2410 = vdwg.mxu0
    %2411 = vmatprep.subr.mxu0 %v1564
    %2412 = vmatpush1.msra.mxu0 %v1563
    %2413 = vmatprep.subr.mxu0 %v1568
    %2414 = vmatpush1.msra.mxu0 %v1567
    %2415 = vmatprep.subr.mxu0 %v1572
    %2416 = vmatpush1.msra.mxu0 %v1571
    %2417 = vmatprep.subr.mxu0 %v1576
    %2418 = vmatpush1.msra.mxu0 %v1575
    %2419 = vmatprep.subr.mxu0 %v1580
    %2420 = vmatpush1.msra.mxu0 %v1579
    %2421 = vmatprep.subr.mxu0 %v1584
    %2422 = vmatpush1.msra.mxu0 %v1583
    %2423 = vmatprep.subr.mxu0 %v1588
    %2424 = vmatpush1.msra.mxu0 %v1587
    %2425 = vmatprep.subr.mxu0 %v1592
    %2426 = vmatpush1.msra.mxu0 %v1591
    %2427 = vmatprep.subr.mxu0 %v1596
    %2428 = vmatpush1.msra.mxu0 %v1595
    %2429 = vmatprep.subr.mxu0 %v1600
    %2430 = vmatpush1.msra.mxu0 %v1599
    %2431 = vmatprep.subr.mxu0 %v1604
    %2432 = vmatpush1.msra.mxu0 %v1603
    %2433 = vmatprep.subr.mxu0 %v1608
    %2434 = vmatpush1.msra.mxu0 %v1607
    %2435 = vmatprep.subr.mxu0 %v1612
    %2436 = vmatpush1.msra.mxu0 %v1611
    %2437 = vmatprep.subr.mxu0 %v1616
    %2438 = vmatpush1.msra.mxu0 %v1615
    %2439 = vmatprep.subr.mxu0 %v1620
    %2440 = vmatpush1.msra.mxu0 %v1619
    %2441 = vmatprep.subr.mxu0 %v1624
    %2442 = vmatpush1.msra.mxu0 %v1623
    %2443 = vmatprep.subr.mxu0 0.0
    %2444 = vmatpush1.msra.mxu0 0.0
    %2445 = vmatprep.subr.mxu0 0.0
    %2446 = vmatpush1.msra.mxu0 0.0
    %2447 = vmatprep.subr.mxu0 0.0
    %2448 = vmatpush1.msra.mxu0 0.0
    %2449 = vmatprep.subr.mxu0 0.0
    %2450 = vmatpush1.msra.mxu0 0.0
    %2451 = vmatprep.subr.mxu0 0.0
    %2452 = vmatpush1.msra.mxu0 0.0
    %2453 = vmatprep.subr.mxu0 0.0
    %2454 = vmatpush1.msra.mxu0 0.0
    %2455 = vmatprep.subr.mxu0 0.0
    %2456 = vmatpush1.msra.mxu0 0.0
    %2457 = vmatprep.subr.mxu0 0.0
    %2458 = vmatpush1.msra.mxu0 0.0
    %2459 = vmatprep.subr.mxu0 0.0
    %2460 = vmatpush1.msra.mxu0 0.0
    %2461 = vmatprep.subr.mxu0 0.0
    %2462 = vmatpush1.msra.mxu0 0.0
    %2463 = vmatprep.subr.mxu0 0.0
    %2464 = vmatpush1.msra.mxu0 0.0
    %2465 = vmatprep.subr.mxu0 0.0
    %2466 = vmatpush1.msra.mxu0 0.0
    %2467 = vmatprep.subr.mxu0 0.0
    %2468 = vmatpush1.msra.mxu0 0.0
    %2469 = vmatprep.subr.mxu0 0.0
    %2470 = vmatpush1.msra.mxu0 0.0
    %2471 = vmatprep.subr.mxu0 0.0
    %2472 = vmatpush1.msra.mxu0 0.0
    %2473 = vmatprep.subr.mxu0 0.0
    %2474 = vmatpush1.msra.mxu0 0.0
    %2475 = vmatprep.mubr.f32.mxu0 0.0
    %2476 = vmatmul.mubr.f32.gmra.mrb[0].mxu0 %v2332
    %v2477 = vpop.f32.mrb[0].mxu0
    %v2478 = vadd.f32 0.0, %v2477
    %v2479 = vpop.f32.mrb[0].mxu0
    %v2480 = vadd.f32 0.0, %v2479
    %2481 = vdwg.mxu0
    %v2482 = vadd.f32 %v2336, %v2407
    %v2483 = vadd.f32 %v2337, %v2409
    %v2484 = vadd.f32 %v2338, %v2478
    %v2485 = vadd.f32 %v2339, %v2480
    %v2486 = vsub.f32 0.0, %v2482
    %v2487 = vmul.f32 %v2486, 1.442695
    %v2488 = vpow.pop %v2487
    %v2489 = vadd.f32 %v2488, 1.0
    %v2490 = vrcp.pop %v2489
    %v2491 = vmul.f32 1.0, %v2490
    %v2492 = vsub.f32 0.0, %v2483
    %v2493 = vmul.f32 %v2492, 1.442695
    %v2494 = vpow.pop %v2493
    %v2495 = vadd.f32 %v2494, 1.0
    %v2496 = vrcp.pop %v2495
    %v2497 = vmul.f32 1.0, %v2496
    %v2498 = vtanh.pop %v2484
    %v2499 = vsub.f32 0.0, %v2485
    %v2500 = vmul.f32 %v2499, 1.442695
    %v2501 = vpow.pop %v2500
    %v2502 = vadd.f32 %v2501, 1.0
    %v2503 = vrcp.pop %v2502
    %v2504 = vmul.f32 1.0, %v2503
    %v2505 = vmul.f32 %v2497, %v2330
    %v2506 = vmul.f32 %v2491, %v2498
    %v2507 = vadd.f32 %v2505, %v2506
    %v2508 = vtanh.pop %v2507
    %v2509 = vmul.f32 %v2504, %v2508
    %s2510 = smul.u32 5, 4
    %s2511 = smul.addr %s2510, 8
    %s2512 = scalar_lea.vmem [#allocation2], %s2511
    %v2513 = vld [vmem:[%s2512] sm:$0xff]
    %v2514 = vld [vmem:[%s2512 + $0x8] sm:$0xff]
    %v2515 = vld [vmem:[%s2512 + $0x10] sm:$0xff]
    %v2516 = vld [vmem:[%s2512 + $0x18] sm:$0xff]
    %2517 = vmatprep.subr.mxu0 %v1562
    %2518 = vmatpush1.msra.mxu0 %v1561
    %2519 = vmatprep.subr.mxu0 %v1566
    %2520 = vmatpush1.msra.mxu0 %v1565
    %2521 = vmatprep.subr.mxu0 %v1570
    %2522 = vmatpush1.msra.mxu0 %v1569
    %2523 = vmatprep.subr.mxu0 %v1574
    %2524 = vmatpush1.msra.mxu0 %v1573
    %2525 = vmatprep.subr.mxu0 %v1578
    %2526 = vmatpush1.msra.mxu0 %v1577
    %2527 = vmatprep.subr.mxu0 %v1582
    %2528 = vmatpush1.msra.mxu0 %v1581
    %2529 = vmatprep.subr.mxu0 %v1586
    %2530 = vmatpush1.msra.mxu0 %v1585
    %2531 = vmatprep.subr.mxu0 %v1590
    %2532 = vmatpush1.msra.mxu0 %v1589
    %2533 = vmatprep.subr.mxu0 %v1594
    %2534 = vmatpush1.msra.mxu0 %v1593
    %2535 = vmatprep.subr.mxu0 %v1598
    %2536 = vmatpush1.msra.mxu0 %v1597
    %2537 = vmatprep.subr.mxu0 %v1602
    %2538 = vmatpush1.msra.mxu0 %v1601
    %2539 = vmatprep.subr.mxu0 %v1606
    %2540 = vmatpush1.msra.mxu0 %v1605
    %2541 = vmatprep.subr.mxu0 %v1610
    %2542 = vmatpush1.msra.mxu0 %v1609
    %2543 = vmatprep.subr.mxu0 %v1614
    %2544 = vmatpush1.msra.mxu0 %v1613
    %2545 = vmatprep.subr.mxu0 %v1618
    %2546 = vmatpush1.msra.mxu0 %v1617
    %2547 = vmatprep.subr.mxu0 %v1622
    %2548 = vmatpush1.msra.mxu0 %v1621
    %2549 = vmatprep.subr.mxu0 0.0
    %2550 = vmatpush1.msra.mxu0 0.0
    %2551 = vmatprep.subr.mxu0 0.0
    %2552 = vmatpush1.msra.mxu0 0.0
    %2553 = vmatprep.subr.mxu0 0.0
    %2554 = vmatpush1.msra.mxu0 0.0
    %2555 = vmatprep.subr.mxu0 0.0
    %2556 = vmatpush1.msra.mxu0 0.0
    %2557 = vmatprep.subr.mxu0 0.0
    %2558 = vmatpush1.msra.mxu0 0.0
    %2559 = vmatprep.subr.mxu0 0.0
    %2560 = vmatpush1.msra.mxu0 0.0
    %2561 = vmatprep.subr.mxu0 0.0
    %2562 = vmatpush1.msra.mxu0 0.0
    %2563 = vmatprep.subr.mxu0 0.0
    %2564 = vmatpush1.msra.mxu0 0.0
    %2565 = vmatprep.subr.mxu0 0.0
    %2566 = vmatpush1.msra.mxu0 0.0
    %2567 = vmatprep.subr.mxu0 0.0
    %2568 = vmatpush1.msra.mxu0 0.0
    %2569 = vmatprep.subr.mxu0 0.0
    %2570 = vmatpush1.msra.mxu0 0.0
    %2571 = vmatprep.subr.mxu0 0.0
    %2572 = vmatpush1.msra.mxu0 0.0
    %2573 = vmatprep.subr.mxu0 0.0
    %2574 = vmatpush1.msra.mxu0 0.0
    %2575 = vmatprep.subr.mxu0 0.0
    %2576 = vmatpush1.msra.mxu0 0.0
    %2577 = vmatprep.subr.mxu0 0.0
    %2578 = vmatpush1.msra.mxu0 0.0
    %2579 = vmatprep.subr.mxu0 0.0
    %2580 = vmatpush1.msra.mxu0 0.0
    %2581 = vmatprep.mubr.f32.mxu0 0.0
    %2582 = vmatmul.mubr.f32.gmra.mrb[0].mxu0 %v2509
    %v2583 = vpop.f32.mrb[0].mxu0
    %v2584 = vadd.f32 0.0, %v2583
    %v2585 = vpop.f32.mrb[0].mxu0
    %v2586 = vadd.f32 0.0, %v2585
    %2587 = vdwg.mxu0
    %2588 = vmatprep.subr.mxu0 %v1564
    %2589 = vmatpush1.msra.mxu0 %v1563
    %2590 = vmatprep.subr.mxu0 %v1568
    %2591 = vmatpush1.msra.mxu0 %v1567
    %2592 = vmatprep.subr.mxu0 %v1572
    %2593 = vmatpush1.msra.mxu0 %v1571
    %2594 = vmatprep.subr.mxu0 %v1576
    %2595 = vmatpush1.msra.mxu0 %v1575
    %2596 = vmatprep.subr.mxu0 %v1580
    %2597 = vmatpush1.msra.mxu0 %v1579
    %2598 = vmatprep.subr.mxu0 %v1584
    %2599 = vmatpush1.msra.mxu0 %v1583
    %2600 = vmatprep.subr.mxu0 %v1588
    %2601 = vmatpush1.msra.mxu0 %v1587
    %2602 = vmatprep.subr.mxu0 %v1592
    %2603 = vmatpush1.msra.mxu0 %v1591
    %2604 = vmatprep.subr.mxu0 %v1596
    %2605 = vmatpush1.msra.mxu0 %v1595
    %2606 = vmatprep.subr.mxu0 %v1600
    %2607 = vmatpush1.msra.mxu0 %v1599
    %2608 = vmatprep.subr.mxu0 %v1604
    %2609 = vmatpush1.msra.mxu0 %v1603
    %2610 = vmatprep.subr.mxu0 %v1608
    %2611 = vmatpush1.msra.mxu0 %v1607
    %2612 = vmatprep.subr.mxu0 %v1612
    %2613 = vmatpush1.msra.mxu0 %v1611
    %2614 = vmatprep.subr.mxu0 %v1616
    %2615 = vmatpush1.msra.mxu0 %v1615
    %2616 = vmatprep.subr.mxu0 %v1620
    %2617 = vmatpush1.msra.mxu0 %v1619
    %2618 = vmatprep.subr.mxu0 %v1624
    %2619 = vmatpush1.msra.mxu0 %v1623
    %2620 = vmatprep.subr.mxu0 0.0
    %2621 = vmatpush1.msra.mxu0 0.0
    %2622 = vmatprep.subr.mxu0 0.0
    %2623 = vmatpush1.msra.mxu0 0.0
    %2624 = vmatprep.subr.mxu0 0.0
    %2625 = vmatpush1.msra.mxu0 0.0
    %2626 = vmatprep.subr.mxu0 0.0
    %2627 = vmatpush1.msra.mxu0 0.0
    %2628 = vmatprep.subr.mxu0 0.0
    %2629 = vmatpush1.msra.mxu0 0.0
    %2630 = vmatprep.subr.mxu0 0.0
    %2631 = vmatpush1.msra.mxu0 0.0
    %2632 = vmatprep.subr.mxu0 0.0
    %2633 = vmatpush1.msra.mxu0 0.0
    %2634 = vmatprep.subr.mxu0 0.0
    %2635 = vmatpush1.msra.mxu0 0.0
    %2636 = vmatprep.subr.mxu0 0.0
    %2637 = vmatpush1.msra.mxu0 0.0
    %2638 = vmatprep.subr.mxu0 0.0
    %2639 = vmatpush1.msra.mxu0 0.0
    %2640 = vmatprep.subr.mxu0 0.0
    %2641 = vmatpush1.msra.mxu0 0.0
    %2642 = vmatprep.subr.mxu0 0.0
    %2643 = vmatpush1.msra.mxu0 0.0
    %2644 = vmatprep.subr.mxu0 0.0
    %2645 = vmatpush1.msra.mxu0 0.0
    %2646 = vmatprep.subr.mxu0 0.0
    %2647 = vmatpush1.msra.mxu0 0.0
    %2648 = vmatprep.subr.mxu0 0.0
    %2649 = vmatpush1.msra.mxu0 0.0
    %2650 = vmatprep.subr.mxu0 0.0
    %2651 = vmatpush1.msra.mxu0 0.0
    %2652 = vmatprep.mubr.f32.mxu0 0.0
    %2653 = vmatmul.mubr.f32.gmra.mrb[0].mxu0 %v2509
    %v2654 = vpop.f32.mrb[0].mxu0
    %v2655 = vadd.f32 0.0, %v2654
    %v2656 = vpop.f32.mrb[0].mxu0
    %v2657 = vadd.f32 0.0, %v2656
    %2658 = vdwg.mxu0
    %v2659 = vadd.f32 %v2513, %v2584
    %v2660 = vadd.f32 %v2514, %v2586
    %v2661 = vadd.f32 %v2515, %v2655
    %v2662 = vadd.f32 %v2516, %v2657
    %v2663 = vsub.f32 0.0, %v2659
    %v2664 = vmul.f32 %v2663, 1.442695
    %v2665 = vpow.pop %v2664
    %v2666 = vadd.f32 %v2665, 1.0
    %v2667 = vrcp.pop %v2666
    %v2668 = vmul.f32 1.0, %v2667
    %v2669 = vsub.f32 0.0, %v2660
    %v2670 = vmul.f32 %v2669, 1.442695
    %v2671 = vpow.pop %v2670
    %v2672 = vadd.f32 %v2671, 1.0
    %v2673 = vrcp.pop %v2672
    %v2674 = vmul.f32 1.0, %v2673
    %v2675 = vtanh.pop %v2661
    %v2676 = vsub.f32 0.0, %v2662
    %v2677 = vmul.f32 %v2676, 1.442695
    %v2678 = vpow.pop %v2677
    %v2679 = vadd.f32 %v2678, 1.0
    %v2680 = vrcp.pop %v2679
    %v2681 = vmul.f32 1.0, %v2680
    %v2682 = vmul.f32 %v2674, %v2507
    %v2683 = vmul.f32 %v2668, %v2675
    %v2684 = vadd.f32 %v2682, %v2683
    %v2685 = vtanh.pop %v2684
    %v2686 = vmul.f32 %v2681, %v2685
    %s2687 = smul.u32 6, 4
    %s2688 = smul.addr %s2687, 8
    %s2689 = scalar_lea.vmem [#allocation2], %s2688
    %v2690 = vld [vmem:[%s2689] sm:$0xff]
    %v2691 = vld [vmem:[%s2689 + $0x8] sm:$0xff]
    %v2692 = vld [vmem:[%s2689 + $0x10] sm:$0xff]
    %v2693 = vld [vmem:[%s2689 + $0x18] sm:$0xff]
    %2694 = vmatprep.subr.mxu0 %v1562
    %2695 = vmatpush1.msra.mxu0 %v1561
    %2696 = vmatprep.subr.mxu0 %v1566
    %2697 = vmatpush1.msra.mxu0 %v1565
    %2698 = vmatprep.subr.mxu0 %v1570
    %2699 = vmatpush1.msra.mxu0 %v1569
    %2700 = vmatprep.subr.mxu0 %v1574
    %2701 = vmatpush1.msra.mxu0 %v1573
    %2702 = vmatprep.subr.mxu0 %v1578
    %2703 = vmatpush1.msra.mxu0 %v1577
    %2704 = vmatprep.subr.mxu0 %v1582
    %2705 = vmatpush1.msra.mxu0 %v1581
    %2706 = vmatprep.subr.mxu0 %v1586
    %2707 = vmatpush1.msra.mxu0 %v1585
    %2708 = vmatprep.subr.mxu0 %v1590
    %2709 = vmatpush1.msra.mxu0 %v1589
    %2710 = vmatprep.subr.mxu0 %v1594
    %2711 = vmatpush1.msra.mxu0 %v1593
    %2712 = vmatprep.subr.mxu0 %v1598
    %2713 = vmatpush1.msra.mxu0 %v1597
    %2714 = vmatprep.subr.mxu0 %v1602
    %2715 = vmatpush1.msra.mxu0 %v1601
    %2716 = vmatprep.subr.mxu0 %v1606
    %2717 = vmatpush1.msra.mxu0 %v1605
    %2718 = vmatprep.subr.mxu0 %v1610
    %2719 = vmatpush1.msra.mxu0 %v1609
    %2720 = vmatprep.subr.mxu0 %v1614
    %2721 = vmatpush1.msra.mxu0 %v1613
    %2722 = vmatprep.subr.mxu0 %v1618
    %2723 = vmatpush1.msra.mxu0 %v1617
    %2724 = vmatprep.subr.mxu0 %v1622
    %2725 = vmatpush1.msra.mxu0 %v1621
    %2726 = vmatprep.subr.mxu0 0.0
    %2727 = vmatpush1.msra.mxu0 0.0
    %2728 = vmatprep.subr.mxu0 0.0
    %2729 = vmatpush1.msra.mxu0 0.0
    %2730 = vmatprep.subr.mxu0 0.0
    %2731 = vmatpush1.msra.mxu0 0.0
    %2732 = vmatprep.subr.mxu0 0.0
    %2733 = vmatpush1.msra.mxu0 0.0
    %2734 = vmatprep.subr.mxu0 0.0
    %2735 = vmatpush1.msra.mxu0 0.0
    %2736 = vmatprep.subr.mxu0 0.0
    %2737 = vmatpush1.msra.mxu0 0.0
    %2738 = vmatprep.subr.mxu0 0.0
    %2739 = vmatpush1.msra.mxu0 0.0
    %2740 = vmatprep.subr.mxu0 0.0
    %2741 = vmatpush1.msra.mxu0 0.0
    %2742 = vmatprep.subr.mxu0 0.0
    %2743 = vmatpush1.msra.mxu0 0.0
    %2744 = vmatprep.subr.mxu0 0.0
    %2745 = vmatpush1.msra.mxu0 0.0
    %2746 = vmatprep.subr.mxu0 0.0
    %2747 = vmatpush1.msra.mxu0 0.0
    %2748 = vmatprep.subr.mxu0 0.0
    %2749 = vmatpush1.msra.mxu0 0.0
    %2750 = vmatprep.subr.mxu0 0.0
    %2751 = vmatpush1.msra.mxu0 0.0
    %2752 = vmatprep.subr.mxu0 0.0
    %2753 = vmatpush1.msra.mxu0 0.0
    %2754 = vmatprep.subr.mxu0 0.0
    %2755 = vmatpush1.msra.mxu0 0.0
    %2756 = vmatprep.subr.mxu0 0.0
    %2757 = vmatpush1.msra.mxu0 0.0
    %2758 = vmatprep.mubr.f32.mxu0 0.0
    %2759 = vmatmul.mubr.f32.gmra.mrb[0].mxu0 %v2686
    %v2760 = vpop.f32.mrb[0].mxu0
    %v2761 = vadd.f32 0.0, %v2760
    %v2762 = vpop.f32.mrb[0].mxu0
    %v2763 = vadd.f32 0.0, %v2762
    %2764 = vdwg.mxu0
    %2765 = vmatprep.subr.mxu0 %v1564
    %2766 = vmatpush1.msra.mxu0 %v1563
    %2767 = vmatprep.subr.mxu0 %v1568
    %2768 = vmatpush1.msra.mxu0 %v1567
    %2769 = vmatprep.subr.mxu0 %v1572
    %2770 = vmatpush1.msra.mxu0 %v1571
    %2771 = vmatprep.subr.mxu0 %v1576
    %2772 = vmatpush1.msra.mxu0 %v1575
    %2773 = vmatprep.subr.mxu0 %v1580
    %2774 = vmatpush1.msra.mxu0 %v1579
    %2775 = vmatprep.subr.mxu0 %v1584
    %2776 = vmatpush1.msra.mxu0 %v1583
    %2777 = vmatprep.subr.mxu0 %v1588
    %2778 = vmatpush1.msra.mxu0 %v1587
    %2779 = vmatprep.subr.mxu0 %v1592
    %2780 = vmatpush1.msra.mxu0 %v1591
    %2781 = vmatprep.subr.mxu0 %v1596
    %2782 = vmatpush1.msra.mxu0 %v1595
    %2783 = vmatprep.subr.mxu0 %v1600
    %2784 = vmatpush1.msra.mxu0 %v1599
    %2785 = vmatprep.subr.mxu0 %v1604
    %2786 = vmatpush1.msra.mxu0 %v1603
    %2787 = vmatprep.subr.mxu0 %v1608
    %2788 = vmatpush1.msra.mxu0 %v1607
    %2789 = vmatprep.subr.mxu0 %v1612
    %2790 = vmatpush1.msra.mxu0 %v1611
    %2791 = vmatprep.subr.mxu0 %v1616
    %2792 = vmatpush1.msra.mxu0 %v1615
    %2793 = vmatprep.subr.mxu0 %v1620
    %2794 = vmatpush1.msra.mxu0 %v1619
    %2795 = vmatprep.subr.mxu0 %v1624
    %2796 = vmatpush1.msra.mxu0 %v1623
    %2797 = vmatprep.subr.mxu0 0.0
    %2798 = vmatpush1.msra.mxu0 0.0
    %2799 = vmatprep.subr.mxu0 0.0
    %2800 = vmatpush1.msra.mxu0 0.0
    %2801 = vmatprep.subr.mxu0 0.0
    %2802 = vmatpush1.msra.mxu0 0.0
    %2803 = vmatprep.subr.mxu0 0.0
    %2804 = vmatpush1.msra.mxu0 0.0
    %2805 = vmatprep.subr.mxu0 0.0
    %2806 = vmatpush1.msra.mxu0 0.0
    %2807 = vmatprep.subr.mxu0 0.0
    %2808 = vmatpush1.msra.mxu0 0.0
    %2809 = vmatprep.subr.mxu0 0.0
    %2810 = vmatpush1.msra.mxu0 0.0
    %2811 = vmatprep.subr.mxu0 0.0
    %2812 = vmatpush1.msra.mxu0 0.0
    %2813 = vmatprep.subr.mxu0 0.0
    %2814 = vmatpush1.msra.mxu0 0.0
    %2815 = vmatprep.subr.mxu0 0.0
    %2816 = vmatpush1.msra.mxu0 0.0
    %2817 = vmatprep.subr.mxu0 0.0
    %2818 = vmatpush1.msra.mxu0 0.0
    %2819 = vmatprep.subr.mxu0 0.0
    %2820 = vmatpush1.msra.mxu0 0.0
    %2821 = vmatprep.subr.mxu0 0.0
    %2822 = vmatpush1.msra.mxu0 0.0
    %2823 = vmatprep.subr.mxu0 0.0
    %2824 = vmatpush1.msra.mxu0 0.0
    %2825 = vmatprep.subr.mxu0 0.0
    %2826 = vmatpush1.msra.mxu0 0.0
    %2827 = vmatprep.subr.mxu0 0.0
    %2828 = vmatpush1.msra.mxu0 0.0
    %2829 = vmatprep.mubr.f32.mxu0 0.0
    %2830 = vmatmul.mubr.f32.gmra.mrb[0].mxu0 %v2686
    %v2831 = vpop.f32.mrb[0].mxu0
    %v2832 = vadd.f32 0.0, %v2831
    %v2833 = vpop.f32.mrb[0].mxu0
    %v2834 = vadd.f32 0.0, %v2833
    %2835 = vdwg.mxu0
    %v2836 = vadd.f32 %v2690, %v2761
    %v2837 = vadd.f32 %v2691, %v2763
    %v2838 = vadd.f32 %v2692, %v2832
    %v2839 = vadd.f32 %v2693, %v2834
    %v2840 = vsub.f32 0.0, %v2836
    %v2841 = vmul.f32 %v2840, 1.442695
    %v2842 = vpow.pop %v2841
    %v2843 = vadd.f32 %v2842, 1.0
    %v2844 = vrcp.pop %v2843
    %v2845 = vmul.f32 1.0, %v2844
    %v2846 = vsub.f32 0.0, %v2837
    %v2847 = vmul.f32 %v2846, 1.442695
    %v2848 = vpow.pop %v2847
    %v2849 = vadd.f32 %v2848, 1.0
    %v2850 = vrcp.pop %v2849
    %v2851 = vmul.f32 1.0, %v2850
    %v2852 = vtanh.pop %v2838
    %v2853 = vsub.f32 0.0, %v2839
    %v2854 = vmul.f32 %v2853, 1.442695
    %v2855 = vpow.pop %v2854
    %v2856 = vadd.f32 %v2855, 1.0
    %v2857 = vrcp.pop %v2856
    %v2858 = vmul.f32 1.0, %v2857
    %v2859 = vmul.f32 %v2851, %v2684
    %v2860 = vmul.f32 %v2845, %v2852
    %v2861 = vadd.f32 %v2859, %v2860
    %v2862 = vtanh.pop %v2861
    %v2863 = vmul.f32 %v2858, %v2862
    %s2864 = smul.u32 7, 4
    %s2865 = smul.addr %s2864, 8
    %s2866 = scalar_lea.vmem [#allocation2], %s2865
    %v2867 = vld [vmem:[%s2866] sm:$0xff]
    %v2868 = vld [vmem:[%s2866 + $0x8] sm:$0xff]
    %v2869 = vld [vmem:[%s2866 + $0x10] sm:$0xff]
    %v2870 = vld [vmem:[%s2866 + $0x18] sm:$0xff]
    %2871 = vmatprep.subr.mxu0 %v1562
    %2872 = vmatpush1.msra.mxu0 %v1561
    %2873 = vmatprep.subr.mxu0 %v1566
    %2874 = vmatpush1.msra.mxu0 %v1565
    %2875 = vmatprep.subr.mxu0 %v1570
    %2876 = vmatpush1.msra.mxu0 %v1569
    %2877 = vmatprep.subr.mxu0 %v1574
    %2878 = vmatpush1.msra.mxu0 %v1573
    %2879 = vmatprep.subr.mxu0 %v1578
    %2880 = vmatpush1.msra.mxu0 %v1577
    %2881 = vmatprep.subr.mxu0 %v1582
    %2882 = vmatpush1.msra.mxu0 %v1581
    %2883 = vmatprep.subr.mxu0 %v1586
    %2884 = vmatpush1.msra.mxu0 %v1585
    %2885 = vmatprep.subr.mxu0 %v1590
    %2886 = vmatpush1.msra.mxu0 %v1589
    %2887 = vmatprep.subr.mxu0 %v1594
    %2888 = vmatpush1.msra.mxu0 %v1593
    %2889 = vmatprep.subr.mxu0 %v1598
    %2890 = vmatpush1.msra.mxu0 %v1597
    %2891 = vmatprep.subr.mxu0 %v1602
    %2892 = vmatpush1.msra.mxu0 %v1601
    %2893 = vmatprep.subr.mxu0 %v1606
    %2894 = vmatpush1.msra.mxu0 %v1605
    %2895 = vmatprep.subr.mxu0 %v1610
    %2896 = vmatpush1.msra.mxu0 %v1609
    %2897 = vmatprep.subr.mxu0 %v1614
    %2898 = vmatpush1.msra.mxu0 %v1613
    %2899 = vmatprep.subr.mxu0 %v1618
    %2900 = vmatpush1.msra.mxu0 %v1617
    %2901 = vmatprep.subr.mxu0 %v1622
    %2902 = vmatpush1.msra.mxu0 %v1621
    %2903 = vmatprep.subr.mxu0 0.0
    %2904 = vmatpush1.msra.mxu0 0.0
    %2905 = vmatprep.subr.mxu0 0.0
    %2906 = vmatpush1.msra.mxu0 0.0
    %2907 = vmatprep.subr.mxu0 0.0
    %2908 = vmatpush1.msra.mxu0 0.0
    %2909 = vmatprep.subr.mxu0 0.0
    %2910 = vmatpush1.msra.mxu0 0.0
    %2911 = vmatprep.subr.mxu0 0.0
    %2912 = vmatpush1.msra.mxu0 0.0
    %2913 = vmatprep.subr.mxu0 0.0
    %2914 = vmatpush1.msra.mxu0 0.0
    %2915 = vmatprep.subr.mxu0 0.0
    %2916 = vmatpush1.msra.mxu0 0.0
    %2917 = vmatprep.subr.mxu0 0.0
    %2918 = vmatpush1.msra.mxu0 0.0
    %2919 = vmatprep.subr.mxu0 0.0
    %2920 = vmatpush1.msra.mxu0 0.0
    %2921 = vmatprep.subr.mxu0 0.0
    %2922 = vmatpush1.msra.mxu0 0.0
    %2923 = vmatprep.subr.mxu0 0.0
    %2924 = vmatpush1.msra.mxu0 0.0
    %2925 = vmatprep.subr.mxu0 0.0
    %2926 = vmatpush1.msra.mxu0 0.0
    %2927 = vmatprep.subr.mxu0 0.0
    %2928 = vmatpush1.msra.mxu0 0.0
    %2929 = vmatprep.subr.mxu0 0.0
    %2930 = vmatpush1.msra.mxu0 0.0
    %2931 = vmatprep.subr.mxu0 0.0
    %2932 = vmatpush1.msra.mxu0 0.0
    %2933 = vmatprep.subr.mxu0 0.0
    %2934 = vmatpush1.msra.mxu0 0.0
    %2935 = vmatprep.mubr.f32.mxu0 0.0
    %2936 = vmatmul.mubr.f32.gmra.mrb[0].mxu0 %v2863
    %v2937 = vpop.f32.mrb[0].mxu0
    %v2938 = vadd.f32 0.0, %v2937
    %v2939 = vpop.f32.mrb[0].mxu0
    %v2940 = vadd.f32 0.0, %v2939
    %2941 = vdwg.mxu0
    %2942 = vmatprep.subr.mxu0 %v1564
    %2943 = vmatpush1.msra.mxu0 %v1563
    %2944 = vmatprep.subr.mxu0 %v1568
    %2945 = vmatpush1.msra.mxu0 %v1567
    %2946 = vmatprep.subr.mxu0 %v1572
    %2947 = vmatpush1.msra.mxu0 %v1571
    %2948 = vmatprep.subr.mxu0 %v1576
    %2949 = vmatpush1.msra.mxu0 %v1575
    %2950 = vmatprep.subr.mxu0 %v1580
    %2951 = vmatpush1.msra.mxu0 %v1579
    %2952 = vmatprep.subr.mxu0 %v1584
    %2953 = vmatpush1.msra.mxu0 %v1583
    %2954 = vmatprep.subr.mxu0 %v1588
    %2955 = vmatpush1.msra.mxu0 %v1587
    %2956 = vmatprep.subr.mxu0 %v1592
    %2957 = vmatpush1.msra.mxu0 %v1591
    %2958 = vmatprep.subr.mxu0 %v1596
    %2959 = vmatpush1.msra.mxu0 %v1595
    %2960 = vmatprep.subr.mxu0 %v1600
    %2961 = vmatpush1.msra.mxu0 %v1599
    %2962 = vmatprep.subr.mxu0 %v1604
    %2963 = vmatpush1.msra.mxu0 %v1603
    %2964 = vmatprep.subr.mxu0 %v1608
    %2965 = vmatpush1.msra.mxu0 %v1607
    %2966 = vmatprep.subr.mxu0 %v1612
    %2967 = vmatpush1.msra.mxu0 %v1611
    %2968 = vmatprep.subr.mxu0 %v1616
    %2969 = vmatpush1.msra.mxu0 %v1615
    %2970 = vmatprep.subr.mxu0 %v1620
    %2971 = vmatpush1.msra.mxu0 %v1619
    %2972 = vmatprep.subr.mxu0 %v1624
    %2973 = vmatpush1.msra.mxu0 %v1623
    %2974 = vmatprep.subr.mxu0 0.0
    %2975 = vmatpush1.msra.mxu0 0.0
    %2976 = vmatprep.subr.mxu0 0.0
    %2977 = vmatpush1.msra.mxu0 0.0
    %2978 = vmatprep.subr.mxu0 0.0
    %2979 = vmatpush1.msra.mxu0 0.0
    %2980 = vmatprep.subr.mxu0 0.0
    %2981 = vmatpush1.msra.mxu0 0.0
    %2982 = vmatprep.subr.mxu0 0.0
    %2983 = vmatpush1.msra.mxu0 0.0
    %2984 = vmatprep.subr.mxu0 0.0
    %2985 = vmatpush1.msra.mxu0 0.0
    %2986 = vmatprep.subr.mxu0 0.0
    %2987 = vmatpush1.msra.mxu0 0.0
    %2988 = vmatprep.subr.mxu0 0.0
    %2989 = vmatpush1.msra.mxu0 0.0
    %2990 = vmatprep.subr.mxu0 0.0
    %2991 = vmatpush1.msra.mxu0 0.0
    %2992 = vmatprep.subr.mxu0 0.0
    %2993 = vmatpush1.msra.mxu0 0.0
    %2994 = vmatprep.subr.mxu0 0.0
    %2995 = vmatpush1.msra.mxu0 0.0
    %2996 = vmatprep.subr.mxu0 0.0
    %2997 = vmatpush1.msra.mxu0 0.0
    %2998 = vmatprep.subr.mxu0 0.0
    %2999 = vmatpush1.msra.mxu0 0.0
    %3000 = vmatprep.subr.mxu0 0.0
    %3001 = vmatpush1.msra.mxu0 0.0
    %3002 = vmatprep.subr.mxu0 0.0
    %3003 = vmatpush1.msra.mxu0 0.0
    %3004 = vmatprep.subr.mxu0 0.0
    %3005 = vmatpush1.msra.mxu0 0.0
    %3006 = vmatprep.mubr.f32.mxu0 0.0
    %3007 = vmatmul.mubr.f32.gmra.mrb[0].mxu0 %v2863
    %v3008 = vpop.f32.mrb[0].mxu0
    %v3009 = vadd.f32 0.0, %v3008
    %v3010 = vpop.f32.mrb[0].mxu0
    %v3011 = vadd.f32 0.0, %v3010
    %3012 = vdwg.mxu0
    %v3013 = vadd.f32 %v2867, %v2938
    %v3014 = vadd.f32 %v2868, %v2940
    %v3015 = vadd.f32 %v2869, %v3009
    %v3016 = vadd.f32 %v2870, %v3011
    %v3017 = vsub.f32 0.0, %v3013
    %v3018 = vmul.f32 %v3017, 1.442695
    %v3019 = vpow.pop %v3018
    %v3020 = vadd.f32 %v3019, 1.0
    %v3021 = vrcp.pop %v3020
    %v3022 = vmul.f32 1.0, %v3021
    %v3023 = vsub.f32 0.0, %v3014
    %v3024 = vmul.f32 %v3023, 1.442695
    %v3025 = vpow.pop %v3024
    %v3026 = vadd.f32 %v3025, 1.0
    %v3027 = vrcp.pop %v3026
    %v3028 = vmul.f32 1.0, %v3027
    %v3029 = vtanh.pop %v3015
    %v3030 = vsub.f32 0.0, %v3016
    %v3031 = vmul.f32 %v3030, 1.442695
    %v3032 = vpow.pop %v3031
    %v3033 = vadd.f32 %v3032, 1.0
    %v3034 = vrcp.pop %v3033
    %v3035 = vmul.f32 1.0, %v3034
    %v3036 = vmul.f32 %v3028, %v2861
    %v3037 = vmul.f32 %v3022, %v3029
    %v3038 = vadd.f32 %v3036, %v3037
    %v3039 = vtanh.pop %v3038
    %v3040 = vmul.f32 %v3035, %v3039
    %s3041 = smul.u32 8, 4
    %s3042 = smul.addr %s3041, 8
    %s3043 = scalar_lea.vmem [#allocation2], %s3042
    %v3044 = vld [vmem:[%s3043] sm:$0xff]
    %v3045 = vld [vmem:[%s3043 + $0x8] sm:$0xff]
    %v3046 = vld [vmem:[%s3043 + $0x10] sm:$0xff]
    %v3047 = vld [vmem:[%s3043 + $0x18] sm:$0xff]
    %3048 = vmatprep.subr.mxu0 %v1562
    %3049 = vmatpush1.msra.mxu0 %v1561
    %3050 = vmatprep.subr.mxu0 %v1566
    %3051 = vmatpush1.msra.mxu0 %v1565
    %3052 = vmatprep.subr.mxu0 %v1570
    %3053 = vmatpush1.msra.mxu0 %v1569
    %3054 = vmatprep.subr.mxu0 %v1574
    %3055 = vmatpush1.msra.mxu0 %v1573
    %3056 = vmatprep.subr.mxu0 %v1578
    %3057 = vmatpush1.msra.mxu0 %v1577
    %3058 = vmatprep.subr.mxu0 %v1582
    %3059 = vmatpush1.msra.mxu0 %v1581
    %3060 = vmatprep.subr.mxu0 %v1586
    %3061 = vmatpush1.msra.mxu0 %v1585
    %3062 = vmatprep.subr.mxu0 %v1590
    %3063 = vmatpush1.msra.mxu0 %v1589
    %3064 = vmatprep.subr.mxu0 %v1594
    %3065 = vmatpush1.msra.mxu0 %v1593
    %3066 = vmatprep.subr.mxu0 %v1598
    %3067 = vmatpush1.msra.mxu0 %v1597
    %3068 = vmatprep.subr.mxu0 %v1602
    %3069 = vmatpush1.msra.mxu0 %v1601
    %3070 = vmatprep.subr.mxu0 %v1606
    %3071 = vmatpush1.msra.mxu0 %v1605
    %3072 = vmatprep.subr.mxu0 %v1610
    %3073 = vmatpush1.msra.mxu0 %v1609
    %3074 = vmatprep.subr.mxu0 %v1614
    %3075 = vmatpush1.msra.mxu0 %v1613
    %3076 = vmatprep.subr.mxu0 %v1618
    %3077 = vmatpush1.msra.mxu0 %v1617
    %3078 = vmatprep.subr.mxu0 %v1622
    %3079 = vmatpush1.msra.mxu0 %v1621
    %3080 = vmatprep.subr.mxu0 0.0
    %3081 = vmatpush1.msra.mxu0 0.0
    %3082 = vmatprep.subr.mxu0 0.0
    %3083 = vmatpush1.msra.mxu0 0.0
    %3084 = vmatprep.subr.mxu0 0.0
    %3085 = vmatpush1.msra.mxu0 0.0
    %3086 = vmatprep.subr.mxu0 0.0
    %3087 = vmatpush1.msra.mxu0 0.0
    %3088 = vmatprep.subr.mxu0 0.0
    %3089 = vmatpush1.msra.mxu0 0.0
    %3090 = vmatprep.subr.mxu0 0.0
    %3091 = vmatpush1.msra.mxu0 0.0
    %3092 = vmatprep.subr.mxu0 0.0
    %3093 = vmatpush1.msra.mxu0 0.0
    %3094 = vmatprep.subr.mxu0 0.0
    %3095 = vmatpush1.msra.mxu0 0.0
    %3096 = vmatprep.subr.mxu0 0.0
    %3097 = vmatpush1.msra.mxu0 0.0
    %3098 = vmatprep.subr.mxu0 0.0
    %3099 = vmatpush1.msra.mxu0 0.0
    %3100 = vmatprep.subr.mxu0 0.0
    %3101 = vmatpush1.msra.mxu0 0.0
    %3102 = vmatprep.subr.mxu0 0.0
    %3103 = vmatpush1.msra.mxu0 0.0
    %3104 = vmatprep.subr.mxu0 0.0
    %3105 = vmatpush1.msra.mxu0 0.0
    %3106 = vmatprep.subr.mxu0 0.0
    %3107 = vmatpush1.msra.mxu0 0.0
    %3108 = vmatprep.subr.mxu0 0.0
    %3109 = vmatpush1.msra.mxu0 0.0
    %3110 = vmatprep.subr.mxu0 0.0
    %3111 = vmatpush1.msra.mxu0 0.0
    %3112 = vmatprep.mubr.f32.mxu0 0.0
    %3113 = vmatmul.mubr.f32.gmra.mrb[0].mxu0 %v3040
    %v3114 = vpop.f32.mrb[0].mxu0
    %v3115 = vadd.f32 0.0, %v3114
    %v3116 = vpop.f32.mrb[0].mxu0
    %v3117 = vadd.f32 0.0, %v3116
    %3118 = vdwg.mxu0
    %3119 = vmatprep.subr.mxu0 %v1564
    %3120 = vmatpush1.msra.mxu0 %v1563
    %3121 = vmatprep.subr.mxu0 %v1568
    %3122 = vmatpush1.msra.mxu0 %v1567
    %3123 = vmatprep.subr.mxu0 %v1572
    %3124 = vmatpush1.msra.mxu0 %v1571
    %3125 = vmatprep.subr.mxu0 %v1576
    %3126 = vmatpush1.msra.mxu0 %v1575
    %3127 = vmatprep.subr.mxu0 %v1580
    %3128 = vmatpush1.msra.mxu0 %v1579
    %3129 = vmatprep.subr.mxu0 %v1584
    %3130 = vmatpush1.msra.mxu0 %v1583
    %3131 = vmatprep.subr.mxu0 %v1588
    %3132 = vmatpush1.msra.mxu0 %v1587
    %3133 = vmatprep.subr.mxu0 %v1592
    %3134 = vmatpush1.msra.mxu0 %v1591
    %3135 = vmatprep.subr.mxu0 %v1596
    %3136 = vmatpush1.msra.mxu0 %v1595
    %3137 = vmatprep.subr.mxu0 %v1600
    %3138 = vmatpush1.msra.mxu0 %v1599
    %3139 = vmatprep.subr.mxu0 %v1604
    %3140 = vmatpush1.msra.mxu0 %v1603
    %3141 = vmatprep.subr.mxu0 %v1608
    %3142 = vmatpush1.msra.mxu0 %v1607
    %3143 = vmatprep.subr.mxu0 %v1612
    %3144 = vmatpush1.msra.mxu0 %v1611
    %3145 = vmatprep.subr.mxu0 %v1616
    %3146 = vmatpush1.msra.mxu0 %v1615
    %3147 = vmatprep.subr.mxu0 %v1620
    %3148 = vmatpush1.msra.mxu0 %v1619
    %3149 = vmatprep.subr.mxu0 %v1624
    %3150 = vmatpush1.msra.mxu0 %v1623
    %3151 = vmatprep.subr.mxu0 0.0
    %3152 = vmatpush1.msra.mxu0 0.0
    %3153 = vmatprep.subr.mxu0 0.0
    %3154 = vmatpush1.msra.mxu0 0.0
    %3155 = vmatprep.subr.mxu0 0.0
    %3156 = vmatpush1.msra.mxu0 0.0
    %3157 = vmatprep.subr.mxu0 0.0
    %3158 = vmatpush1.msra.mxu0 0.0
    %3159 = vmatprep.subr.mxu0 0.0
    %3160 = vmatpush1.msra.mxu0 0.0
    %3161 = vmatprep.subr.mxu0 0.0
    %3162 = vmatpush1.msra.mxu0 0.0
    %3163 = vmatprep.subr.mxu0 0.0
    %3164 = vmatpush1.msra.mxu0 0.0
    %3165 = vmatprep.subr.mxu0 0.0
    %3166 = vmatpush1.msra.mxu0 0.0
    %3167 = vmatprep.subr.mxu0 0.0
    %3168 = vmatpush1.msra.mxu0 0.0
    %3169 = vmatprep.subr.mxu0 0.0
    %3170 = vmatpush1.msra.mxu0 0.0
    %3171 = vmatprep.subr.mxu0 0.0
    %3172 = vmatpush1.msra.mxu0 0.0
    %3173 = vmatprep.subr.mxu0 0.0
    %3174 = vmatpush1.msra.mxu0 0.0
    %3175 = vmatprep.subr.mxu0 0.0
    %3176 = vmatpush1.msra.mxu0 0.0
    %3177 = vmatprep.subr.mxu0 0.0
    %3178 = vmatpush1.msra.mxu0 0.0
    %3179 = vmatprep.subr.mxu0 0.0
    %3180 = vmatpush1.msra.mxu0 0.0
    %3181 = vmatprep.subr.mxu0 0.0
    %3182 = vmatpush1.msra.mxu0 0.0
    %3183 = vmatprep.mubr.f32.mxu0 0.0
    %3184 = vmatmul.mubr.f32.gmra.mrb[0].mxu0 %v3040
    %v3185 = vpop.f32.mrb[0].mxu0
    %v3186 = vadd.f32 0.0, %v3185
    %v3187 = vpop.f32.mrb[0].mxu0
    %v3188 = vadd.f32 0.0, %v3187
    %3189 = vdwg.mxu0
    %v3190 = vadd.f32 %v3044, %v3115
    %v3191 = vadd.f32 %v3045, %v3117
    %v3192 = vadd.f32 %v3046, %v3186
    %v3193 = vadd.f32 %v3047, %v3188
    %v3194 = vsub.f32 0.0, %v3190
    %v3195 = vmul.f32 %v3194, 1.442695
    %v3196 = vpow.pop %v3195
    %v3197 = vadd.f32 %v3196, 1.0
    %v3198 = vrcp.pop %v3197
    %v3199 = vmul.f32 1.0, %v3198
    %v3200 = vsub.f32 0.0, %v3191
    %v3201 = vmul.f32 %v3200, 1.442695
    %v3202 = vpow.pop %v3201
    %v3203 = vadd.f32 %v3202, 1.0
    %v3204 = vrcp.pop %v3203
    %v3205 = vmul.f32 1.0, %v3204
    %v3206 = vtanh.pop %v3192
    %v3207 = vsub.f32 0.0, %v3193
    %v3208 = vmul.f32 %v3207, 1.442695
    %v3209 = vpow.pop %v3208
    %v3210 = vadd.f32 %v3209, 1.0
    %v3211 = vrcp.pop %v3210
    %v3212 = vmul.f32 1.0, %v3211
    %v3213 = vmul.f32 %v3205, %v3038
    %v3214 = vmul.f32 %v3199, %v3206
    %v3215 = vadd.f32 %v3213, %v3214
    %v3216 = vtanh.pop %v3215
    %v3217 = vmul.f32 %v3212, %v3216
    %s3218 = smul.u32 9, 4
    %s3219 = smul.addr %s3218, 8
    %s3220 = scalar_lea.vmem [#allocation2], %s3219
    %v3221 = vld [vmem:[%s3220] sm:$0xff]
    %v3222 = vld [vmem:[%s3220 + $0x8] sm:$0xff]
    %v3223 = vld [vmem:[%s3220 + $0x10] sm:$0xff]
    %v3224 = vld [vmem:[%s3220 + $0x18] sm:$0xff]
    %3225 = vmatprep.subr.mxu0 %v1562
    %3226 = vmatpush1.msra.mxu0 %v1561
    %3227 = vmatprep.subr.mxu0 %v1566
    %3228 = vmatpush1.msra.mxu0 %v1565
    %3229 = vmatprep.subr.mxu0 %v1570
    %3230 = vmatpush1.msra.mxu0 %v1569
    %3231 = vmatprep.subr.mxu0 %v1574
    %3232 = vmatpush1.msra.mxu0 %v1573
    %3233 = vmatprep.subr.mxu0 %v1578
    %3234 = vmatpush1.msra.mxu0 %v1577
    %3235 = vmatprep.subr.mxu0 %v1582
    %3236 = vmatpush1.msra.mxu0 %v1581
    %3237 = vmatprep.subr.mxu0 %v1586
    %3238 = vmatpush1.msra.mxu0 %v1585
    %3239 = vmatprep.subr.mxu0 %v1590
    %3240 = vmatpush1.msra.mxu0 %v1589
    %3241 = vmatprep.subr.mxu0 %v1594
    %3242 = vmatpush1.msra.mxu0 %v1593
    %3243 = vmatprep.subr.mxu0 %v1598
    %3244 = vmatpush1.msra.mxu0 %v1597
    %3245 = vmatprep.subr.mxu0 %v1602
    %3246 = vmatpush1.msra.mxu0 %v1601
    %3247 = vmatprep.subr.mxu0 %v1606
    %3248 = vmatpush1.msra.mxu0 %v1605
    %3249 = vmatprep.subr.mxu0 %v1610
    %3250 = vmatpush1.msra.mxu0 %v1609
    %3251 = vmatprep.subr.mxu0 %v1614
    %3252 = vmatpush1.msra.mxu0 %v1613
    %3253 = vmatprep.subr.mxu0 %v1618
    %3254 = vmatpush1.msra.mxu0 %v1617
    %3255 = vmatprep.subr.mxu0 %v1622
    %3256 = vmatpush1.msra.mxu0 %v1621
    %3257 = vmatprep.subr.mxu0 0.0
    %3258 = vmatpush1.msra.mxu0 0.0
    %3259 = vmatprep.subr.mxu0 0.0
    %3260 = vmatpush1.msra.mxu0 0.0
    %3261 = vmatprep.subr.mxu0 0.0
    %3262 = vmatpush1.msra.mxu0 0.0
    %3263 = vmatprep.subr.mxu0 0.0
    %3264 = vmatpush1.msra.mxu0 0.0
    %3265 = vmatprep.subr.mxu0 0.0
    %3266 = vmatpush1.msra.mxu0 0.0
    %3267 = vmatprep.subr.mxu0 0.0
    %3268 = vmatpush1.msra.mxu0 0.0
    %3269 = vmatprep.subr.mxu0 0.0
    %3270 = vmatpush1.msra.mxu0 0.0
    %3271 = vmatprep.subr.mxu0 0.0
    %3272 = vmatpush1.msra.mxu0 0.0
    %3273 = vmatprep.subr.mxu0 0.0
    %3274 = vmatpush1.msra.mxu0 0.0
    %3275 = vmatprep.subr.mxu0 0.0
    %3276 = vmatpush1.msra.mxu0 0.0
    %3277 = vmatprep.subr.mxu0 0.0
    %3278 = vmatpush1.msra.mxu0 0.0
    %3279 = vmatprep.subr.mxu0 0.0
    %3280 = vmatpush1.msra.mxu0 0.0
    %3281 = vmatprep.subr.mxu0 0.0
    %3282 = vmatpush1.msra.mxu0 0.0
    %3283 = vmatprep.subr.mxu0 0.0
    %3284 = vmatpush1.msra.mxu0 0.0
    %3285 = vmatprep.subr.mxu0 0.0
    %3286 = vmatpush1.msra.mxu0 0.0
    %3287 = vmatprep.subr.mxu0 0.0
    %3288 = vmatpush1.msra.mxu0 0.0
    %3289 = vmatprep.mubr.f32.mxu0 0.0
    %3290 = vmatmul.mubr.f32.gmra.mrb[0].mxu0 %v3217
    %v3291 = vpop.f32.mrb[0].mxu0
    %v3292 = vadd.f32 0.0, %v3291
    %v3293 = vpop.f32.mrb[0].mxu0
    %v3294 = vadd.f32 0.0, %v3293
    %3295 = vdwg.mxu0
    %3296 = vmatprep.subr.mxu0 %v1564
    %3297 = vmatpush1.msra.mxu0 %v1563
    %3298 = vmatprep.subr.mxu0 %v1568
    %3299 = vmatpush1.msra.mxu0 %v1567
    %3300 = vmatprep.subr.mxu0 %v1572
    %3301 = vmatpush1.msra.mxu0 %v1571
    %3302 = vmatprep.subr.mxu0 %v1576
    %3303 = vmatpush1.msra.mxu0 %v1575
    %3304 = vmatprep.subr.mxu0 %v1580
    %3305 = vmatpush1.msra.mxu0 %v1579
    %3306 = vmatprep.subr.mxu0 %v1584
    %3307 = vmatpush1.msra.mxu0 %v1583
    %3308 = vmatprep.subr.mxu0 %v1588
    %3309 = vmatpush1.msra.mxu0 %v1587
    %3310 = vmatprep.subr.mxu0 %v1592
    %3311 = vmatpush1.msra.mxu0 %v1591
    %3312 = vmatprep.subr.mxu0 %v1596
    %3313 = vmatpush1.msra.mxu0 %v1595
    %3314 = vmatprep.subr.mxu0 %v1600
    %3315 = vmatpush1.msra.mxu0 %v1599
    %3316 = vmatprep.subr.mxu0 %v1604
    %3317 = vmatpush1.msra.mxu0 %v1603
    %3318 = vmatprep.subr.mxu0 %v1608
    %3319 = vmatpush1.msra.mxu0 %v1607
    %3320 = vmatprep.subr.mxu0 %v1612
    %3321 = vmatpush1.msra.mxu0 %v1611
    %3322 = vmatprep.subr.mxu0 %v1616
    %3323 = vmatpush1.msra.mxu0 %v1615
    %3324 = vmatprep.subr.mxu0 %v1620
    %3325 = vmatpush1.msra.mxu0 %v1619
    %3326 = vmatprep.subr.mxu0 %v1624
    %3327 = vmatpush1.msra.mxu0 %v1623
    %3328 = vmatprep.subr.mxu0 0.0
    %3329 = vmatpush1.msra.mxu0 0.0
    %3330 = vmatprep.subr.mxu0 0.0
    %3331 = vmatpush1.msra.mxu0 0.0
    %3332 = vmatprep.subr.mxu0 0.0
    %3333 = vmatpush1.msra.mxu0 0.0
    %3334 = vmatprep.subr.mxu0 0.0
    %3335 = vmatpush1.msra.mxu0 0.0
    %3336 = vmatprep.subr.mxu0 0.0
    %3337 = vmatpush1.msra.mxu0 0.0
    %3338 = vmatprep.subr.mxu0 0.0
    %3339 = vmatpush1.msra.mxu0 0.0
    %3340 = vmatprep.subr.mxu0 0.0
    %3341 = vmatpush1.msra.mxu0 0.0
    %3342 = vmatprep.subr.mxu0 0.0
    %3343 = vmatpush1.msra.mxu0 0.0
    %3344 = vmatprep.subr.mxu0 0.0
    %3345 = vmatpush1.msra.mxu0 0.0
    %3346 = vmatprep.subr.mxu0 0.0
    %3347 = vmatpush1.msra.mxu0 0.0
    %3348 = vmatprep.subr.mxu0 0.0
    %3349 = vmatpush1.msra.mxu0 0.0
    %3350 = vmatprep.subr.mxu0 0.0
    %3351 = vmatpush1.msra.mxu0 0.0
    %3352 = vmatprep.subr.mxu0 0.0
    %3353 = vmatpush1.msra.mxu0 0.0
    %3354 = vmatprep.subr.mxu0 0.0
    %3355 = vmatpush1.msra.mxu0 0.0
    %3356 = vmatprep.subr.mxu0 0.0
    %3357 = vmatpush1.msra.mxu0 0.0
    %3358 = vmatprep.subr.mxu0 0.0
    %3359 = vmatpush1.msra.mxu0 0.0
    %3360 = vmatprep.mubr.f32.mxu0 0.0
    %3361 = vmatmul.mubr.f32.gmra.mrb[0].mxu0 %v3217
    %v3362 = vpop.f32.mrb[0].mxu0
    %v3363 = vadd.f32 0.0, %v3362
    %v3364 = vpop.f32.mrb[0].mxu0
    %v3365 = vadd.f32 0.0, %v3364
    %3366 = vdwg.mxu0
    %v3367 = vadd.f32 %v3221, %v3292
    %v3368 = vadd.f32 %v3222, %v3294
    %v3369 = vadd.f32 %v3223, %v3363
    %v3370 = vadd.f32 %v3224, %v3365
    %v3371 = vsub.f32 0.0, %v3367
    %v3372 = vmul.f32 %v3371, 1.442695
    %v3373 = vpow.pop %v3372
    %v3374 = vadd.f32 %v3373, 1.0
    %v3375 = vrcp.pop %v3374
    %v3376 = vmul.f32 1.0, %v3375
    %v3377 = vsub.f32 0.0, %v3368
    %v3378 = vmul.f32 %v3377, 1.442695
    %v3379 = vpow.pop %v3378
    %v3380 = vadd.f32 %v3379, 1.0
    %v3381 = vrcp.pop %v3380
    %v3382 = vmul.f32 1.0, %v3381
    %v3383 = vtanh.pop %v3369
    %v3384 = vsub.f32 0.0, %v3370
    %v3385 = vmul.f32 %v3384, 1.442695
    %v3386 = vpow.pop %v3385
    %v3387 = vadd.f32 %v3386, 1.0
    %v3388 = vrcp.pop %v3387
    %v3389 = vmul.f32 1.0, %v3388
    %v3390 = vmul.f32 %v3382, %v3215
    %v3391 = vmul.f32 %v3376, %v3383
    %v3392 = vadd.f32 %v3390, %v3391
    %v3393 = vtanh.pop %v3392
    %v3394 = vmul.f32 %v3389, %v3393
    %s3395 = smul.u32 10, 4
    %s3396 = smul.addr %s3395, 8
    %s3397 = scalar_lea.vmem [#allocation2], %s3396
    %v3398 = vld [vmem:[%s3397] sm:$0xff]
    %v3399 = vld [vmem:[%s3397 + $0x8] sm:$0xff]
    %v3400 = vld [vmem:[%s3397 + $0x10] sm:$0xff]
    %v3401 = vld [vmem:[%s3397 + $0x18] sm:$0xff]
    %3402 = vmatprep.subr.mxu0 %v1562
    %3403 = vmatpush1.msra.mxu0 %v1561
    %3404 = vmatprep.subr.mxu0 %v1566
    %3405 = vmatpush1.msra.mxu0 %v1565
    %3406 = vmatprep.subr.mxu0 %v1570
    %3407 = vmatpush1.msra.mxu0 %v1569
    %3408 = vmatprep.subr.mxu0 %v1574
    %3409 = vmatpush1.msra.mxu0 %v1573
    %3410 = vmatprep.subr.mxu0 %v1578
    %3411 = vmatpush1.msra.mxu0 %v1577
    %3412 = vmatprep.subr.mxu0 %v1582
    %3413 = vmatpush1.msra.mxu0 %v1581
    %3414 = vmatprep.subr.mxu0 %v1586
    %3415 = vmatpush1.msra.mxu0 %v1585
    %3416 = vmatprep.subr.mxu0 %v1590
    %3417 = vmatpush1.msra.mxu0 %v1589
    %3418 = vmatprep.subr.mxu0 %v1594
    %3419 = vmatpush1.msra.mxu0 %v1593
    %3420 = vmatprep.subr.mxu0 %v1598
    %3421 = vmatpush1.msra.mxu0 %v1597
    %3422 = vmatprep.subr.mxu0 %v1602
    %3423 = vmatpush1.msra.mxu0 %v1601
    %3424 = vmatprep.subr.mxu0 %v1606
    %3425 = vmatpush1.msra.mxu0 %v1605
    %3426 = vmatprep.subr.mxu0 %v1610
    %3427 = vmatpush1.msra.mxu0 %v1609
    %3428 = vmatprep.subr.mxu0 %v1614
    %3429 = vmatpush1.msra.mxu0 %v1613
    %3430 = vmatprep.subr.mxu0 %v1618
    %3431 = vmatpush1.msra.mxu0 %v1617
    %3432 = vmatprep.subr.mxu0 %v1622
    %3433 = vmatpush1.msra.mxu0 %v1621
    %3434 = vmatprep.subr.mxu0 0.0
    %3435 = vmatpush1.msra.mxu0 0.0
    %3436 = vmatprep.subr.mxu0 0.0
    %3437 = vmatpush1.msra.mxu0 0.0
    %3438 = vmatprep.subr.mxu0 0.0
    %3439 = vmatpush1.msra.mxu0 0.0
    %3440 = vmatprep.subr.mxu0 0.0
    %3441 = vmatpush1.msra.mxu0 0.0
    %3442 = vmatprep.subr.mxu0 0.0
    %3443 = vmatpush1.msra.mxu0 0.0
    %3444 = vmatprep.subr.mxu0 0.0
    %3445 = vmatpush1.msra.mxu0 0.0
    %3446 = vmatprep.subr.mxu0 0.0
    %3447 = vmatpush1.msra.mxu0 0.0
    %3448 = vmatprep.subr.mxu0 0.0
    %3449 = vmatpush1.msra.mxu0 0.0
    %3450 = vmatprep.subr.mxu0 0.0
    %3451 = vmatpush1.msra.mxu0 0.0
    %3452 = vmatprep.subr.mxu0 0.0
    %3453 = vmatpush1.msra.mxu0 0.0
    %3454 = vmatprep.subr.mxu0 0.0
    %3455 = vmatpush1.msra.mxu0 0.0
    %3456 = vmatprep.subr.mxu0 0.0
    %3457 = vmatpush1.msra.mxu0 0.0
    %3458 = vmatprep.subr.mxu0 0.0
    %3459 = vmatpush1.msra.mxu0 0.0
    %3460 = vmatprep.subr.mxu0 0.0
    %3461 = vmatpush1.msra.mxu0 0.0
    %3462 = vmatprep.subr.mxu0 0.0
    %3463 = vmatpush1.msra.mxu0 0.0
    %3464 = vmatprep.subr.mxu0 0.0
    %3465 = vmatpush1.msra.mxu0 0.0
    %3466 = vmatprep.mubr.f32.mxu0 0.0
    %3467 = vmatmul.mubr.f32.gmra.mrb[0].mxu0 %v3394
    %v3468 = vpop.f32.mrb[0].mxu0
    %v3469 = vadd.f32 0.0, %v3468
    %v3470 = vpop.f32.mrb[0].mxu0
    %v3471 = vadd.f32 0.0, %v3470
    %3472 = vdwg.mxu0
    %3473 = vmatprep.subr.mxu0 %v1564
    %3474 = vmatpush1.msra.mxu0 %v1563
    %3475 = vmatprep.subr.mxu0 %v1568
    %3476 = vmatpush1.msra.mxu0 %v1567
    %3477 = vmatprep.subr.mxu0 %v1572
    %3478 = vmatpush1.msra.mxu0 %v1571
    %3479 = vmatprep.subr.mxu0 %v1576
    %3480 = vmatpush1.msra.mxu0 %v1575
    %3481 = vmatprep.subr.mxu0 %v1580
    %3482 = vmatpush1.msra.mxu0 %v1579
    %3483 = vmatprep.subr.mxu0 %v1584
    %3484 = vmatpush1.msra.mxu0 %v1583
    %3485 = vmatprep.subr.mxu0 %v1588
    %3486 = vmatpush1.msra.mxu0 %v1587
    %3487 = vmatprep.subr.mxu0 %v1592
    %3488 = vmatpush1.msra.mxu0 %v1591
    %3489 = vmatprep.subr.mxu0 %v1596
    %3490 = vmatpush1.msra.mxu0 %v1595
    %3491 = vmatprep.subr.mxu0 %v1600
    %3492 = vmatpush1.msra.mxu0 %v1599
    %3493 = vmatprep.subr.mxu0 %v1604
    %3494 = vmatpush1.msra.mxu0 %v1603
    %3495 = vmatprep.subr.mxu0 %v1608
    %3496 = vmatpush1.msra.mxu0 %v1607
    %3497 = vmatprep.subr.mxu0 %v1612
    %3498 = vmatpush1.msra.mxu0 %v1611
    %3499 = vmatprep.subr.mxu0 %v1616
    %3500 = vmatpush1.msra.mxu0 %v1615
    %3501 = vmatprep.subr.mxu0 %v1620
    %3502 = vmatpush1.msra.mxu0 %v1619
    %3503 = vmatprep.subr.mxu0 %v1624
    %3504 = vmatpush1.msra.mxu0 %v1623
    %3505 = vmatprep.subr.mxu0 0.0
    %3506 = vmatpush1.msra.mxu0 0.0
    %3507 = vmatprep.subr.mxu0 0.0
    %3508 = vmatpush1.msra.mxu0 0.0
    %3509 = vmatprep.subr.mxu0 0.0
    %3510 = vmatpush1.msra.mxu0 0.0
    %3511 = vmatprep.subr.mxu0 0.0
    %3512 = vmatpush1.msra.mxu0 0.0
    %3513 = vmatprep.subr.mxu0 0.0
    %3514 = vmatpush1.msra.mxu0 0.0
    %3515 = vmatprep.subr.mxu0 0.0
    %3516 = vmatpush1.msra.mxu0 0.0
    %3517 = vmatprep.subr.mxu0 0.0
    %3518 = vmatpush1.msra.mxu0 0.0
    %3519 = vmatprep.subr.mxu0 0.0
    %3520 = vmatpush1.msra.mxu0 0.0
    %3521 = vmatprep.subr.mxu0 0.0
    %3522 = vmatpush1.msra.mxu0 0.0
    %3523 = vmatprep.subr.mxu0 0.0
    %3524 = vmatpush1.msra.mxu0 0.0
    %3525 = vmatprep.subr.mxu0 0.0
    %3526 = vmatpush1.msra.mxu0 0.0
    %3527 = vmatprep.subr.mxu0 0.0
    %3528 = vmatpush1.msra.mxu0 0.0
    %3529 = vmatprep.subr.mxu0 0.0
    %3530 = vmatpush1.msra.mxu0 0.0
    %3531 = vmatprep.subr.mxu0 0.0
    %3532 = vmatpush1.msra.mxu0 0.0
    %3533 = vmatprep.subr.mxu0 0.0
    %3534 = vmatpush1.msra.mxu0 0.0
    %3535 = vmatprep.subr.mxu0 0.0
    %3536 = vmatpush1.msra.mxu0 0.0
    %3537 = vmatprep.mubr.f32.mxu0 0.0
    %3538 = vmatmul.mubr.f32.gmra.mrb[0].mxu0 %v3394
    %v3539 = vpop.f32.mrb[0].mxu0
    %v3540 = vadd.f32 0.0, %v3539
    %v3541 = vpop.f32.mrb[0].mxu0
    %v3542 = vadd.f32 0.0, %v3541
    %3543 = vdwg.mxu0
    %v3544 = vadd.f32 %v3398, %v3469
    %v3545 = vadd.f32 %v3399, %v3471
    %v3546 = vadd.f32 %v3400, %v3540
    %v3547 = vadd.f32 %v3401, %v3542
    %v3548 = vsub.f32 0.0, %v3544
    %v3549 = vmul.f32 %v3548, 1.442695
    %v3550 = vpow.pop %v3549
    %v3551 = vadd.f32 %v3550, 1.0
    %v3552 = vrcp.pop %v3551
    %v3553 = vmul.f32 1.0, %v3552
    %v3554 = vsub.f32 0.0, %v3545
    %v3555 = vmul.f32 %v3554, 1.442695
    %v3556 = vpow.pop %v3555
    %v3557 = vadd.f32 %v3556, 1.0
    %v3558 = vrcp.pop %v3557
    %v3559 = vmul.f32 1.0, %v3558
    %v3560 = vtanh.pop %v3546
    %v3561 = vsub.f32 0.0, %v3547
    %v3562 = vmul.f32 %v3561, 1.442695
    %v3563 = vpow.pop %v3562
    %v3564 = vadd.f32 %v3563, 1.0
    %v3565 = vrcp.pop %v3564
    %v3566 = vmul.f32 1.0, %v3565
    %v3567 = vmul.f32 %v3559, %v3392
    %v3568 = vmul.f32 %v3553, %v3560
    %v3569 = vadd.f32 %v3567, %v3568
    %v3570 = vtanh.pop %v3569
    %v3571 = vmul.f32 %v3566, %v3570
    %s3572 = smul.u32 11, 4
    %s3573 = smul.addr %s3572, 8
    %s3574 = scalar_lea.vmem [#allocation2], %s3573
    %v3575 = vld [vmem:[%s3574] sm:$0xff]
    %v3576 = vld [vmem:[%s3574 + $0x8] sm:$0xff]
    %v3577 = vld [vmem:[%s3574 + $0x10] sm:$0xff]
    %v3578 = vld [vmem:[%s3574 + $0x18] sm:$0xff]
    %3579 = vmatprep.subr.mxu0 %v1562
    %3580 = vmatpush1.msra.mxu0 %v1561
    %3581 = vmatprep.subr.mxu0 %v1566
    %3582 = vmatpush1.msra.mxu0 %v1565
    %3583 = vmatprep.subr.mxu0 %v1570
    %3584 = vmatpush1.msra.mxu0 %v1569
    %3585 = vmatprep.subr.mxu0 %v1574
    %3586 = vmatpush1.msra.mxu0 %v1573
    %3587 = vmatprep.subr.mxu0 %v1578
    %3588 = vmatpush1.msra.mxu0 %v1577
    %3589 = vmatprep.subr.mxu0 %v1582
    %3590 = vmatpush1.msra.mxu0 %v1581
    %3591 = vmatprep.subr.mxu0 %v1586
    %3592 = vmatpush1.msra.mxu0 %v1585
    %3593 = vmatprep.subr.mxu0 %v1590
    %3594 = vmatpush1.msra.mxu0 %v1589
    %3595 = vmatprep.subr.mxu0 %v1594
    %3596 = vmatpush1.msra.mxu0 %v1593
    %3597 = vmatprep.subr.mxu0 %v1598
    %3598 = vmatpush1.msra.mxu0 %v1597
    %3599 = vmatprep.subr.mxu0 %v1602
    %3600 = vmatpush1.msra.mxu0 %v1601
    %3601 = vmatprep.subr.mxu0 %v1606
    %3602 = vmatpush1.msra.mxu0 %v1605
    %3603 = vmatprep.subr.mxu0 %v1610
    %3604 = vmatpush1.msra.mxu0 %v1609
    %3605 = vmatprep.subr.mxu0 %v1614
    %3606 = vmatpush1.msra.mxu0 %v1613
    %3607 = vmatprep.subr.mxu0 %v1618
    %3608 = vmatpush1.msra.mxu0 %v1617
    %3609 = vmatprep.subr.mxu0 %v1622
    %3610 = vmatpush1.msra.mxu0 %v1621
    %3611 = vmatprep.subr.mxu0 0.0
    %3612 = vmatpush1.msra.mxu0 0.0
    %3613 = vmatprep.subr.mxu0 0.0
    %3614 = vmatpush1.msra.mxu0 0.0
    %3615 = vmatprep.subr.mxu0 0.0
    %3616 = vmatpush1.msra.mxu0 0.0
    %3617 = vmatprep.subr.mxu0 0.0
    %3618 = vmatpush1.msra.mxu0 0.0
    %3619 = vmatprep.subr.mxu0 0.0
    %3620 = vmatpush1.msra.mxu0 0.0
    %3621 = vmatprep.subr.mxu0 0.0
    %3622 = vmatpush1.msra.mxu0 0.0
    %3623 = vmatprep.subr.mxu0 0.0
    %3624 = vmatpush1.msra.mxu0 0.0
    %3625 = vmatprep.subr.mxu0 0.0
    %3626 = vmatpush1.msra.mxu0 0.0
    %3627 = vmatprep.subr.mxu0 0.0
    %3628 = vmatpush1.msra.mxu0 0.0
    %3629 = vmatprep.subr.mxu0 0.0
    %3630 = vmatpush1.msra.mxu0 0.0
    %3631 = vmatprep.subr.mxu0 0.0
    %3632 = vmatpush1.msra.mxu0 0.0
    %3633 = vmatprep.subr.mxu0 0.0
    %3634 = vmatpush1.msra.mxu0 0.0
    %3635 = vmatprep.subr.mxu0 0.0
    %3636 = vmatpush1.msra.mxu0 0.0
    %3637 = vmatprep.subr.mxu0 0.0
    %3638 = vmatpush1.msra.mxu0 0.0
    %3639 = vmatprep.subr.mxu0 0.0
    %3640 = vmatpush1.msra.mxu0 0.0
    %3641 = vmatprep.subr.mxu0 0.0
    %3642 = vmatpush1.msra.mxu0 0.0
    %3643 = vmatprep.mubr.f32.mxu0 0.0
    %3644 = vmatmul.mubr.f32.gmra.mrb[0].mxu0 %v3571
    %v3645 = vpop.f32.mrb[0].mxu0
    %v3646 = vadd.f32 0.0, %v3645
    %v3647 = vpop.f32.mrb[0].mxu0
    %v3648 = vadd.f32 0.0, %v3647
    %3649 = vdwg.mxu0
    %3650 = vmatprep.subr.mxu0 %v1564
    %3651 = vmatpush1.msra.mxu0 %v1563
    %3652 = vmatprep.subr.mxu0 %v1568
    %3653 = vmatpush1.msra.mxu0 %v1567
    %3654 = vmatprep.subr.mxu0 %v1572
    %3655 = vmatpush1.msra.mxu0 %v1571
    %3656 = vmatprep.subr.mxu0 %v1576
    %3657 = vmatpush1.msra.mxu0 %v1575
    %3658 = vmatprep.subr.mxu0 %v1580
    %3659 = vmatpush1.msra.mxu0 %v1579
    %3660 = vmatprep.subr.mxu0 %v1584
    %3661 = vmatpush1.msra.mxu0 %v1583
    %3662 = vmatprep.subr.mxu0 %v1588
    %3663 = vmatpush1.msra.mxu0 %v1587
    %3664 = vmatprep.subr.mxu0 %v1592
    %3665 = vmatpush1.msra.mxu0 %v1591
    %3666 = vmatprep.subr.mxu0 %v1596
    %3667 = vmatpush1.msra.mxu0 %v1595
    %3668 = vmatprep.subr.mxu0 %v1600
    %3669 = vmatpush1.msra.mxu0 %v1599
    %3670 = vmatprep.subr.mxu0 %v1604
    %3671 = vmatpush1.msra.mxu0 %v1603
    %3672 = vmatprep.subr.mxu0 %v1608
    %3673 = vmatpush1.msra.mxu0 %v1607
    %3674 = vmatprep.subr.mxu0 %v1612
    %3675 = vmatpush1.msra.mxu0 %v1611
    %3676 = vmatprep.subr.mxu0 %v1616
    %3677 = vmatpush1.msra.mxu0 %v1615
    %3678 = vmatprep.subr.mxu0 %v1620
    %3679 = vmatpush1.msra.mxu0 %v1619
    %3680 = vmatprep.subr.mxu0 %v1624
    %3681 = vmatpush1.msra.mxu0 %v1623
    %3682 = vmatprep.subr.mxu0 0.0
    %3683 = vmatpush1.msra.mxu0 0.0
    %3684 = vmatprep.subr.mxu0 0.0
    %3685 = vmatpush1.msra.mxu0 0.0
    %3686 = vmatprep.subr.mxu0 0.0
    %3687 = vmatpush1.msra.mxu0 0.0
    %3688 = vmatprep.subr.mxu0 0.0
    %3689 = vmatpush1.msra.mxu0 0.0
    %3690 = vmatprep.subr.mxu0 0.0
    %3691 = vmatpush1.msra.mxu0 0.0
    %3692 = vmatprep.subr.mxu0 0.0
    %3693 = vmatpush1.msra.mxu0 0.0
    %3694 = vmatprep.subr.mxu0 0.0
    %3695 = vmatpush1.msra.mxu0 0.0
    %3696 = vmatprep.subr.mxu0 0.0
    %3697 = vmatpush1.msra.mxu0 0.0
    %3698 = vmatprep.subr.mxu0 0.0
    %3699 = vmatpush1.msra.mxu0 0.0
    %3700 = vmatprep.subr.mxu0 0.0
    %3701 = vmatpush1.msra.mxu0 0.0
    %3702 = vmatprep.subr.mxu0 0.0
    %3703 = vmatpush1.msra.mxu0 0.0
    %3704 = vmatprep.subr.mxu0 0.0
    %3705 = vmatpush1.msra.mxu0 0.0
    %3706 = vmatprep.subr.mxu0 0.0
    %3707 = vmatpush1.msra.mxu0 0.0
    %3708 = vmatprep.subr.mxu0 0.0
    %3709 = vmatpush1.msra.mxu0 0.0
    %3710 = vmatprep.subr.mxu0 0.0
    %3711 = vmatpush1.msra.mxu0 0.0
    %3712 = vmatprep.subr.mxu0 0.0
    %3713 = vmatpush1.msra.mxu0 0.0
    %3714 = vmatprep.mubr.f32.mxu0 0.0
    %3715 = vmatmul.mubr.f32.gmra.mrb[0].mxu0 %v3571
    %v3716 = vpop.f32.mrb[0].mxu0
    %v3717 = vadd.f32 0.0, %v3716
    %v3718 = vpop.f32.mrb[0].mxu0
    %v3719 = vadd.f32 0.0, %v3718
    %3720 = vdwg.mxu0
    %v3721 = vadd.f32 %v3575, %v3646
    %v3722 = vadd.f32 %v3576, %v3648
    %v3723 = vadd.f32 %v3577, %v3717
    %v3724 = vadd.f32 %v3578, %v3719
    %v3725 = vsub.f32 0.0, %v3721
    %v3726 = vmul.f32 %v3725, 1.442695
    %v3727 = vpow.pop %v3726
    %v3728 = vadd.f32 %v3727, 1.0
    %v3729 = vrcp.pop %v3728
    %v3730 = vmul.f32 1.0, %v3729
    %v3731 = vsub.f32 0.0, %v3722
    %v3732 = vmul.f32 %v3731, 1.442695
    %v3733 = vpow.pop %v3732
    %v3734 = vadd.f32 %v3733, 1.0
    %v3735 = vrcp.pop %v3734
    %v3736 = vmul.f32 1.0, %v3735
    %v3737 = vtanh.pop %v3723
    %v3738 = vsub.f32 0.0, %v3724
    %v3739 = vmul.f32 %v3738, 1.442695
    %v3740 = vpow.pop %v3739
    %v3741 = vadd.f32 %v3740, 1.0
    %v3742 = vrcp.pop %v3741
    %v3743 = vmul.f32 1.0, %v3742
    %v3744 = vmul.f32 %v3736, %v3569
    %v3745 = vmul.f32 %v3730, %v3737
    %v3746 = vadd.f32 %v3744, %v3745
    %v3747 = vtanh.pop %v3746
    %v3748 = vmul.f32 %v3743, %v3747
    %s3749 = smul.u32 12, 4
    %s3750 = smul.addr %s3749, 8
    %s3751 = scalar_lea.vmem [#allocation2], %s3750
    %v3752 = vld [vmem:[%s3751] sm:$0xff]
    %v3753 = vld [vmem:[%s3751 + $0x8] sm:$0xff]
    %v3754 = vld [vmem:[%s3751 + $0x10] sm:$0xff]
    %v3755 = vld [vmem:[%s3751 + $0x18] sm:$0xff]
    %3756 = vmatprep.subr.mxu0 %v1562
    %3757 = vmatpush1.msra.mxu0 %v1561
    %3758 = vmatprep.subr.mxu0 %v1566
    %3759 = vmatpush1.msra.mxu0 %v1565
    %3760 = vmatprep.subr.mxu0 %v1570
    %3761 = vmatpush1.msra.mxu0 %v1569
    %3762 = vmatprep.subr.mxu0 %v1574
    %3763 = vmatpush1.msra.mxu0 %v1573
    %3764 = vmatprep.subr.mxu0 %v1578
    %3765 = vmatpush1.msra.mxu0 %v1577
    %3766 = vmatprep.subr.mxu0 %v1582
    %3767 = vmatpush1.msra.mxu0 %v1581
    %3768 = vmatprep.subr.mxu0 %v1586
    %3769 = vmatpush1.msra.mxu0 %v1585
    %3770 = vmatprep.subr.mxu0 %v1590
    %3771 = vmatpush1.msra.mxu0 %v1589
    %3772 = vmatprep.subr.mxu0 %v1594
    %3773 = vmatpush1.msra.mxu0 %v1593
    %3774 = vmatprep.subr.mxu0 %v1598
    %3775 = vmatpush1.msra.mxu0 %v1597
    %3776 = vmatprep.subr.mxu0 %v1602
    %3777 = vmatpush1.msra.mxu0 %v1601
    %3778 = vmatprep.subr.mxu0 %v1606
    %3779 = vmatpush1.msra.mxu0 %v1605
    %3780 = vmatprep.subr.mxu0 %v1610
    %3781 = vmatpush1.msra.mxu0 %v1609
    %3782 = vmatprep.subr.mxu0 %v1614
    %3783 = vmatpush1.msra.mxu0 %v1613
    %3784 = vmatprep.subr.mxu0 %v1618
    %3785 = vmatpush1.msra.mxu0 %v1617
    %3786 = vmatprep.subr.mxu0 %v1622
    %3787 = vmatpush1.msra.mxu0 %v1621
    %3788 = vmatprep.subr.mxu0 0.0
    %3789 = vmatpush1.msra.mxu0 0.0
    %3790 = vmatprep.subr.mxu0 0.0
    %3791 = vmatpush1.msra.mxu0 0.0
    %3792 = vmatprep.subr.mxu0 0.0
    %3793 = vmatpush1.msra.mxu0 0.0
    %3794 = vmatprep.subr.mxu0 0.0
    %3795 = vmatpush1.msra.mxu0 0.0
    %3796 = vmatprep.subr.mxu0 0.0
    %3797 = vmatpush1.msra.mxu0 0.0
    %3798 = vmatprep.subr.mxu0 0.0
    %3799 = vmatpush1.msra.mxu0 0.0
    %3800 = vmatprep.subr.mxu0 0.0
    %3801 = vmatpush1.msra.mxu0 0.0
    %3802 = vmatprep.subr.mxu0 0.0
    %3803 = vmatpush1.msra.mxu0 0.0
    %3804 = vmatprep.subr.mxu0 0.0
    %3805 = vmatpush1.msra.mxu0 0.0
    %3806 = vmatprep.subr.mxu0 0.0
    %3807 = vmatpush1.msra.mxu0 0.0
    %3808 = vmatprep.subr.mxu0 0.0
    %3809 = vmatpush1.msra.mxu0 0.0
    %3810 = vmatprep.subr.mxu0 0.0
    %3811 = vmatpush1.msra.mxu0 0.0
    %3812 = vmatprep.subr.mxu0 0.0
    %3813 = vmatpush1.msra.mxu0 0.0
    %3814 = vmatprep.subr.mxu0 0.0
    %3815 = vmatpush1.msra.mxu0 0.0
    %3816 = vmatprep.subr.mxu0 0.0
    %3817 = vmatpush1.msra.mxu0 0.0
    %3818 = vmatprep.subr.mxu0 0.0
    %3819 = vmatpush1.msra.mxu0 0.0
    %3820 = vmatprep.mubr.f32.mxu0 0.0
    %3821 = vmatmul.mubr.f32.gmra.mrb[0].mxu0 %v3748
    %v3822 = vpop.f32.mrb[0].mxu0
    %v3823 = vadd.f32 0.0, %v3822
    %v3824 = vpop.f32.mrb[0].mxu0
    %v3825 = vadd.f32 0.0, %v3824
    %3826 = vdwg.mxu0
    %3827 = vmatprep.subr.mxu0 %v1564
    %3828 = vmatpush1.msra.mxu0 %v1563
    %3829 = vmatprep.subr.mxu0 %v1568
    %3830 = vmatpush1.msra.mxu0 %v1567
    %3831 = vmatprep.subr.mxu0 %v1572
    %3832 = vmatpush1.msra.mxu0 %v1571
    %3833 = vmatprep.subr.mxu0 %v1576
    %3834 = vmatpush1.msra.mxu0 %v1575
    %3835 = vmatprep.subr.mxu0 %v1580
    %3836 = vmatpush1.msra.mxu0 %v1579
    %3837 = vmatprep.subr.mxu0 %v1584
    %3838 = vmatpush1.msra.mxu0 %v1583
    %3839 = vmatprep.subr.mxu0 %v1588
    %3840 = vmatpush1.msra.mxu0 %v1587
    %3841 = vmatprep.subr.mxu0 %v1592
    %3842 = vmatpush1.msra.mxu0 %v1591
    %3843 = vmatprep.subr.mxu0 %v1596
    %3844 = vmatpush1.msra.mxu0 %v1595
    %3845 = vmatprep.subr.mxu0 %v1600
    %3846 = vmatpush1.msra.mxu0 %v1599
    %3847 = vmatprep.subr.mxu0 %v1604
    %3848 = vmatpush1.msra.mxu0 %v1603
    %3849 = vmatprep.subr.mxu0 %v1608
    %3850 = vmatpush1.msra.mxu0 %v1607
    %3851 = vmatprep.subr.mxu0 %v1612
    %3852 = vmatpush1.msra.mxu0 %v1611
    %3853 = vmatprep.subr.mxu0 %v1616
    %3854 = vmatpush1.msra.mxu0 %v1615
    %3855 = vmatprep.subr.mxu0 %v1620
    %3856 = vmatpush1.msra.mxu0 %v1619
    %3857 = vmatprep.subr.mxu0 %v1624
    %3858 = vmatpush1.msra.mxu0 %v1623
    %3859 = vmatprep.subr.mxu0 0.0
    %3860 = vmatpush1.msra.mxu0 0.0
    %3861 = vmatprep.subr.mxu0 0.0
    %3862 = vmatpush1.msra.mxu0 0.0
    %3863 = vmatprep.subr.mxu0 0.0
    %3864 = vmatpush1.msra.mxu0 0.0
    %3865 = vmatprep.subr.mxu0 0.0
    %3866 = vmatpush1.msra.mxu0 0.0
    %3867 = vmatprep.subr.mxu0 0.0
    %3868 = vmatpush1.msra.mxu0 0.0
    %3869 = vmatprep.subr.mxu0 0.0
    %3870 = vmatpush1.msra.mxu0 0.0
    %3871 = vmatprep.subr.mxu0 0.0
    %3872 = vmatpush1.msra.mxu0 0.0
    %3873 = vmatprep.subr.mxu0 0.0
    %3874 = vmatpush1.msra.mxu0 0.0
    %3875 = vmatprep.subr.mxu0 0.0
    %3876 = vmatpush1.msra.mxu0 0.0
    %3877 = vmatprep.subr.mxu0 0.0
    %3878 = vmatpush1.msra.mxu0 0.0
    %3879 = vmatprep.subr.mxu0 0.0
    %3880 = vmatpush1.msra.mxu0 0.0
    %3881 = vmatprep.subr.mxu0 0.0
    %3882 = vmatpush1.msra.mxu0 0.0
    %3883 = vmatprep.subr.mxu0 0.0
    %3884 = vmatpush1.msra.mxu0 0.0
    %3885 = vmatprep.subr.mxu0 0.0
    %3886 = vmatpush1.msra.mxu0 0.0
    %3887 = vmatprep.subr.mxu0 0.0
    %3888 = vmatpush1.msra.mxu0 0.0
    %3889 = vmatprep.subr.mxu0 0.0
    %3890 = vmatpush1.msra.mxu0 0.0
    %3891 = vmatprep.mubr.f32.mxu0 0.0
    %3892 = vmatmul.mubr.f32.gmra.mrb[0].mxu0 %v3748
    %v3893 = vpop.f32.mrb[0].mxu0
    %v3894 = vadd.f32 0.0, %v3893
    %v3895 = vpop.f32.mrb[0].mxu0
    %v3896 = vadd.f32 0.0, %v3895
    %3897 = vdwg.mxu0
    %v3898 = vadd.f32 %v3752, %v3823
    %v3899 = vadd.f32 %v3753, %v3825
    %v3900 = vadd.f32 %v3754, %v3894
    %v3901 = vadd.f32 %v3755, %v3896
    %v3902 = vsub.f32 0.0, %v3898
    %v3903 = vmul.f32 %v3902, 1.442695
    %v3904 = vpow.pop %v3903
    %v3905 = vadd.f32 %v3904, 1.0
    %v3906 = vrcp.pop %v3905
    %v3907 = vmul.f32 1.0, %v3906
    %v3908 = vsub.f32 0.0, %v3899
    %v3909 = vmul.f32 %v3908, 1.442695
    %v3910 = vpow.pop %v3909
    %v3911 = vadd.f32 %v3910, 1.0
    %v3912 = vrcp.pop %v3911
    %v3913 = vmul.f32 1.0, %v3912
    %v3914 = vtanh.pop %v3900
    %v3915 = vsub.f32 0.0, %v3901
    %v3916 = vmul.f32 %v3915, 1.442695
    %v3917 = vpow.pop %v3916
    %v3918 = vadd.f32 %v3917, 1.0
    %v3919 = vrcp.pop %v3918
    %v3920 = vmul.f32 1.0, %v3919
    %v3921 = vmul.f32 %v3913, %v3746
    %v3922 = vmul.f32 %v3907, %v3914
    %v3923 = vadd.f32 %v3921, %v3922
    %v3924 = vtanh.pop %v3923
    %v3925 = vmul.f32 %v3920, %v3924
    %s3926 = smul.u32 13, 4
    %s3927 = smul.addr %s3926, 8
    %s3928 = scalar_lea.vmem [#allocation2], %s3927
    %v3929 = vld [vmem:[%s3928] sm:$0xff]
    %v3930 = vld [vmem:[%s3928 + $0x8] sm:$0xff]
    %v3931 = vld [vmem:[%s3928 + $0x10] sm:$0xff]
    %v3932 = vld [vmem:[%s3928 + $0x18] sm:$0xff]
    %3933 = vmatprep.subr.mxu0 %v1562
    %3934 = vmatpush1.msra.mxu0 %v1561
    %3935 = vmatprep.subr.mxu0 %v1566
    %3936 = vmatpush1.msra.mxu0 %v1565
    %3937 = vmatprep.subr.mxu0 %v1570
    %3938 = vmatpush1.msra.mxu0 %v1569
    %3939 = vmatprep.subr.mxu0 %v1574
    %3940 = vmatpush1.msra.mxu0 %v1573
    %3941 = vmatprep.subr.mxu0 %v1578
    %3942 = vmatpush1.msra.mxu0 %v1577
    %3943 = vmatprep.subr.mxu0 %v1582
    %3944 = vmatpush1.msra.mxu0 %v1581
    %3945 = vmatprep.subr.mxu0 %v1586
    %3946 = vmatpush1.msra.mxu0 %v1585
    %3947 = vmatprep.subr.mxu0 %v1590
    %3948 = vmatpush1.msra.mxu0 %v1589
    %3949 = vmatprep.subr.mxu0 %v1594
    %3950 = vmatpush1.msra.mxu0 %v1593
    %3951 = vmatprep.subr.mxu0 %v1598
    %3952 = vmatpush1.msra.mxu0 %v1597
    %3953 = vmatprep.subr.mxu0 %v1602
    %3954 = vmatpush1.msra.mxu0 %v1601
    %3955 = vmatprep.subr.mxu0 %v1606
    %3956 = vmatpush1.msra.mxu0 %v1605
    %3957 = vmatprep.subr.mxu0 %v1610
    %3958 = vmatpush1.msra.mxu0 %v1609
    %3959 = vmatprep.subr.mxu0 %v1614
    %3960 = vmatpush1.msra.mxu0 %v1613
    %3961 = vmatprep.subr.mxu0 %v1618
    %3962 = vmatpush1.msra.mxu0 %v1617
    %3963 = vmatprep.subr.mxu0 %v1622
    %3964 = vmatpush1.msra.mxu0 %v1621
    %3965 = vmatprep.subr.mxu0 0.0
    %3966 = vmatpush1.msra.mxu0 0.0
    %3967 = vmatprep.subr.mxu0 0.0
    %3968 = vmatpush1.msra.mxu0 0.0
    %3969 = vmatprep.subr.mxu0 0.0
    %3970 = vmatpush1.msra.mxu0 0.0
    %3971 = vmatprep.subr.mxu0 0.0
    %3972 = vmatpush1.msra.mxu0 0.0
    %3973 = vmatprep.subr.mxu0 0.0
    %3974 = vmatpush1.msra.mxu0 0.0
    %3975 = vmatprep.subr.mxu0 0.0
    %3976 = vmatpush1.msra.mxu0 0.0
    %3977 = vmatprep.subr.mxu0 0.0
    %3978 = vmatpush1.msra.mxu0 0.0
    %3979 = vmatprep.subr.mxu0 0.0
    %3980 = vmatpush1.msra.mxu0 0.0
    %3981 = vmatprep.subr.mxu0 0.0
    %3982 = vmatpush1.msra.mxu0 0.0
    %3983 = vmatprep.subr.mxu0 0.0
    %3984 = vmatpush1.msra.mxu0 0.0
    %3985 = vmatprep.subr.mxu0 0.0
    %3986 = vmatpush1.msra.mxu0 0.0
    %3987 = vmatprep.subr.mxu0 0.0
    %3988 = vmatpush1.msra.mxu0 0.0
    %3989 = vmatprep.subr.mxu0 0.0
    %3990 = vmatpush1.msra.mxu0 0.0
    %3991 = vmatprep.subr.mxu0 0.0
    %3992 = vmatpush1.msra.mxu0 0.0
    %3993 = vmatprep.subr.mxu0 0.0
    %3994 = vmatpush1.msra.mxu0 0.0
    %3995 = vmatprep.subr.mxu0 0.0
    %3996 = vmatpush1.msra.mxu0 0.0
    %3997 = vmatprep.mubr.f32.mxu0 0.0
    %3998 = vmatmul.mubr.f32.gmra.mrb[0].mxu0 %v3925
    %v3999 = vpop.f32.mrb[0].mxu0
    %v4000 = vadd.f32 0.0, %v3999
    %v4001 = vpop.f32.mrb[0].mxu0
    %v4002 = vadd.f32 0.0, %v4001
    %4003 = vdwg.mxu0
    %4004 = vmatprep.subr.mxu0 %v1564
    %4005 = vmatpush1.msra.mxu0 %v1563
    %4006 = vmatprep.subr.mxu0 %v1568
    %4007 = vmatpush1.msra.mxu0 %v1567
    %4008 = vmatprep.subr.mxu0 %v1572
    %4009 = vmatpush1.msra.mxu0 %v1571
    %4010 = vmatprep.subr.mxu0 %v1576
    %4011 = vmatpush1.msra.mxu0 %v1575
    %4012 = vmatprep.subr.mxu0 %v1580
    %4013 = vmatpush1.msra.mxu0 %v1579
    %4014 = vmatprep.subr.mxu0 %v1584
    %4015 = vmatpush1.msra.mxu0 %v1583
    %4016 = vmatprep.subr.mxu0 %v1588
    %4017 = vmatpush1.msra.mxu0 %v1587
    %4018 = vmatprep.subr.mxu0 %v1592
    %4019 = vmatpush1.msra.mxu0 %v1591
    %4020 = vmatprep.subr.mxu0 %v1596
    %4021 = vmatpush1.msra.mxu0 %v1595
    %4022 = vmatprep.subr.mxu0 %v1600
    %4023 = vmatpush1.msra.mxu0 %v1599
    %4024 = vmatprep.subr.mxu0 %v1604
    %4025 = vmatpush1.msra.mxu0 %v1603
    %4026 = vmatprep.subr.mxu0 %v1608
    %4027 = vmatpush1.msra.mxu0 %v1607
    %4028 = vmatprep.subr.mxu0 %v1612
    %4029 = vmatpush1.msra.mxu0 %v1611
    %4030 = vmatprep.subr.mxu0 %v1616
    %4031 = vmatpush1.msra.mxu0 %v1615
    %4032 = vmatprep.subr.mxu0 %v1620
    %4033 = vmatpush1.msra.mxu0 %v1619
    %4034 = vmatprep.subr.mxu0 %v1624
    %4035 = vmatpush1.msra.mxu0 %v1623
    %4036 = vmatprep.subr.mxu0 0.0
    %4037 = vmatpush1.msra.mxu0 0.0
    %4038 = vmatprep.subr.mxu0 0.0
    %4039 = vmatpush1.msra.mxu0 0.0
    %4040 = vmatprep.subr.mxu0 0.0
    %4041 = vmatpush1.msra.mxu0 0.0
    %4042 = vmatprep.subr.mxu0 0.0
    %4043 = vmatpush1.msra.mxu0 0.0
    %4044 = vmatprep.subr.mxu0 0.0
    %4045 = vmatpush1.msra.mxu0 0.0
    %4046 = vmatprep.subr.mxu0 0.0
    %4047 = vmatpush1.msra.mxu0 0.0
    %4048 = vmatprep.subr.mxu0 0.0
    %4049 = vmatpush1.msra.mxu0 0.0
    %4050 = vmatprep.subr.mxu0 0.0
    %4051 = vmatpush1.msra.mxu0 0.0
    %4052 = vmatprep.subr.mxu0 0.0
    %4053 = vmatpush1.msra.mxu0 0.0
    %4054 = vmatprep.subr.mxu0 0.0
    %4055 = vmatpush1.msra.mxu0 0.0
    %4056 = vmatprep.subr.mxu0 0.0
    %4057 = vmatpush1.msra.mxu0 0.0
    %4058 = vmatprep.subr.mxu0 0.0
    %4059 = vmatpush1.msra.mxu0 0.0
    %4060 = vmatprep.subr.mxu0 0.0
    %4061 = vmatpush1.msra.mxu0 0.0
    %4062 = vmatprep.subr.mxu0 0.0
    %4063 = vmatpush1.msra.mxu0 0.0
    %4064 = vmatprep.subr.mxu0 0.0
    %4065 = vmatpush1.msra.mxu0 0.0
    %4066 = vmatprep.subr.mxu0 0.0
    %4067 = vmatpush1.msra.mxu0 0.0
    %4068 = vmatprep.mubr.f32.mxu0 0.0
    %4069 = vmatmul.mubr.f32.gmra.mrb[0].mxu0 %v3925
    %v4070 = vpop.f32.mrb[0].mxu0
    %v4071 = vadd.f32 0.0, %v4070
    %v4072 = vpop.f32.mrb[0].mxu0
    %v4073 = vadd.f32 0.0, %v4072
    %4074 = vdwg.mxu0
    %v4075 = vadd.f32 %v3929, %v4000
    %v4076 = vadd.f32 %v3930, %v4002
    %v4077 = vadd.f32 %v3931, %v4071
    %v4078 = vadd.f32 %v3932, %v4073
    %v4079 = vsub.f32 0.0, %v4075
    %v4080 = vmul.f32 %v4079, 1.442695
    %v4081 = vpow.pop %v4080
    %v4082 = vadd.f32 %v4081, 1.0
    %v4083 = vrcp.pop %v4082
    %v4084 = vmul.f32 1.0, %v4083
    %v4085 = vsub.f32 0.0, %v4076
    %v4086 = vmul.f32 %v4085, 1.442695
    %v4087 = vpow.pop %v4086
    %v4088 = vadd.f32 %v4087, 1.0
    %v4089 = vrcp.pop %v4088
    %v4090 = vmul.f32 1.0, %v4089
    %v4091 = vtanh.pop %v4077
    %v4092 = vsub.f32 0.0, %v4078
    %v4093 = vmul.f32 %v4092, 1.442695
    %v4094 = vpow.pop %v4093
    %v4095 = vadd.f32 %v4094, 1.0
    %v4096 = vrcp.pop %v4095
    %v4097 = vmul.f32 1.0, %v4096
    %v4098 = vmul.f32 %v4090, %v3923
    %v4099 = vmul.f32 %v4084, %v4091
    %v4100 = vadd.f32 %v4098, %v4099
    %v4101 = vtanh.pop %v4100
    %v4102 = vmul.f32 %v4097, %v4101
    %s4103 = smul.u32 14, 4
    %s4104 = smul.addr %s4103, 8
    %s4105 = scalar_lea.vmem [#allocation2], %s4104
    %v4106 = vld [vmem:[%s4105] sm:$0xff]
    %v4107 = vld [vmem:[%s4105 + $0x8] sm:$0xff]
    %v4108 = vld [vmem:[%s4105 + $0x10] sm:$0xff]
    %v4109 = vld [vmem:[%s4105 + $0x18] sm:$0xff]
    %4110 = vmatprep.subr.mxu0 %v1562
    %4111 = vmatpush1.msra.mxu0 %v1561
    %4112 = vmatprep.subr.mxu0 %v1566
    %4113 = vmatpush1.msra.mxu0 %v1565
    %4114 = vmatprep.subr.mxu0 %v1570
    %4115 = vmatpush1.msra.mxu0 %v1569
    %4116 = vmatprep.subr.mxu0 %v1574
    %4117 = vmatpush1.msra.mxu0 %v1573
    %4118 = vmatprep.subr.mxu0 %v1578
    %4119 = vmatpush1.msra.mxu0 %v1577
    %4120 = vmatprep.subr.mxu0 %v1582
    %4121 = vmatpush1.msra.mxu0 %v1581
    %4122 = vmatprep.subr.mxu0 %v1586
    %4123 = vmatpush1.msra.mxu0 %v1585
    %4124 = vmatprep.subr.mxu0 %v1590
    %4125 = vmatpush1.msra.mxu0 %v1589
    %4126 = vmatprep.subr.mxu0 %v1594
    %4127 = vmatpush1.msra.mxu0 %v1593
    %4128 = vmatprep.subr.mxu0 %v1598
    %4129 = vmatpush1.msra.mxu0 %v1597
    %4130 = vmatprep.subr.mxu0 %v1602
    %4131 = vmatpush1.msra.mxu0 %v1601
    %4132 = vmatprep.subr.mxu0 %v1606
    %4133 = vmatpush1.msra.mxu0 %v1605
    %4134 = vmatprep.subr.mxu0 %v1610
    %4135 = vmatpush1.msra.mxu0 %v1609
    %4136 = vmatprep.subr.mxu0 %v1614
    %4137 = vmatpush1.msra.mxu0 %v1613
    %4138 = vmatprep.subr.mxu0 %v1618
    %4139 = vmatpush1.msra.mxu0 %v1617
    %4140 = vmatprep.subr.mxu0 %v1622
    %4141 = vmatpush1.msra.mxu0 %v1621
    %4142 = vmatprep.subr.mxu0 0.0
    %4143 = vmatpush1.msra.mxu0 0.0
    %4144 = vmatprep.subr.mxu0 0.0
    %4145 = vmatpush1.msra.mxu0 0.0
    %4146 = vmatprep.subr.mxu0 0.0
    %4147 = vmatpush1.msra.mxu0 0.0
    %4148 = vmatprep.subr.mxu0 0.0
    %4149 = vmatpush1.msra.mxu0 0.0
    %4150 = vmatprep.subr.mxu0 0.0
    %4151 = vmatpush1.msra.mxu0 0.0
    %4152 = vmatprep.subr.mxu0 0.0
    %4153 = vmatpush1.msra.mxu0 0.0
    %4154 = vmatprep.subr.mxu0 0.0
    %4155 = vmatpush1.msra.mxu0 0.0
    %4156 = vmatprep.subr.mxu0 0.0
    %4157 = vmatpush1.msra.mxu0 0.0
    %4158 = vmatprep.subr.mxu0 0.0
    %4159 = vmatpush1.msra.mxu0 0.0
    %4160 = vmatprep.subr.mxu0 0.0
    %4161 = vmatpush1.msra.mxu0 0.0
    %4162 = vmatprep.subr.mxu0 0.0
    %4163 = vmatpush1.msra.mxu0 0.0
    %4164 = vmatprep.subr.mxu0 0.0
    %4165 = vmatpush1.msra.mxu0 0.0
    %4166 = vmatprep.subr.mxu0 0.0
    %4167 = vmatpush1.msra.mxu0 0.0
    %4168 = vmatprep.subr.mxu0 0.0
    %4169 = vmatpush1.msra.mxu0 0.0
    %4170 = vmatprep.subr.mxu0 0.0
    %4171 = vmatpush1.msra.mxu0 0.0
    %4172 = vmatprep.subr.mxu0 0.0
    %4173 = vmatpush1.msra.mxu0 0.0
    %4174 = vmatprep.mubr.f32.mxu0 0.0
    %4175 = vmatmul.mubr.f32.gmra.mrb[0].mxu0 %v4102
    %v4176 = vpop.f32.mrb[0].mxu0
    %v4177 = vadd.f32 0.0, %v4176
    %v4178 = vpop.f32.mrb[0].mxu0
    %v4179 = vadd.f32 0.0, %v4178
    %4180 = vdwg.mxu0
    %4181 = vmatprep.subr.mxu0 %v1564
    %4182 = vmatpush1.msra.mxu0 %v1563
    %4183 = vmatprep.subr.mxu0 %v1568
    %4184 = vmatpush1.msra.mxu0 %v1567
    %4185 = vmatprep.subr.mxu0 %v1572
    %4186 = vmatpush1.msra.mxu0 %v1571
    %4187 = vmatprep.subr.mxu0 %v1576
    %4188 = vmatpush1.msra.mxu0 %v1575
    %4189 = vmatprep.subr.mxu0 %v1580
    %4190 = vmatpush1.msra.mxu0 %v1579
    %4191 = vmatprep.subr.mxu0 %v1584
    %4192 = vmatpush1.msra.mxu0 %v1583
    %4193 = vmatprep.subr.mxu0 %v1588
    %4194 = vmatpush1.msra.mxu0 %v1587
    %4195 = vmatprep.subr.mxu0 %v1592
    %4196 = vmatpush1.msra.mxu0 %v1591
    %4197 = vmatprep.subr.mxu0 %v1596
    %4198 = vmatpush1.msra.mxu0 %v1595
    %4199 = vmatprep.subr.mxu0 %v1600
    %4200 = vmatpush1.msra.mxu0 %v1599
    %4201 = vmatprep.subr.mxu0 %v1604
    %4202 = vmatpush1.msra.mxu0 %v1603
    %4203 = vmatprep.subr.mxu0 %v1608
    %4204 = vmatpush1.msra.mxu0 %v1607
    %4205 = vmatprep.subr.mxu0 %v1612
    %4206 = vmatpush1.msra.mxu0 %v1611
    %4207 = vmatprep.subr.mxu0 %v1616
    %4208 = vmatpush1.msra.mxu0 %v1615
    %4209 = vmatprep.subr.mxu0 %v1620
    %4210 = vmatpush1.msra.mxu0 %v1619
    %4211 = vmatprep.subr.mxu0 %v1624
    %4212 = vmatpush1.msra.mxu0 %v1623
    %4213 = vmatprep.subr.mxu0 0.0
    %4214 = vmatpush1.msra.mxu0 0.0
    %4215 = vmatprep.subr.mxu0 0.0
    %4216 = vmatpush1.msra.mxu0 0.0
    %4217 = vmatprep.subr.mxu0 0.0
    %4218 = vmatpush1.msra.mxu0 0.0
    %4219 = vmatprep.subr.mxu0 0.0
    %4220 = vmatpush1.msra.mxu0 0.0
    %4221 = vmatprep.subr.mxu0 0.0
    %4222 = vmatpush1.msra.mxu0 0.0
    %4223 = vmatprep.subr.mxu0 0.0
    %4224 = vmatpush1.msra.mxu0 0.0
    %4225 = vmatprep.subr.mxu0 0.0
    %4226 = vmatpush1.msra.mxu0 0.0
    %4227 = vmatprep.subr.mxu0 0.0
    %4228 = vmatpush1.msra.mxu0 0.0
    %4229 = vmatprep.subr.mxu0 0.0
    %4230 = vmatpush1.msra.mxu0 0.0
    %4231 = vmatprep.subr.mxu0 0.0
    %4232 = vmatpush1.msra.mxu0 0.0
    %4233 = vmatprep.subr.mxu0 0.0
    %4234 = vmatpush1.msra.mxu0 0.0
    %4235 = vmatprep.subr.mxu0 0.0
    %4236 = vmatpush1.msra.mxu0 0.0
    %4237 = vmatprep.subr.mxu0 0.0
    %4238 = vmatpush1.msra.mxu0 0.0
    %4239 = vmatprep.subr.mxu0 0.0
    %4240 = vmatpush1.msra.mxu0 0.0
    %4241 = vmatprep.subr.mxu0 0.0
    %4242 = vmatpush1.msra.mxu0 0.0
    %4243 = vmatprep.subr.mxu0 0.0
    %4244 = vmatpush1.msra.mxu0 0.0
    %4245 = vmatprep.mubr.f32.mxu0 0.0
    %4246 = vmatmul.mubr.f32.gmra.mrb[0].mxu0 %v4102
    %v4247 = vpop.f32.mrb[0].mxu0
    %v4248 = vadd.f32 0.0, %v4247
    %v4249 = vpop.f32.mrb[0].mxu0
    %v4250 = vadd.f32 0.0, %v4249
    %4251 = vdwg.mxu0
    %v4252 = vadd.f32 %v4106, %v4177
    %v4253 = vadd.f32 %v4107, %v4179
    %v4254 = vadd.f32 %v4108, %v4248
    %v4255 = vadd.f32 %v4109, %v4250
    %v4256 = vsub.f32 0.0, %v4252
    %v4257 = vmul.f32 %v4256, 1.442695
    %v4258 = vpow.pop %v4257
    %v4259 = vadd.f32 %v4258, 1.0
    %v4260 = vrcp.pop %v4259
    %v4261 = vmul.f32 1.0, %v4260
    %v4262 = vsub.f32 0.0, %v4253
    %v4263 = vmul.f32 %v4262, 1.442695
    %v4264 = vpow.pop %v4263
    %v4265 = vadd.f32 %v4264, 1.0
    %v4266 = vrcp.pop %v4265
    %v4267 = vmul.f32 1.0, %v4266
    %v4268 = vtanh.pop %v4254
    %v4269 = vsub.f32 0.0, %v4255
    %v4270 = vmul.f32 %v4269, 1.442695
    %v4271 = vpow.pop %v4270
    %v4272 = vadd.f32 %v4271, 1.0
    %v4273 = vrcp.pop %v4272
    %v4274 = vmul.f32 1.0, %v4273
    %v4275 = vmul.f32 %v4267, %v4100
    %v4276 = vmul.f32 %v4261, %v4268
    %v4277 = vadd.f32 %v4275, %v4276
    %v4278 = vtanh.pop %v4277
    %v4279 = vmul.f32 %v4274, %v4278
    %s4280 = smul.u32 15, 4
    %s4281 = smul.addr %s4280, 8
    %s4282 = scalar_lea.vmem [#allocation2], %s4281
    %v4283 = vld [vmem:[%s4282] sm:$0xff]
    %v4284 = vld [vmem:[%s4282 + $0x8] sm:$0xff]
    %v4285 = vld [vmem:[%s4282 + $0x10] sm:$0xff]
    %v4286 = vld [vmem:[%s4282 + $0x18] sm:$0xff]
    %4287 = vmatprep.subr.mxu0 %v1562
    %4288 = vmatpush1.msra.mxu0 %v1561
    %4289 = vmatprep.subr.mxu0 %v1566
    %4290 = vmatpush1.msra.mxu0 %v1565
    %4291 = vmatprep.subr.mxu0 %v1570
    %4292 = vmatpush1.msra.mxu0 %v1569
    %4293 = vmatprep.subr.mxu0 %v1574
    %4294 = vmatpush1.msra.mxu0 %v1573
    %4295 = vmatprep.subr.mxu0 %v1578
    %4296 = vmatpush1.msra.mxu0 %v1577
    %4297 = vmatprep.subr.mxu0 %v1582
    %4298 = vmatpush1.msra.mxu0 %v1581
    %4299 = vmatprep.subr.mxu0 %v1586
    %4300 = vmatpush1.msra.mxu0 %v1585
    %4301 = vmatprep.subr.mxu0 %v1590
    %4302 = vmatpush1.msra.mxu0 %v1589
    %4303 = vmatprep.subr.mxu0 %v1594
    %4304 = vmatpush1.msra.mxu0 %v1593
    %4305 = vmatprep.subr.mxu0 %v1598
    %4306 = vmatpush1.msra.mxu0 %v1597
    %4307 = vmatprep.subr.mxu0 %v1602
    %4308 = vmatpush1.msra.mxu0 %v1601
    %4309 = vmatprep.subr.mxu0 %v1606
    %4310 = vmatpush1.msra.mxu0 %v1605
    %4311 = vmatprep.subr.mxu0 %v1610
    %4312 = vmatpush1.msra.mxu0 %v1609
    %4313 = vmatprep.subr.mxu0 %v1614
    %4314 = vmatpush1.msra.mxu0 %v1613
    %4315 = vmatprep.subr.mxu0 %v1618
    %4316 = vmatpush1.msra.mxu0 %v1617
    %4317 = vmatprep.subr.mxu0 %v1622
    %4318 = vmatpush1.msra.mxu0 %v1621
    %4319 = vmatprep.subr.mxu0 0.0
    %4320 = vmatpush1.msra.mxu0 0.0
    %4321 = vmatprep.subr.mxu0 0.0
    %4322 = vmatpush1.msra.mxu0 0.0
    %4323 = vmatprep.subr.mxu0 0.0
    %4324 = vmatpush1.msra.mxu0 0.0
    %4325 = vmatprep.subr.mxu0 0.0
    %4326 = vmatpush1.msra.mxu0 0.0
    %4327 = vmatprep.subr.mxu0 0.0
    %4328 = vmatpush1.msra.mxu0 0.0
    %4329 = vmatprep.subr.mxu0 0.0
    %4330 = vmatpush1.msra.mxu0 0.0
    %4331 = vmatprep.subr.mxu0 0.0
    %4332 = vmatpush1.msra.mxu0 0.0
    %4333 = vmatprep.subr.mxu0 0.0
    %4334 = vmatpush1.msra.mxu0 0.0
    %4335 = vmatprep.subr.mxu0 0.0
    %4336 = vmatpush1.msra.mxu0 0.0
    %4337 = vmatprep.subr.mxu0 0.0
    %4338 = vmatpush1.msra.mxu0 0.0
    %4339 = vmatprep.subr.mxu0 0.0
    %4340 = vmatpush1.msra.mxu0 0.0
    %4341 = vmatprep.subr.mxu0 0.0
    %4342 = vmatpush1.msra.mxu0 0.0
    %4343 = vmatprep.subr.mxu0 0.0
    %4344 = vmatpush1.msra.mxu0 0.0
    %4345 = vmatprep.subr.mxu0 0.0
    %4346 = vmatpush1.msra.mxu0 0.0
    %4347 = vmatprep.subr.mxu0 0.0
    %4348 = vmatpush1.msra.mxu0 0.0
    %4349 = vmatprep.subr.mxu0 0.0
    %4350 = vmatpush1.msra.mxu0 0.0
    %4351 = vmatprep.mubr.f32.mxu0 0.0
    %4352 = vmatmul.mubr.f32.gmra.mrb[0].mxu0 %v4279
    %v4353 = vpop.f32.mrb[0].mxu0
    %v4354 = vadd.f32 0.0, %v4353
    %v4355 = vpop.f32.mrb[0].mxu0
    %v4356 = vadd.f32 0.0, %v4355
    %4357 = vdwg.mxu0
    %4358 = vmatprep.subr.mxu0 %v1564
    %4359 = vmatpush1.msra.mxu0 %v1563
    %4360 = vmatprep.subr.mxu0 %v1568
    %4361 = vmatpush1.msra.mxu0 %v1567
    %4362 = vmatprep.subr.mxu0 %v1572
    %4363 = vmatpush1.msra.mxu0 %v1571
    %4364 = vmatprep.subr.mxu0 %v1576
    %4365 = vmatpush1.msra.mxu0 %v1575
    %4366 = vmatprep.subr.mxu0 %v1580
    %4367 = vmatpush1.msra.mxu0 %v1579
    %4368 = vmatprep.subr.mxu0 %v1584
    %4369 = vmatpush1.msra.mxu0 %v1583
    %4370 = vmatprep.subr.mxu0 %v1588
    %4371 = vmatpush1.msra.mxu0 %v1587
    %4372 = vmatprep.subr.mxu0 %v1592
    %4373 = vmatpush1.msra.mxu0 %v1591
    %4374 = vmatprep.subr.mxu0 %v1596
    %4375 = vmatpush1.msra.mxu0 %v1595
    %4376 = vmatprep.subr.mxu0 %v1600
    %4377 = vmatpush1.msra.mxu0 %v1599
    %4378 = vmatprep.subr.mxu0 %v1604
    %4379 = vmatpush1.msra.mxu0 %v1603
    %4380 = vmatprep.subr.mxu0 %v1608
    %4381 = vmatpush1.msra.mxu0 %v1607
    %4382 = vmatprep.subr.mxu0 %v1612
    %4383 = vmatpush1.msra.mxu0 %v1611
    %4384 = vmatprep.subr.mxu0 %v1616
    %4385 = vmatpush1.msra.mxu0 %v1615
    %4386 = vmatprep.subr.mxu0 %v1620
    %4387 = vmatpush1.msra.mxu0 %v1619
    %4388 = vmatprep.subr.mxu0 %v1624
    %4389 = vmatpush1.msra.mxu0 %v1623
    %4390 = vmatprep.subr.mxu0 0.0
    %4391 = vmatpush1.msra.mxu0 0.0
    %4392 = vmatprep.subr.mxu0 0.0
    %4393 = vmatpush1.msra.mxu0 0.0
    %4394 = vmatprep.subr.mxu0 0.0
    %4395 = vmatpush1.msra.mxu0 0.0
    %4396 = vmatprep.subr.mxu0 0.0
    %4397 = vmatpush1.msra.mxu0 0.0
    %4398 = vmatprep.subr.mxu0 0.0
    %4399 = vmatpush1.msra.mxu0 0.0
    %4400 = vmatprep.subr.mxu0 0.0
    %4401 = vmatpush1.msra.mxu0 0.0
    %4402 = vmatprep.subr.mxu0 0.0
    %4403 = vmatpush1.msra.mxu0 0.0
    %4404 = vmatprep.subr.mxu0 0.0
    %4405 = vmatpush1.msra.mxu0 0.0
    %4406 = vmatprep.subr.mxu0 0.0
    %4407 = vmatpush1.msra.mxu0 0.0
    %4408 = vmatprep.subr.mxu0 0.0
    %4409 = vmatpush1.msra.mxu0 0.0
    %4410 = vmatprep.subr.mxu0 0.0
    %4411 = vmatpush1.msra.mxu0 0.0
    %4412 = vmatprep.subr.mxu0 0.0
    %4413 = vmatpush1.msra.mxu0 0.0
    %4414 = vmatprep.subr.mxu0 0.0
    %4415 = vmatpush1.msra.mxu0 0.0
    %4416 = vmatprep.subr.mxu0 0.0
    %4417 = vmatpush1.msra.mxu0 0.0
    %4418 = vmatprep.subr.mxu0 0.0
    %4419 = vmatpush1.msra.mxu0 0.0
    %4420 = vmatprep.subr.mxu0 0.0
    %4421 = vmatpush1.msra.mxu0 0.0
    %4422 = vmatprep.mubr.f32.mxu0 0.0
    %4423 = vmatmul.mubr.f32.gmra.mrb[0].mxu0 %v4279
    %v4424 = vpop.f32.mrb[0].mxu0
    %v4425 = vadd.f32 0.0, %v4424
    %v4426 = vpop.f32.mrb[0].mxu0
    %v4427 = vadd.f32 0.0, %v4426
    %4428 = vdwg.mxu0
    %v4429 = vadd.f32 %v4283, %v4354
    %v4430 = vadd.f32 %v4284, %v4356
    %v4431 = vadd.f32 %v4285, %v4425
    %v4432 = vadd.f32 %v4286, %v4427
    %v4433 = vsub.f32 0.0, %v4429
    %v4434 = vmul.f32 %v4433, 1.442695
    %v4435 = vpow.pop %v4434
    %v4436 = vadd.f32 %v4435, 1.0
    %v4437 = vrcp.pop %v4436
    %v4438 = vmul.f32 1.0, %v4437
    %v4439 = vsub.f32 0.0, %v4430
    %v4440 = vmul.f32 %v4439, 1.442695
    %v4441 = vpow.pop %v4440
    %v4442 = vadd.f32 %v4441, 1.0
    %v4443 = vrcp.pop %v4442
    %v4444 = vmul.f32 1.0, %v4443
    %v4445 = vtanh.pop %v4431
    %v4446 = vsub.f32 0.0, %v4432
    %v4447 = vmul.f32 %v4446, 1.442695
    %v4448 = vpow.pop %v4447
    %v4449 = vadd.f32 %v4448, 1.0
    %v4450 = vrcp.pop %v4449
    %v4451 = vmul.f32 1.0, %v4450
    %v4452 = vmul.f32 %v4444, %v4277
    %v4453 = vmul.f32 %v4438, %v4445
    %v4454 = vadd.f32 %v4452, %v4453
    %v4455 = vtanh.pop %v4454
    %v4456 = vmul.f32 %v4451, %v4455
    %v4457 = vld [vmem:[%s3] sm:$0xff]
    %v4458 = vld [vmem:[%s10] sm:$0xff]
    %v4459 = vld [vmem:[%s10 + $0x8] sm:$0xff]
    %v4460 = vld [vmem:[%s10 + $0x10] sm:$0xff]
    %v4461 = vld [vmem:[%s4] sm:$0xff]
    %v4462 = vld [vmem:[%s4 + $0x8] sm:$0xff]
    %v4463 = vld [vmem:[%s4 + $0x10] sm:$0xff]
    %v4464 = vld [vmem:[%s4 + $0x18] sm:$0xff]
    %v4465 = vld [vmem:[#allocation5] sm:$0xff]
    %v4466 = vld [vmem:[#allocation5 + $0x8] sm:$0xff]
    %v4467 = vld [vmem:[#allocation5 + $0x10] sm:$0xff]
    %v4468 = vld [vmem:[#allocation5 + $0x18] sm:$0xff]
    %v4469 = vld [vmem:[#allocation5 + $0x20] sm:$0xff]
    %v4470 = vld [vmem:[#allocation5 + $0x28] sm:$0xff]
    %v4471 = vld [vmem:[#allocation5 + $0x30] sm:$0xff]
    %v4472 = vld [vmem:[#allocation5 + $0x38] sm:$0xff]
    %v4473 = vld [vmem:[#allocation5 + $0x40] sm:$0xff]
    %v4474 = vld [vmem:[#allocation5 + $0x48] sm:$0xff]
    %v4475 = vld [vmem:[#allocation5 + $0x50] sm:$0xff]
    %v4476 = vld [vmem:[#allocation5 + $0x58] sm:$0xff]
    %v4477 = vld [vmem:[#allocation5 + $0x60] sm:$0xff]
    %v4478 = vld [vmem:[#allocation5 + $0x68] sm:$0xff]
    %v4479 = vld [vmem:[#allocation5 + $0x70] sm:$0xff]
    %v4480 = vld [vmem:[#allocation5 + $0x78] sm:$0xff]
    %v4481 = vld [vmem:[#allocation5 + $0x80] sm:$0xff]
    %v4482 = vld [vmem:[#allocation5 + $0x88] sm:$0xff]
    %v4483 = vld [vmem:[#allocation5 + $0x90] sm:$0xff]
    %v4484 = vld [vmem:[#allocation5 + $0x98] sm:$0xff]
    %v4485 = vld [vmem:[#allocation5 + $0xa0] sm:$0xff]
    %v4486 = vld [vmem:[#allocation5 + $0xa8] sm:$0xff]
    %v4487 = vld [vmem:[#allocation5 + $0xb0] sm:$0xff]
    %v4488 = vld [vmem:[#allocation5 + $0xb8] sm:$0xff]
    %v4489 = vld [vmem:[#allocation5 + $0xc0] sm:$0xff]
    %v4490 = vld [vmem:[#allocation5 + $0xc8] sm:$0xff]
    %v4491 = vld [vmem:[#allocation5 + $0xd0] sm:$0xff]
    %v4492 = vld [vmem:[#allocation5 + $0xd8] sm:$0xff]
    %v4493 = vld [vmem:[#allocation5 + $0xe0] sm:$0xff]
    %v4494 = vld [vmem:[#allocation5 + $0xe8] sm:$0xff]
    %v4495 = vld [vmem:[#allocation5 + $0xf0] sm:$0xff]
    %v4496 = vld [vmem:[#allocation5 + $0xf8] sm:$0xff]
    %v4497 = vld [vmem:[#allocation5 + $0x100] sm:$0xff]
    %v4498 = vld [vmem:[#allocation5 + $0x108] sm:$0xff]
    %v4499 = vld [vmem:[#allocation5 + $0x110] sm:$0xff]
    %v4500 = vld [vmem:[#allocation5 + $0x118] sm:$0xff]
    %v4501 = vld [vmem:[#allocation5 + $0x120] sm:$0xff]
    %v4502 = vld [vmem:[#allocation5 + $0x128] sm:$0xff]
    %v4503 = vld [vmem:[#allocation5 + $0x130] sm:$0xff]
    %v4504 = vld [vmem:[#allocation5 + $0x138] sm:$0xff]
    %v4505 = vld [vmem:[#allocation5 + $0x140] sm:$0xff]
    %v4506 = vld [vmem:[#allocation5 + $0x148] sm:$0xff]
    %v4507 = vld [vmem:[#allocation5 + $0x150] sm:$0xff]
    %v4508 = vld [vmem:[#allocation5 + $0x158] sm:$0xff]
    %v4509 = vld [vmem:[#allocation5 + $0x160] sm:$0xff]
    %v4510 = vld [vmem:[#allocation5 + $0x168] sm:$0xff]
    %v4511 = vld [vmem:[#allocation5 + $0x170] sm:$0xff]
    %v4512 = vld [vmem:[#allocation5 + $0x178] sm:$0xff]
    %v4513 = vld [vmem:[#allocation5 + $0x180] sm:$0xff]
    %v4514 = vld [vmem:[#allocation5 + $0x188] sm:$0xff]
    %v4515 = vld [vmem:[#allocation5 + $0x190] sm:$0xff]
    %v4516 = vld [vmem:[#allocation5 + $0x198] sm:$0xff]
    %v4517 = vld [vmem:[#allocation5 + $0x1a0] sm:$0xff]
    %v4518 = vld [vmem:[#allocation5 + $0x1a8] sm:$0xff]
    %v4519 = vld [vmem:[#allocation5 + $0x1b0] sm:$0xff]
    %v4520 = vld [vmem:[#allocation5 + $0x1b8] sm:$0xff]
    %v4521 = vld [vmem:[#allocation5 + $0x1c0] sm:$0xff]
    %v4522 = vld [vmem:[#allocation5 + $0x1c8] sm:$0xff]
    %v4523 = vld [vmem:[#allocation5 + $0x1d0] sm:$0xff]
    %v4524 = vld [vmem:[#allocation5 + $0x1d8] sm:$0xff]
    %v4525 = vld [vmem:[#allocation5 + $0x1e0] sm:$0xff]
    %v4526 = vld [vmem:[#allocation5 + $0x1e8] sm:$0xff]
    %v4527 = vld [vmem:[#allocation5 + $0x1f0] sm:$0xff]
    %v4528 = vld [vmem:[#allocation5 + $0x1f8] sm:$0xff]
    %4529 = vmatprep.subr.mxu0 0.0
    %4530 = vmatpush1.msra.mxu0 %v4465
    %4531 = vmatprep.subr.mxu0 0.0
    %4532 = vmatpush1.msra.mxu0 %v4466
    %4533 = vmatprep.subr.mxu0 0.0
    %4534 = vmatpush1.msra.mxu0 %v4467
    %4535 = vmatprep.subr.mxu0 0.0
    %4536 = vmatpush1.msra.mxu0 %v4468
    %4537 = vmatprep.subr.mxu0 0.0
    %4538 = vmatpush1.msra.mxu0 %v4469
    %4539 = vmatprep.subr.mxu0 0.0
    %4540 = vmatpush1.msra.mxu0 %v4470
    %4541 = vmatprep.subr.mxu0 0.0
    %4542 = vmatpush1.msra.mxu0 %v4471
    %4543 = vmatprep.subr.mxu0 0.0
    %4544 = vmatpush1.msra.mxu0 %v4472
    %4545 = vmatprep.subr.mxu0 0.0
    %4546 = vmatpush1.msra.mxu0 %v4473
    %4547 = vmatprep.subr.mxu0 0.0
    %4548 = vmatpush1.msra.mxu0 %v4474
    %4549 = vmatprep.subr.mxu0 0.0
    %4550 = vmatpush1.msra.mxu0 %v4475
    %4551 = vmatprep.subr.mxu0 0.0
    %4552 = vmatpush1.msra.mxu0 %v4476
    %4553 = vmatprep.subr.mxu0 0.0
    %4554 = vmatpush1.msra.mxu0 %v4477
    %4555 = vmatprep.subr.mxu0 0.0
    %4556 = vmatpush1.msra.mxu0 %v4478
    %4557 = vmatprep.subr.mxu0 0.0
    %4558 = vmatpush1.msra.mxu0 %v4479
    %4559 = vmatprep.subr.mxu0 0.0
    %4560 = vmatpush1.msra.mxu0 %v4480
    %4561 = vmatprep.subr.mxu0 0.0
    %4562 = vmatpush1.msra.mxu0 %v4481
    %4563 = vmatprep.subr.mxu0 0.0
    %4564 = vmatpush1.msra.mxu0 %v4482
    %4565 = vmatprep.subr.mxu0 0.0
    %4566 = vmatpush1.msra.mxu0 %v4483
    %4567 = vmatprep.subr.mxu0 0.0
    %4568 = vmatpush1.msra.mxu0 %v4484
    %4569 = vmatprep.subr.mxu0 0.0
    %4570 = vmatpush1.msra.mxu0 %v4485
    %4571 = vmatprep.subr.mxu0 0.0
    %4572 = vmatpush1.msra.mxu0 %v4486
    %4573 = vmatprep.subr.mxu0 0.0
    %4574 = vmatpush1.msra.mxu0 %v4487
    %4575 = vmatprep.subr.mxu0 0.0
    %4576 = vmatpush1.msra.mxu0 %v4488
    %4577 = vmatprep.subr.mxu0 0.0
    %4578 = vmatpush1.msra.mxu0 %v4489
    %4579 = vmatprep.subr.mxu0 0.0
    %4580 = vmatpush1.msra.mxu0 %v4490
    %4581 = vmatprep.subr.mxu0 0.0
    %4582 = vmatpush1.msra.mxu0 %v4491
    %4583 = vmatprep.subr.mxu0 0.0
    %4584 = vmatpush1.msra.mxu0 %v4492
    %4585 = vmatprep.subr.mxu0 0.0
    %4586 = vmatpush1.msra.mxu0 %v4493
    %4587 = vmatprep.subr.mxu0 0.0
    %4588 = vmatpush1.msra.mxu0 %v4494
    %4589 = vmatprep.subr.mxu0 0.0
    %4590 = vmatpush1.msra.mxu0 %v4495
    %4591 = vmatprep.subr.mxu0 0.0
    %4592 = vmatpush1.msra.mxu0 %v4496
    %4593 = vmatprep.mubr.f32.mxu0 %v4462
    %4594 = vmatmul.mubr.f32.gmra.mrb[0].mxu0 %v4461
    %v4595 = vpop.f32.mrb[0].mxu0
    %v4596 = vadd.f32 0.0, %v4595
    %v4597 = vpop.f32.mrb[0].mxu0
    %4598 = vdwg.mxu0
    %4599 = vmatprep.subr.mxu0 0.0
    %4600 = vmatpush1.msra.mxu0 %v4497
    %4601 = vmatprep.subr.mxu0 0.0
    %4602 = vmatpush1.msra.mxu0 %v4498
    %4603 = vmatprep.subr.mxu0 0.0
    %4604 = vmatpush1.msra.mxu0 %v4499
    %4605 = vmatprep.subr.mxu0 0.0
    %4606 = vmatpush1.msra.mxu0 %v4500
    %4607 = vmatprep.subr.mxu0 0.0
    %4608 = vmatpush1.msra.mxu0 %v4501
    %4609 = vmatprep.subr.mxu0 0.0
    %4610 = vmatpush1.msra.mxu0 %v4502
    %4611 = vmatprep.subr.mxu0 0.0
    %4612 = vmatpush1.msra.mxu0 %v4503
    %4613 = vmatprep.subr.mxu0 0.0
    %4614 = vmatpush1.msra.mxu0 %v4504
    %4615 = vmatprep.subr.mxu0 0.0
    %4616 = vmatpush1.msra.mxu0 %v4505
    %4617 = vmatprep.subr.mxu0 0.0
    %4618 = vmatpush1.msra.mxu0 %v4506
    %4619 = vmatprep.subr.mxu0 0.0
    %4620 = vmatpush1.msra.mxu0 %v4507
    %4621 = vmatprep.subr.mxu0 0.0
    %4622 = vmatpush1.msra.mxu0 %v4508
    %4623 = vmatprep.subr.mxu0 0.0
    %4624 = vmatpush1.msra.mxu0 %v4509
    %4625 = vmatprep.subr.mxu0 0.0
    %4626 = vmatpush1.msra.mxu0 %v4510
    %4627 = vmatprep.subr.mxu0 0.0
    %4628 = vmatpush1.msra.mxu0 %v4511
    %4629 = vmatprep.subr.mxu0 0.0
    %4630 = vmatpush1.msra.mxu0 %v4512
    %4631 = vmatprep.subr.mxu0 0.0
    %4632 = vmatpush1.msra.mxu0 %v4513
    %4633 = vmatprep.subr.mxu0 0.0
    %4634 = vmatpush1.msra.mxu0 %v4514
    %4635 = vmatprep.subr.mxu0 0.0
    %4636 = vmatpush1.msra.mxu0 %v4515
    %4637 = vmatprep.subr.mxu0 0.0
    %4638 = vmatpush1.msra.mxu0 %v4516
    %4639 = vmatprep.subr.mxu0 0.0
    %4640 = vmatpush1.msra.mxu0 %v4517
    %4641 = vmatprep.subr.mxu0 0.0
    %4642 = vmatpush1.msra.mxu0 %v4518
    %4643 = vmatprep.subr.mxu0 0.0
    %4644 = vmatpush1.msra.mxu0 %v4519
    %4645 = vmatprep.subr.mxu0 0.0
    %4646 = vmatpush1.msra.mxu0 %v4520
    %4647 = vmatprep.subr.mxu0 0.0
    %4648 = vmatpush1.msra.mxu0 %v4521
    %4649 = vmatprep.subr.mxu0 0.0
    %4650 = vmatpush1.msra.mxu0 %v4522
    %4651 = vmatprep.subr.mxu0 0.0
    %4652 = vmatpush1.msra.mxu0 %v4523
    %4653 = vmatprep.subr.mxu0 0.0
    %4654 = vmatpush1.msra.mxu0 %v4524
    %4655 = vmatprep.subr.mxu0 0.0
    %4656 = vmatpush1.msra.mxu0 %v4525
    %4657 = vmatprep.subr.mxu0 0.0
    %4658 = vmatpush1.msra.mxu0 %v4526
    %4659 = vmatprep.subr.mxu0 0.0
    %4660 = vmatpush1.msra.mxu0 %v4527
    %4661 = vmatprep.subr.mxu0 0.0
    %4662 = vmatpush1.msra.mxu0 %v4528
    %4663 = vmatprep.mubr.f32.mxu0 %v4464
    %4664 = vmatmul.mubr.f32.gmra.mrb[0].mxu0 %v4463
    %v4665 = vpop.f32.mrb[0].mxu0
    %v4666 = vadd.f32 %v4596, %v4665
    %v4667 = vpop.f32.mrb[0].mxu0
    %4668 = vdwg.mxu0
    %vm4669 = vcmask 195584
    %v4671 = vsel %vm4669, %v4457, 0
    %4673 = vmatprep.subr.mxu0 0.0
    %4674 = vmatpush1.msra.mxu0 %v4458
    %4675 = vmatprep.subr.mxu0 0.0
    %4676 = vmatpush1.msra.mxu0 %v4459
    %4677 = vmatprep.subr.mxu0 0.0
    %4678 = vmatpush1.msra.mxu0 %v4460
    %4679 = vmatprep.subr.mxu0 0.0
    %4680 = vmatpush1.msra.mxu0 0.0
    %4681 = vmatprep.subr.mxu0 0.0
    %4682 = vmatpush1.msra.mxu0 0.0
    %4683 = vmatprep.subr.mxu0 0.0
    %4684 = vmatpush1.msra.mxu0 0.0
    %4685 = vmatprep.subr.mxu0 0.0
    %4686 = vmatpush1.msra.mxu0 0.0
    %4687 = vmatprep.subr.mxu0 0.0
    %4688 = vmatpush1.msra.mxu0 0.0
    %4689 = vmatprep.subr.mxu0 0.0
    %4690 = vmatpush1.msra.mxu0 0.0
    %4691 = vmatprep.subr.mxu0 0.0
    %4692 = vmatpush1.msra.mxu0 0.0
    %4693 = vmatprep.subr.mxu0 0.0
    %4694 = vmatpush1.msra.mxu0 0.0
    %4695 = vmatprep.subr.mxu0 0.0
    %4696 = vmatpush1.msra.mxu0 0.0
    %4697 = vmatprep.subr.mxu0 0.0
    %4698 = vmatpush1.msra.mxu0 0.0
    %4699 = vmatprep.subr.mxu0 0.0
    %4700 = vmatpush1.msra.mxu0 0.0
    %4701 = vmatprep.subr.mxu0 0.0
    %4702 = vmatpush1.msra.mxu0 0.0
    %4703 = vmatprep.subr.mxu0 0.0
    %4704 = vmatpush1.msra.mxu0 0.0
    %4705 = vmatprep.subr.mxu0 0.0
    %4706 = vmatpush1.msra.mxu0 0.0
    %4707 = vmatprep.subr.mxu0 0.0
    %4708 = vmatpush1.msra.mxu0 0.0
    %4709 = vmatprep.subr.mxu0 0.0
    %4710 = vmatpush1.msra.mxu0 0.0
    %4711 = vmatprep.subr.mxu0 0.0
    %4712 = vmatpush1.msra.mxu0 0.0
    %4713 = vmatprep.subr.mxu0 0.0
    %4714 = vmatpush1.msra.mxu0 0.0
    %4715 = vmatprep.subr.mxu0 0.0
    %4716 = vmatpush1.msra.mxu0 0.0
    %4717 = vmatprep.subr.mxu0 0.0
    %4718 = vmatpush1.msra.mxu0 0.0
    %4719 = vmatprep.subr.mxu0 0.0
    %4720 = vmatpush1.msra.mxu0 0.0
    %4721 = vmatprep.subr.mxu0 0.0
    %4722 = vmatpush1.msra.mxu0 0.0
    %4723 = vmatprep.subr.mxu0 0.0
    %4724 = vmatpush1.msra.mxu0 0.0
    %4725 = vmatprep.subr.mxu0 0.0
    %4726 = vmatpush1.msra.mxu0 0.0
    %4727 = vmatprep.subr.mxu0 0.0
    %4728 = vmatpush1.msra.mxu0 0.0
    %4729 = vmatprep.subr.mxu0 0.0
    %4730 = vmatpush1.msra.mxu0 0.0
    %4731 = vmatprep.subr.mxu0 0.0
    %4732 = vmatpush1.msra.mxu0 0.0
    %4733 = vmatprep.subr.mxu0 0.0
    %4734 = vmatpush1.msra.mxu0 0.0
    %4735 = vmatprep.subr.mxu0 0.0
    %4736 = vmatpush1.msra.mxu0 0.0
    %4737 = vmatprep.mubr.f32.mxu0 0.0
    %4738 = vmatmul.mubr.f32.gmra.mrb[0].mxu0 %v4671
    %v4739 = vpop.f32.mrb[0].mxu0
    %v4740 = vadd.f32 %v4666, %v4739
    %v4741 = vpop.f32.mrb[0].mxu0
    %4742 = vdwg.mxu0
    %v4743 = vld [vmem:[%s12] sm:$0x1]
    %v4745 = vlaneseq
    %v4746 = vshrl.u32 %v4745, 7
    %v4747 = vsub.s32 0, %v4746
    %v4748 = vrot.slane %v4743, %v4747
    %v4750 = vadd.f32 %v4740, %v4748
    %v4751 = vld [vmem:[#allocation7] sm:$0xff]
    %v4752 = vld [vmem:[#allocation7 + $0x8] sm:$0xff]
    %v4753 = vld [vmem:[#allocation7 + $0x10] sm:$0xff]
    %v4754 = vld [vmem:[#allocation7 + $0x18] sm:$0xff]
    %v4755 = vld [vmem:[#allocation7 + $0x20] sm:$0xff]
    %v4756 = vld [vmem:[#allocation7 + $0x28] sm:$0xff]
    %v4757 = vld [vmem:[#allocation7 + $0x30] sm:$0xff]
    %v4758 = vld [vmem:[#allocation7 + $0x38] sm:$0xff]
    %v4759 = vld [vmem:[#allocation7 + $0x40] sm:$0xff]
    %v4760 = vld [vmem:[#allocation7 + $0x48] sm:$0xff]
    %v4761 = vld [vmem:[#allocation7 + $0x50] sm:$0xff]
    %v4762 = vld [vmem:[#allocation7 + $0x58] sm:$0xff]
    %v4763 = vld [vmem:[#allocation7 + $0x60] sm:$0xff]
    %v4764 = vld [vmem:[#allocation7 + $0x68] sm:$0xff]
    %v4765 = vld [vmem:[#allocation7 + $0x70] sm:$0xff]
    %v4766 = vld [vmem:[#allocation7 + $0x78] sm:$0xff]
    %v4767 = vld [vmem:[#allocation8] sm:$0xff]
    %v4768 = vld [vmem:[#allocation8 + $0x8] sm:$0xff]
    %v4769 = vld [vmem:[#allocation8 + $0x10] sm:$0xff]
    %v4770 = vld [vmem:[#allocation8 + $0x18] sm:$0xff]
    %v4771 = vld [vmem:[#allocation8 + $0x20] sm:$0xff]
    %v4772 = vld [vmem:[#allocation8 + $0x28] sm:$0xff]
    %v4773 = vld [vmem:[#allocation8 + $0x30] sm:$0xff]
    %v4774 = vld [vmem:[#allocation8 + $0x38] sm:$0xff]
    %v4775 = vld [vmem:[#allocation8 + $0x40] sm:$0xff]
    %v4776 = vld [vmem:[#allocation8 + $0x48] sm:$0xff]
    %v4777 = vld [vmem:[#allocation8 + $0x50] sm:$0xff]
    %v4778 = vld [vmem:[#allocation8 + $0x58] sm:$0xff]
    %v4779 = vld [vmem:[#allocation8 + $0x60] sm:$0xff]
    %v4780 = vld [vmem:[#allocation8 + $0x68] sm:$0xff]
    %v4781 = vld [vmem:[#allocation8 + $0x70] sm:$0xff]
    %v4782 = vld [vmem:[#allocation8 + $0x78] sm:$0xff]
    %4783 = vmatprep.subr.mxu0 0.0
    %4784 = vmatpush1.msra.mxu0 %v4767
    %4785 = vmatprep.subr.mxu0 0.0
    %4786 = vmatpush1.msra.mxu0 %v4768
    %4787 = vmatprep.subr.mxu0 0.0
    %4788 = vmatpush1.msra.mxu0 %v4769
    %4789 = vmatprep.subr.mxu0 0.0
    %4790 = vmatpush1.msra.mxu0 %v4770
    %4791 = vmatprep.subr.mxu0 0.0
    %4792 = vmatpush1.msra.mxu0 %v4771
    %4793 = vmatprep.subr.mxu0 0.0
    %4794 = vmatpush1.msra.mxu0 %v4772
    %4795 = vmatprep.subr.mxu0 0.0
    %4796 = vmatpush1.msra.mxu0 %v4773
    %4797 = vmatprep.subr.mxu0 0.0
    %4798 = vmatpush1.msra.mxu0 %v4774
    %4799 = vmatprep.subr.mxu0 0.0
    %4800 = vmatpush1.msra.mxu0 %v4775
    %4801 = vmatprep.subr.mxu0 0.0
    %4802 = vmatpush1.msra.mxu0 %v4776
    %4803 = vmatprep.subr.mxu0 0.0
    %4804 = vmatpush1.msra.mxu0 %v4777
    %4805 = vmatprep.subr.mxu0 0.0
    %4806 = vmatpush1.msra.mxu0 %v4778
    %4807 = vmatprep.subr.mxu0 0.0
    %4808 = vmatpush1.msra.mxu0 %v4779
    %4809 = vmatprep.subr.mxu0 0.0
    %4810 = vmatpush1.msra.mxu0 %v4780
    %4811 = vmatprep.subr.mxu0 0.0
    %4812 = vmatpush1.msra.mxu0 %v4781
    %4813 = vmatprep.subr.mxu0 0.0
    %4814 = vmatpush1.msra.mxu0 %v4782
    %4815 = vmatprep.subr.mxu0 0.0
    %4816 = vmatpush1.msra.mxu0 0.0
    %4817 = vmatprep.subr.mxu0 0.0
    %4818 = vmatpush1.msra.mxu0 0.0
    %4819 = vmatprep.subr.mxu0 0.0
    %4820 = vmatpush1.msra.mxu0 0.0
    %4821 = vmatprep.subr.mxu0 0.0
    %4822 = vmatpush1.msra.mxu0 0.0
    %4823 = vmatprep.subr.mxu0 0.0
    %4824 = vmatpush1.msra.mxu0 0.0
    %4825 = vmatprep.subr.mxu0 0.0
    %4826 = vmatpush1.msra.mxu0 0.0
    %4827 = vmatprep.subr.mxu0 0.0
    %4828 = vmatpush1.msra.mxu0 0.0
    %4829 = vmatprep.subr.mxu0 0.0
    %4830 = vmatpush1.msra.mxu0 0.0
    %4831 = vmatprep.subr.mxu0 0.0
    %4832 = vmatpush1.msra.mxu0 0.0
    %4833 = vmatprep.subr.mxu0 0.0
    %4834 = vmatpush1.msra.mxu0 0.0
    %4835 = vmatprep.subr.mxu0 0.0
    %4836 = vmatpush1.msra.mxu0 0.0
    %4837 = vmatprep.subr.mxu0 0.0
    %4838 = vmatpush1.msra.mxu0 0.0
    %4839 = vmatprep.subr.mxu0 0.0
    %4840 = vmatpush1.msra.mxu0 0.0
    %4841 = vmatprep.subr.mxu0 0.0
    %4842 = vmatpush1.msra.mxu0 0.0
    %4843 = vmatprep.subr.mxu0 0.0
    %4844 = vmatpush1.msra.mxu0 0.0
    %4845 = vmatprep.subr.mxu0 0.0
    %4846 = vmatpush1.msra.mxu0 0.0
    %4847 = vmatprep.mubr.f32.mxu0 0.0
    %4848 = vmatmul.mubr.f32.gmra.mrb[0].mxu0 %v4750
    %v4849 = vpop.f32.mrb[0].mxu0
    %v4850 = vadd.f32 0.0, %v4849
    %v4851 = vpop.f32.mrb[0].mxu0
    %4852 = vdwg.mxu0
    %4853 = vmatprep.subr.mxu0 0.0
    %4854 = vmatpush1.msra.mxu0 %v4751
    %4855 = vmatprep.subr.mxu0 0.0
    %4856 = vmatpush1.msra.mxu0 %v4752
    %4857 = vmatprep.subr.mxu0 0.0
    %4858 = vmatpush1.msra.mxu0 %v4753
    %4859 = vmatprep.subr.mxu0 0.0
    %4860 = vmatpush1.msra.mxu0 %v4754
    %4861 = vmatprep.subr.mxu0 0.0
    %4862 = vmatpush1.msra.mxu0 %v4755
    %4863 = vmatprep.subr.mxu0 0.0
    %4864 = vmatpush1.msra.mxu0 %v4756
    %4865 = vmatprep.subr.mxu0 0.0
    %4866 = vmatpush1.msra.mxu0 %v4757
    %4867 = vmatprep.subr.mxu0 0.0
    %4868 = vmatpush1.msra.mxu0 %v4758
    %4869 = vmatprep.subr.mxu0 0.0
    %4870 = vmatpush1.msra.mxu0 %v4759
    %4871 = vmatprep.subr.mxu0 0.0
    %4872 = vmatpush1.msra.mxu0 %v4760
    %4873 = vmatprep.subr.mxu0 0.0
    %4874 = vmatpush1.msra.mxu0 %v4761
    %4875 = vmatprep.subr.mxu0 0.0
    %4876 = vmatpush1.msra.mxu0 %v4762
    %4877 = vmatprep.subr.mxu0 0.0
    %4878 = vmatpush1.msra.mxu0 %v4763
    %4879 = vmatprep.subr.mxu0 0.0
    %4880 = vmatpush1.msra.mxu0 %v4764
    %4881 = vmatprep.subr.mxu0 0.0
    %4882 = vmatpush1.msra.mxu0 %v4765
    %4883 = vmatprep.subr.mxu0 0.0
    %4884 = vmatpush1.msra.mxu0 %v4766
    %4885 = vmatprep.subr.mxu0 0.0
    %4886 = vmatpush1.msra.mxu0 0.0
    %4887 = vmatprep.subr.mxu0 0.0
    %4888 = vmatpush1.msra.mxu0 0.0
    %4889 = vmatprep.subr.mxu0 0.0
    %4890 = vmatpush1.msra.mxu0 0.0
    %4891 = vmatprep.subr.mxu0 0.0
    %4892 = vmatpush1.msra.mxu0 0.0
    %4893 = vmatprep.subr.mxu0 0.0
    %4894 = vmatpush1.msra.mxu0 0.0
    %4895 = vmatprep.subr.mxu0 0.0
    %4896 = vmatpush1.msra.mxu0 0.0
    %4897 = vmatprep.subr.mxu0 0.0
    %4898 = vmatpush1.msra.mxu0 0.0
    %4899 = vmatprep.subr.mxu0 0.0
    %4900 = vmatpush1.msra.mxu0 0.0
    %4901 = vmatprep.subr.mxu0 0.0
    %4902 = vmatpush1.msra.mxu0 0.0
    %4903 = vmatprep.subr.mxu0 0.0
    %4904 = vmatpush1.msra.mxu0 0.0
    %4905 = vmatprep.subr.mxu0 0.0
    %4906 = vmatpush1.msra.mxu0 0.0
    %4907 = vmatprep.subr.mxu0 0.0
    %4908 = vmatpush1.msra.mxu0 0.0
    %4909 = vmatprep.subr.mxu0 0.0
    %4910 = vmatpush1.msra.mxu0 0.0
    %4911 = vmatprep.subr.mxu0 0.0
    %4912 = vmatpush1.msra.mxu0 0.0
    %4913 = vmatprep.subr.mxu0 0.0
    %4914 = vmatpush1.msra.mxu0 0.0
    %4915 = vmatprep.subr.mxu0 0.0
    %4916 = vmatpush1.msra.mxu0 0.0
    %4917 = vmatprep.mubr.f32.mxu0 0.0
    %4918 = vmatmul.mubr.f32.gmra.mrb[0].mxu0 %v4456
    %v4919 = vpop.f32.mrb[0].mxu0
    %v4920 = vadd.f32 %v4850, %v4919
    %v4921 = vpop.f32.mrb[0].mxu0
    %4922 = vdwg.mxu0
    %v4923 = vld [vmem:[%s15] sm:$0x1]
    %v4925 = vlaneseq
    %v4926 = vshrl.u32 %v4925, 7
    %v4927 = vsub.s32 0, %v4926
    %v4928 = vrot.slane %v4923, %v4927
    %v4930 = vadd.f32 %v4920, %v4928
    %v4931 = vld [vmem:[#allocation10] sm:$0xff]
    %v4932 = vld [vmem:[#allocation10 + $0x8] sm:$0xff]
    %v4933 = vld [vmem:[#allocation10 + $0x10] sm:$0xff]
    %v4934 = vld [vmem:[#allocation10 + $0x18] sm:$0xff]
    %v4935 = vld [vmem:[#allocation10 + $0x20] sm:$0xff]
    %v4936 = vld [vmem:[#allocation10 + $0x28] sm:$0xff]
    %v4937 = vld [vmem:[#allocation10 + $0x30] sm:$0xff]
    %v4938 = vld [vmem:[#allocation10 + $0x38] sm:$0xff]
    %v4939 = vld [vmem:[#allocation10 + $0x40] sm:$0xff]
    %v4940 = vld [vmem:[#allocation10 + $0x48] sm:$0xff]
    %v4941 = vld [vmem:[#allocation10 + $0x50] sm:$0xff]
    %v4942 = vld [vmem:[#allocation10 + $0x58] sm:$0xff]
    %v4943 = vld [vmem:[#allocation10 + $0x60] sm:$0xff]
    %v4944 = vld [vmem:[#allocation10 + $0x68] sm:$0xff]
    %v4945 = vld [vmem:[#allocation10 + $0x70] sm:$0xff]
    %v4946 = vld [vmem:[#allocation10 + $0x78] sm:$0xff]
    %4947 = vmatprep.subr.mxu0 0.0
    %4948 = vmatpush1.msra.mxu0 %v4931
    %4949 = vmatprep.subr.mxu0 0.0
    %4950 = vmatpush1.msra.mxu0 %v4932
    %4951 = vmatprep.subr.mxu0 0.0
    %4952 = vmatpush1.msra.mxu0 %v4933
    %4953 = vmatprep.subr.mxu0 0.0
    %4954 = vmatpush1.msra.mxu0 %v4934
    %4955 = vmatprep.subr.mxu0 0.0
    %4956 = vmatpush1.msra.mxu0 %v4935
    %4957 = vmatprep.subr.mxu0 0.0
    %4958 = vmatpush1.msra.mxu0 %v4936
    %4959 = vmatprep.subr.mxu0 0.0
    %4960 = vmatpush1.msra.mxu0 %v4937
    %4961 = vmatprep.subr.mxu0 0.0
    %4962 = vmatpush1.msra.mxu0 %v4938
    %4963 = vmatprep.subr.mxu0 0.0
    %4964 = vmatpush1.msra.mxu0 %v4939
    %4965 = vmatprep.subr.mxu0 0.0
    %4966 = vmatpush1.msra.mxu0 %v4940
    %4967 = vmatprep.subr.mxu0 0.0
    %4968 = vmatpush1.msra.mxu0 %v4941
    %4969 = vmatprep.subr.mxu0 0.0
    %4970 = vmatpush1.msra.mxu0 %v4942
    %4971 = vmatprep.subr.mxu0 0.0
    %4972 = vmatpush1.msra.mxu0 %v4943
    %4973 = vmatprep.subr.mxu0 0.0
    %4974 = vmatpush1.msra.mxu0 %v4944
    %4975 = vmatprep.subr.mxu0 0.0
    %4976 = vmatpush1.msra.mxu0 %v4945
    %4977 = vmatprep.subr.mxu0 0.0
    %4978 = vmatpush1.msra.mxu0 %v4946
    %4979 = vmatprep.subr.mxu0 0.0
    %4980 = vmatpush1.msra.mxu0 0.0
    %4981 = vmatprep.subr.mxu0 0.0
    %4982 = vmatpush1.msra.mxu0 0.0
    %4983 = vmatprep.subr.mxu0 0.0
    %4984 = vmatpush1.msra.mxu0 0.0
    %4985 = vmatprep.subr.mxu0 0.0
    %4986 = vmatpush1.msra.mxu0 0.0
    %4987 = vmatprep.subr.mxu0 0.0
    %4988 = vmatpush1.msra.mxu0 0.0
    %4989 = vmatprep.subr.mxu0 0.0
    %4990 = vmatpush1.msra.mxu0 0.0
    %4991 = vmatprep.subr.mxu0 0.0
    %4992 = vmatpush1.msra.mxu0 0.0
    %4993 = vmatprep.subr.mxu0 0.0
    %4994 = vmatpush1.msra.mxu0 0.0
    %4995 = vmatprep.subr.mxu0 0.0
    %4996 = vmatpush1.msra.mxu0 0.0
    %4997 = vmatprep.subr.mxu0 0.0
    %4998 = vmatpush1.msra.mxu0 0.0
    %4999 = vmatprep.subr.mxu0 0.0
    %5000 = vmatpush1.msra.mxu0 0.0
    %5001 = vmatprep.subr.mxu0 0.0
    %5002 = vmatpush1.msra.mxu0 0.0
    %5003 = vmatprep.subr.mxu0 0.0
    %5004 = vmatpush1.msra.mxu0 0.0
    %5005 = vmatprep.subr.mxu0 0.0
    %5006 = vmatpush1.msra.mxu0 0.0
    %5007 = vmatprep.subr.mxu0 0.0
    %5008 = vmatpush1.msra.mxu0 0.0
    %5009 = vmatprep.subr.mxu0 0.0
    %5010 = vmatpush1.msra.mxu0 0.0
    %5011 = vmatprep.mubr.f32.mxu0 0.0
    %5012 = vmatmul.mubr.f32.gmra.mrb[0].mxu0 %v4930
    %v5013 = vpop.f32.mrb[0].mxu0
    %v5014 = vadd.f32 0.0, %v5013
    %v5015 = vpop.f32.mrb[0].mxu0
    %5016 = vdwg.mxu0
    %5017 = vst [vmem:[%s18] sm:$0xff] %v5014
    %v5018 = vsub.f32 0.0, %v5014
    %v5019 = vmul.f32 %v5018, 1.442695
    %v5020 = vpow.pop %v5019
    %v5021 = vadd.f32 %v5020, 1.0
    %v5022 = vrcp.pop %v5021
    %v5023 = vmul.f32 1.0, %v5022
    %5024 = vst [vmem:[%s17] sm:$0xff] %v5023
    // Predicated region
    $region90: #{lstm_base_h_forward.1} parent=1 // pred_check
      _
    $region91: #{lstm_base_h_forward.1} parent=1 // pred_check_branch
      %5026 = sbr.rel (0) target = $region93
    $region92: #{lstm_base_h_forward.1} parent=1 // pred_region
      _
    $region93: #{lstm_base_h_forward.1} parent=1 // pred_fallthru
      _
    // Predicated region
    $region94: #{lstm_base_h_forward.1} parent=1 // pred_check
      _
    $region95: #{lstm_base_h_forward.1} parent=1 // pred_check_branch
      %5028 = sbr.rel (0) target = $region97
    $region96: #{lstm_base_h_forward.1} parent=1 // pred_region
      _
    $region97: #{lstm_base_h_forward.1} parent=1 // pred_fallthru
      _
    // Predicated region
    $region98: #{lstm_base_h_forward.1} parent=1 // pred_check
      _
    $region99: #{lstm_base_h_forward.1} parent=1 // pred_check_branch
      %5030 = sbr.rel (0) target = $region101
    $region100: #{lstm_base_h_forward.1} parent=1 // pred_region
      _
    $region101: #{lstm_base_h_forward.1} parent=1 // pred_fallthru
      _
    // Predicated region
    $region102: #{lstm_base_h_forward.1} parent=1 // pred_check
      _
    $region103: #{lstm_base_h_forward.1} parent=1 // pred_check_branch
      %5032 = sbr.rel (0) target = $region105
    $region104: #{lstm_base_h_forward.1} parent=1 // pred_region
      _
    $region105: #{lstm_base_h_forward.1} parent=1 // pred_fallthru
      _
    %5033 = vsyncpa [#allocation4], 1
    %5034 = vsyncpa [#allocation6], 1
    %5035 = vsyncpa [#allocation9], 1

</llo_original>
